<compile_context>
chip_gen: v7x
topology: tpu7x:2x2x1
jax: 0.10.0
libtpu: 0.0.40
codegen_flags: <defaults>
</compile_context>

<pallas_src>
import functools

import jax
import jax.numpy as jnp
import numpy as np
from jax.experimental import pallas as pl
from jax.experimental.pallas import tpu as pltpu


def _rcu_block_kernel(x_ref, *refs, H, W, C, n_stages):
    """Fused RCU block (all stages + residual) for one batch item.

    x_ref    : (1, H, W, C)      block input (also the residual)
    refs     : n_stages weight refs, each (3, 3*C, C)  -- dx-fused HWIO,
               then b_ref (1, C)  -- bias of stage 0,
               then o_ref (1, H, W, C),
               then fuse_ref VMEM scratch (H+2, W, 3*C) f32.

    fuse_ref layout:  fuse[y, w, dx*C + c] == zero_pad(relu(x))[y, w+dx, c]
    so the 3x3 conv becomes  out[h, w] = sum_dy fuse[h+dy, w, :] @ Wf[dy].
    """
    w_refs = refs[:n_stages]
    b_ref = refs[n_stages]
    o_ref = refs[n_stages + 1]
    fuse_ref = refs[n_stages + 2]

    # Zero ONLY the halo cells, unconditionally on every grid step.  The halo
    # cells are never written by the stage stores below, so after this they
    # always read back as zero padding.  Unconditional => correct on megacore
    # (each core's private scratch gets initialized); halo-only => cheap.
    zrow = jnp.zeros((1, W, 3 * C), jnp.float32)
    fuse_ref[pl.ds(0, 1), :, :] = zrow                                  # top pad row
    fuse_ref[pl.ds(H + 1, 1), :, :] = zrow                              # bottom pad row
    zcol = jnp.zeros((H, 1, C), jnp.float32)
    fuse_ref[pl.ds(1, H), pl.ds(0, 1), pl.ds(0 * C, C)] = zcol          # left pad, dx=0 group
    fuse_ref[pl.ds(1, H), pl.ds(W - 1, 1), pl.ds(2 * C, C)] = zcol      # right pad, dx=2 group

    x0 = x_ref[0].astype(jnp.float32)            # (H, W, C) residual / stage-0 in
    cur = x0
    for j in range(n_stages):                    # static unroll over stages
        xr = jnp.maximum(cur, 0.0)               # relu before conv

        # Scatter the 3 dx-shifted windows onto the channel axis of the scratch
        # (dx shift done once per stage as plain VMEM stores).
        fuse_ref[pl.ds(1, H), pl.ds(1, W - 1), pl.ds(0 * C, C)] = xr[:, 0:W - 1, :]
        fuse_ref[pl.ds(1, H), pl.ds(0, W),     pl.ds(1 * C, C)] = xr
        fuse_ref[pl.ds(1, H), pl.ds(0, W - 1), pl.ds(2 * C, C)] = xr[:, 1:W, :]

        # 3 matmuls with K = 3*C (dy taps), accumulated in f32 on the MXU.
        acc = None
        for dy in range(3):
            patch = fuse_ref[pl.ds(dy, H), :, :].reshape(H * W, 3 * C)
            contrib = jnp.dot(patch, w_refs[j][dy],
                              preferred_element_type=jnp.float32)
            acc = contrib if acc is None else acc + contrib
        if j == 0:                               # bias only on the '_conv' stage
            acc = acc + b_ref[...].astype(jnp.float32)
        cur = acc.reshape(H, W, C)

    o_ref[0] = (cur + x0).astype(o_ref.dtype)    # fused residual add


def rcu_block_apply(x, stage_weights, bias0):
    """One full RCU block (all stages + residual). x: (N, H, W, C) NHWC."""
    N, H, W, C = x.shape
    n_stages = len(stage_weights)

    # Pre-fuse the 3 dx taps of each HWIO weight: (3, 3, C, C) -> (3, 3*C, C),
    # index [dy, dx*C + ci, co] matches the in-kernel channel-axis layout.
    ws = []
    for w in stage_weights:
        # Residual add (as in PyTorch) requires Cin == Cout for every stage.
        assert w.shape == (3, 3, C, C), f"unexpected weight shape {w.shape}"
        ws.append(w.reshape(3, 3 * C, C))
    b2 = bias0.reshape(1, C)

    kernel = functools.partial(_rcu_block_kernel, H=H, W=W, C=C,
                               n_stages=n_stages)

    in_specs = [pl.BlockSpec((1, H, W, C), lambda n: (n, 0, 0, 0))]
    # Grid-invariant weights / bias: constant index_map -> fetched once.
    in_specs += [pl.BlockSpec((3, 3 * C, C), lambda n: (0, 0, 0))
                 for _ in range(n_stages)]
    in_specs += [pl.BlockSpec((1, C), lambda n: (0, 0))]

    return pl.pallas_call(
        kernel,
        out_shape=jax.ShapeDtypeStruct((N, H, W, C), x.dtype),
        grid=(N,),
        in_specs=in_specs,
        out_specs=pl.BlockSpec((1, H, W, C), lambda n: (n, 0, 0, 0)),
        scratch_shapes=[pltpu.VMEM((H + 2, W, 3 * C), jnp.float32)],
        compiler_params=pltpu.CompilerParams(
            dimension_semantics=("parallel",)),
    )(x, *ws, b2)


def init_rcu_params(key, in_planes, out_planes, n_blocks, n_stages):
    """Deterministic synthetic parameters matching RCUBlock.__init__ shapes."""
    params = {}
    for i in range(n_blocks):
        for j in range(n_stages):
            cin = in_planes if (i == 0 and j == 0) else out_planes
            key, wk, bk = jax.random.split(key, 3)
            fan_in = cin * 9
            w = jax.random.normal(wk, (3, 3, cin, out_planes), jnp.float32)
            w = w * (1.0 / np.sqrt(fan_in))
            # bias only on the '_conv' stage (j == 0), as in the PyTorch module
            b = (jax.random.normal(bk, (out_planes,), jnp.float32) * 0.01
                 if j == 0 else None)
            params[(i, j)] = (w, b)
    return params


def rcu_block_forward(x_nchw, params, n_blocks, n_stages):
    """Full RCUBlock forward. Input/output in PyTorch NCHW convention."""
    x = jnp.transpose(x_nchw, (0, 2, 3, 1))      # -> NHWC
    for i in range(n_blocks):
        ws = [params[(i, j)][0] for j in range(n_stages)]
        b0 = params[(i, 0)][1]
        x = rcu_block_apply(x, ws, b0)           # all stages + residual fused
    return jnp.transpose(x, (0, 3, 1, 2))        # -> NCHW


def _reference_forward(x_nchw, params, n_blocks, n_stages):
    """Plain-JAX reference (lax conv) for correctness checking."""
    x = x_nchw
    dn = jax.lax.conv_dimension_numbers(x.shape, (1, 1, 3, 3),
                                        ("NCHW", "OIHW", "NCHW"))
    for i in range(n_blocks):
        residual = x
        for j in range(n_stages):
            w, b = params[(i, j)]
            w_oihw = jnp.transpose(w, (3, 2, 0, 1))  # HWIO -> OIHW
            x = jnp.maximum(x, 0.0)
            x = jax.lax.conv_general_dilated(
                x, w_oihw, window_strides=(1, 1), padding=((1, 1), (1, 1)),
                dimension_numbers=dn)
            if b is not None:
                x = x + b.reshape(1, -1, 1, 1)
        x = x + residual
    return x


if __name__ == "__main__":
    in_planes = out_planes = 4
    n_blocks, n_stages = 2, 2
    N, H, W = 2, 16, 16

    key = jax.random.PRNGKey(0)
    key, xk, pk = jax.random.split(key, 3)
    x = jax.random.normal(xk, (N, in_planes, H, W), jnp.float32)  # NCHW input
    params = init_rcu_params(pk, in_planes, out_planes, n_blocks, n_stages)

    out = jax.block_until_ready(rcu_block_forward(x, params, n_blocks, n_stages))
    ref = jax.block_until_ready(_reference_forward(x, params, n_blocks, n_stages))

    assert out.shape == ref.shape == (N, out_planes, H, W)
    np.testing.assert_allclose(np.asarray(out), np.asarray(ref),
                               atol=1e-4, rtol=1e-4)

    print("KERNEL_OK")
</pallas_src>

<mosaic_0001>
module attributes {stable_mosaic.version = 11 : i64} {
  func.func @_rcu_block_kernel(%arg0: i32, %arg1: memref<1x16x16x4xf32, #tpu.memory_space<vmem>>, %arg2: memref<3x12x4xf32, #tpu.memory_space<vmem>>, %arg3: memref<3x12x4xf32, #tpu.memory_space<vmem>>, %arg4: memref<1x4xf32, #tpu.memory_space<vmem>>, %arg5: memref<1x16x16x4xf32, #tpu.memory_space<vmem>>, %arg6: memref<18x16x12xf32, #tpu.memory_space<vmem>>) attributes {dimension_semantics = [#tpu.dimension_semantics<parallel>], iteration_bounds = array<i64: 2>, scalar_prefetch = 0 : i64, scratch_operands = 1 : i64, tpu.core_type = #tpu.core_type<tc>, window_params = [{transform_indices = @transform_0, window_bounds = array<i64: 1, 16, 16, 4>}, {pipeline_mode = #tpu.pipeline_mode<synchronous>, transform_indices = @transform_1, window_bounds = array<i64: 3, 12, 4>}, {pipeline_mode = #tpu.pipeline_mode<synchronous>, transform_indices = @transform_2, window_bounds = array<i64: 3, 12, 4>}, {pipeline_mode = #tpu.pipeline_mode<synchronous>, transform_indices = @transform_3, window_bounds = array<i64: 1, 4>}, {transform_indices = @transform_4, window_bounds = array<i64: 1, 16, 16, 4>}]} {
    %cst = arith.constant 0.000000e+00 : f32
    %0 = vector.broadcast %cst : f32 to vector<1x16x12xf32>
    %c0 = arith.constant 0 : index
    %c0_0 = arith.constant 0 : index
    %c0_1 = arith.constant 0 : index
    %1 = vector.load %arg6[%c0, %c0_0, %c0_1] : memref<18x16x12xf32, #tpu.memory_space<vmem>>, vector<1x16x12xf32>
    tpu.vector_store %arg6[%c0, %c0_0, %c0_1], %0 {strides = array<i32>} : memref<18x16x12xf32, #tpu.memory_space<vmem>>, vector<1x16x12xf32>,
    %c17 = arith.constant 17 : index
    %c0_2 = arith.constant 0 : index
    %c0_3 = arith.constant 0 : index
    %2 = vector.load %arg6[%c17, %c0_2, %c0_3] : memref<18x16x12xf32, #tpu.memory_space<vmem>>, vector<1x16x12xf32>
    tpu.vector_store %arg6[%c17, %c0_2, %c0_3], %0 {strides = array<i32>} : memref<18x16x12xf32, #tpu.memory_space<vmem>>, vector<1x16x12xf32>,
    %cst_4 = arith.constant 0.000000e+00 : f32
    %3 = vector.broadcast %cst_4 : f32 to vector<16x1x4xf32>
    %c1 = arith.constant 1 : index
    %c0_5 = arith.constant 0 : index
    %c0_6 = arith.constant 0 : index
    %4 = vector.load %arg6[%c1, %c0_5, %c0_6] : memref<18x16x12xf32, #tpu.memory_space<vmem>>, vector<16x1x4xf32>
    tpu.vector_store %arg6[%c1, %c0_5, %c0_6], %3 {strides = array<i32>} : memref<18x16x12xf32, #tpu.memory_space<vmem>>, vector<16x1x4xf32>,
    %c1_7 = arith.constant 1 : index
    %c15 = arith.constant 15 : index
    %c8 = arith.constant 8 : index
    %5 = vector.load %arg6[%c1_7, %c15, %c8] : memref<18x16x12xf32, #tpu.memory_space<vmem>>, vector<16x1x4xf32>
    tpu.vector_store %arg6[%c1_7, %c15, %c8], %3 {strides = array<i32>} : memref<18x16x12xf32, #tpu.memory_space<vmem>>, vector<16x1x4xf32>,
    %c0_8 = arith.constant 0 : index
    %c0_9 = arith.constant 0 : index
    %c0_10 = arith.constant 0 : index
    %c0_11 = arith.constant 0 : index
    %6 = vector.load %arg1[%c0_8, %c0_9, %c0_10, %c0_11] : memref<1x16x16x4xf32, #tpu.memory_space<vmem>>, vector<1x16x16x4xf32>
    %7 = vector.shape_cast %6 : vector<1x16x16x4xf32> to vector<16x16x4xf32>
    %cst_12 = arith.constant 0.000000e+00 : f32
    %8 = vector.broadcast %cst_12 : f32 to vector<16x16x4xf32>
    %9 = arith.maximumf %7, %8 : vector<16x16x4xf32>
    %10 = vector.extract_strided_slice %9 {offsets = [0, 0, 0], sizes = [16, 15, 4], strides = [1, 1, 1]} : vector<16x16x4xf32> to vector<16x15x4xf32>
    %c1_13 = arith.constant 1 : index
    %c1_14 = arith.constant 1 : index
    %c0_15 = arith.constant 0 : index
    %11 = vector.load %arg6[%c1_13, %c1_14, %c0_15] : memref<18x16x12xf32, #tpu.memory_space<vmem>>, vector<16x15x4xf32>
    tpu.vector_store %arg6[%c1_13, %c1_14, %c0_15], %10 {strides = array<i32>} : memref<18x16x12xf32, #tpu.memory_space<vmem>>, vector<16x15x4xf32>,
    %c1_16 = arith.constant 1 : index
    %c0_17 = arith.constant 0 : index
    %c4 = arith.constant 4 : index
    %12 = vector.load %arg6[%c1_16, %c0_17, %c4] : memref<18x16x12xf32, #tpu.memory_space<vmem>>, vector<16x16x4xf32>
    tpu.vector_store %arg6[%c1_16, %c0_17, %c4], %9 {strides = array<i32>} : memref<18x16x12xf32, #tpu.memory_space<vmem>>, vector<16x16x4xf32>,
    %13 = vector.extract_strided_slice %9 {offsets = [0, 1, 0], sizes = [16, 15, 4], strides = [1, 1, 1]} : vector<16x16x4xf32> to vector<16x15x4xf32>
    %c1_18 = arith.constant 1 : index
    %c0_19 = arith.constant 0 : index
    %c8_20 = arith.constant 8 : index
    %14 = vector.load %arg6[%c1_18, %c0_19, %c8_20] : memref<18x16x12xf32, #tpu.memory_space<vmem>>, vector<16x15x4xf32>
    tpu.vector_store %arg6[%c1_18, %c0_19, %c8_20], %13 {strides = array<i32>} : memref<18x16x12xf32, #tpu.memory_space<vmem>>, vector<16x15x4xf32>,
    %c0_21 = arith.constant 0 : index
    %c0_22 = arith.constant 0 : index
    %c0_23 = arith.constant 0 : index
    %15 = vector.load %arg6[%c0_21, %c0_22, %c0_23] : memref<18x16x12xf32, #tpu.memory_space<vmem>>, vector<16x16x12xf32>
    %16 = vector.shape_cast %15 : vector<16x16x12xf32> to vector<256x12xf32>
    %c0_24 = arith.constant 0 : index
    %c0_25 = arith.constant 0 : index
    %c0_26 = arith.constant 0 : index
    %17 = vector.load %arg2[%c0_24, %c0_25, %c0_26] : memref<3x12x4xf32, #tpu.memory_space<vmem>>, vector<1x12x4xf32>
    %18 = vector.shape_cast %17 : vector<1x12x4xf32> to vector<12x4xf32>
    %cst_27 = arith.constant dense<0.000000e+00> : vector<256x4xf32>
    %19 = tpu.matmul %16, %18, %cst_27 {dimension_numbers = #tpu.dot_dimension_numbers<[1], [0], [0], [1], [0, 0, 1, 1], [], []>} : vector<256x12xf32>, vector<12x4xf32>, vector<256x4xf32> -> vector<256x4xf32>
    %c1_28 = arith.constant 1 : index
    %c0_29 = arith.constant 0 : index
    %c0_30 = arith.constant 0 : index
    %20 = vector.load %arg6[%c1_28, %c0_29, %c0_30] : memref<18x16x12xf32, #tpu.memory_space<vmem>>, vector<16x16x12xf32>
    %21 = vector.shape_cast %20 : vector<16x16x12xf32> to vector<256x12xf32>
    %c1_31 = arith.constant 1 : index
    %c0_32 = arith.constant 0 : index
    %c0_33 = arith.constant 0 : index
    %22 = vector.load %arg2[%c1_31, %c0_32, %c0_33] : memref<3x12x4xf32, #tpu.memory_space<vmem>>, vector<1x12x4xf32>
    %23 = vector.shape_cast %22 : vector<1x12x4xf32> to vector<12x4xf32>
    %cst_34 = arith.constant dense<0.000000e+00> : vector<256x4xf32>
    %24 = tpu.matmul %21, %23, %cst_34 {dimension_numbers = #tpu.dot_dimension_numbers<[1], [0], [0], [1], [0, 0, 1, 1], [], []>} : vector<256x12xf32>, vector<12x4xf32>, vector<256x4xf32> -> vector<256x4xf32>
    %25 = arith.addf %19, %24 : vector<256x4xf32>
    %c2 = arith.constant 2 : index
    %c0_35 = arith.constant 0 : index
    %c0_36 = arith.constant 0 : index
    %26 = vector.load %arg6[%c2, %c0_35, %c0_36] : memref<18x16x12xf32, #tpu.memory_space<vmem>>, vector<16x16x12xf32>
    %27 = vector.shape_cast %26 : vector<16x16x12xf32> to vector<256x12xf32>
    %c2_37 = arith.constant 2 : index
    %c0_38 = arith.constant 0 : index
    %c0_39 = arith.constant 0 : index
    %28 = vector.load %arg2[%c2_37, %c0_38, %c0_39] : memref<3x12x4xf32, #tpu.memory_space<vmem>>, vector<1x12x4xf32>
    %29 = vector.shape_cast %28 : vector<1x12x4xf32> to vector<12x4xf32>
    %cst_40 = arith.constant dense<0.000000e+00> : vector<256x4xf32>
    %30 = tpu.matmul %27, %29, %cst_40 {dimension_numbers = #tpu.dot_dimension_numbers<[1], [0], [0], [1], [0, 0, 1, 1], [], []>} : vector<256x12xf32>, vector<12x4xf32>, vector<256x4xf32> -> vector<256x4xf32>
    %31 = arith.addf %25, %30 : vector<256x4xf32>
    %c0_41 = arith.constant 0 : index
    %c0_42 = arith.constant 0 : index
    %32 = vector.load %arg4[%c0_41, %c0_42] : memref<1x4xf32, #tpu.memory_space<vmem>>, vector<1x4xf32>
    %33 = vector.broadcast %32 : vector<1x4xf32> to vector<256x4xf32>
    %34 = arith.addf %31, %33 : vector<256x4xf32>
    %35 = vector.shape_cast %34 : vector<256x4xf32> to vector<16x16x4xf32>
    %cst_43 = arith.constant 0.000000e+00 : f32
    %36 = vector.broadcast %cst_43 : f32 to vector<16x16x4xf32>
    %37 = arith.maximumf %35, %36 : vector<16x16x4xf32>
    %38 = vector.extract_strided_slice %37 {offsets = [0, 0, 0], sizes = [16, 15, 4], strides = [1, 1, 1]} : vector<16x16x4xf32> to vector<16x15x4xf32>
    %c1_44 = arith.constant 1 : index
    %c1_45 = arith.constant 1 : index
    %c0_46 = arith.constant 0 : index
    %39 = vector.load %arg6[%c1_44, %c1_45, %c0_46] : memref<18x16x12xf32, #tpu.memory_space<vmem>>, vector<16x15x4xf32>
    tpu.vector_store %arg6[%c1_44, %c1_45, %c0_46], %38 {strides = array<i32>} : memref<18x16x12xf32, #tpu.memory_space<vmem>>, vector<16x15x4xf32>,
    %c1_47 = arith.constant 1 : index
    %c0_48 = arith.constant 0 : index
    %c4_49 = arith.constant 4 : index
    %40 = vector.load %arg6[%c1_47, %c0_48, %c4_49] : memref<18x16x12xf32, #tpu.memory_space<vmem>>, vector<16x16x4xf32>
    tpu.vector_store %arg6[%c1_47, %c0_48, %c4_49], %37 {strides = array<i32>} : memref<18x16x12xf32, #tpu.memory_space<vmem>>, vector<16x16x4xf32>,
    %41 = vector.extract_strided_slice %37 {offsets = [0, 1, 0], sizes = [16, 15, 4], strides = [1, 1, 1]} : vector<16x16x4xf32> to vector<16x15x4xf32>
    %c1_50 = arith.constant 1 : index
    %c0_51 = arith.constant 0 : index
    %c8_52 = arith.constant 8 : index
    %42 = vector.load %arg6[%c1_50, %c0_51, %c8_52] : memref<18x16x12xf32, #tpu.memory_space<vmem>>, vector<16x15x4xf32>
    tpu.vector_store %arg6[%c1_50, %c0_51, %c8_52], %41 {strides = array<i32>} : memref<18x16x12xf32, #tpu.memory_space<vmem>>, vector<16x15x4xf32>,
    %c0_53 = arith.constant 0 : index
    %c0_54 = arith.constant 0 : index
    %c0_55 = arith.constant 0 : index
    %43 = vector.load %arg6[%c0_53, %c0_54, %c0_55] : memref<18x16x12xf32, #tpu.memory_space<vmem>>, vector<16x16x12xf32>
    %44 = vector.shape_cast %43 : vector<16x16x12xf32> to vector<256x12xf32>
    %c0_56 = arith.constant 0 : index
    %c0_57 = arith.constant 0 : index
    %c0_58 = arith.constant 0 : index
    %45 = vector.load %arg3[%c0_56, %c0_57, %c0_58] : memref<3x12x4xf32, #tpu.memory_space<vmem>>, vector<1x12x4xf32>
    %46 = vector.shape_cast %45 : vector<1x12x4xf32> to vector<12x4xf32>
    %cst_59 = arith.constant dense<0.000000e+00> : vector<256x4xf32>
    %47 = tpu.matmul %44, %46, %cst_59 {dimension_numbers = #tpu.dot_dimension_numbers<[1], [0], [0], [1], [0, 0, 1, 1], [], []>} : vector<256x12xf32>, vector<12x4xf32>, vector<256x4xf32> -> vector<256x4xf32>
    %c1_60 = arith.constant 1 : index
    %c0_61 = arith.constant 0 : index
    %c0_62 = arith.constant 0 : index
    %48 = vector.load %arg6[%c1_60, %c0_61, %c0_62] : memref<18x16x12xf32, #tpu.memory_space<vmem>>, vector<16x16x12xf32>
    %49 = vector.shape_cast %48 : vector<16x16x12xf32> to vector<256x12xf32>
    %c1_63 = arith.constant 1 : index
    %c0_64 = arith.constant 0 : index
    %c0_65 = arith.constant 0 : index
    %50 = vector.load %arg3[%c1_63, %c0_64, %c0_65] : memref<3x12x4xf32, #tpu.memory_space<vmem>>, vector<1x12x4xf32>
    %51 = vector.shape_cast %50 : vector<1x12x4xf32> to vector<12x4xf32>
    %cst_66 = arith.constant dense<0.000000e+00> : vector<256x4xf32>
    %52 = tpu.matmul %49, %51, %cst_66 {dimension_numbers = #tpu.dot_dimension_numbers<[1], [0], [0], [1], [0, 0, 1, 1], [], []>} : vector<256x12xf32>, vector<12x4xf32>, vector<256x4xf32> -> vector<256x4xf32>
    %53 = arith.addf %47, %52 : vector<256x4xf32>
    %c2_67 = arith.constant 2 : index
    %c0_68 = arith.constant 0 : index
    %c0_69 = arith.constant 0 : index
    %54 = vector.load %arg6[%c2_67, %c0_68, %c0_69] : memref<18x16x12xf32, #tpu.memory_space<vmem>>, vector<16x16x12xf32>
    %55 = vector.shape_cast %54 : vector<16x16x12xf32> to vector<256x12xf32>
    %c2_70 = arith.constant 2 : index
    %c0_71 = arith.constant 0 : index
    %c0_72 = arith.constant 0 : index
    %56 = vector.load %arg3[%c2_70, %c0_71, %c0_72] : memref<3x12x4xf32, #tpu.memory_space<vmem>>, vector<1x12x4xf32>
    %57 = vector.shape_cast %56 : vector<1x12x4xf32> to vector<12x4xf32>
    %cst_73 = arith.constant dense<0.000000e+00> : vector<256x4xf32>
    %58 = tpu.matmul %55, %57, %cst_73 {dimension_numbers = #tpu.dot_dimension_numbers<[1], [0], [0], [1], [0, 0, 1, 1], [], []>} : vector<256x12xf32>, vector<12x4xf32>, vector<256x4xf32> -> vector<256x4xf32>
    %59 = arith.addf %53, %58 : vector<256x4xf32>
    %60 = vector.shape_cast %59 : vector<256x4xf32> to vector<16x16x4xf32>
    %61 = arith.addf %60, %7 : vector<16x16x4xf32>
    %c0_74 = arith.constant 0 : index
    %c0_75 = arith.constant 0 : index
    %c0_76 = arith.constant 0 : index
    %c0_77 = arith.constant 0 : index
    %62 = vector.load %arg5[%c0_74, %c0_75, %c0_76, %c0_77] : memref<1x16x16x4xf32, #tpu.memory_space<vmem>>, vector<1x16x16x4xf32>
    %63 = vector.shape_cast %62 : vector<1x16x16x4xf32> to vector<16x16x4xf32>
    %64 = vector.shape_cast %61 : vector<16x16x4xf32> to vector<1x16x16x4xf32>
    tpu.vector_store %arg5[%c0_74, %c0_75, %c0_76, %c0_77], %64 {strides = array<i32>} : memref<1x16x16x4xf32, #tpu.memory_space<vmem>>, vector<1x16x16x4xf32>,
    return
  }
  func.func @transform_0(%arg0: i32) -> (i32, i32, i32, i32) {
    %c0_i32 = arith.constant 0 : i32
    %c0_i32_0 = arith.constant 0 : i32
    %c0_i32_1 = arith.constant 0 : i32
    %c0_i32_2 = arith.constant 0 : i32
    return %arg0, %c0_i32, %c0_i32_0, %c0_i32_1 : i32, i32, i32, i32
  }
  func.func @transform_1(%arg0: i32) -> (i32, i32, i32) {
    %c0_i32 = arith.constant 0 : i32
    %c0_i32_0 = arith.constant 0 : i32
    %c0_i32_1 = arith.constant 0 : i32
    %c0_i32_2 = arith.constant 0 : i32
    return %c0_i32, %c0_i32_0, %c0_i32_1 : i32, i32, i32
  }
  func.func @transform_2(%arg0: i32) -> (i32, i32, i32) {
    %c0_i32 = arith.constant 0 : i32
    %c0_i32_0 = arith.constant 0 : i32
    %c0_i32_1 = arith.constant 0 : i32
    %c0_i32_2 = arith.constant 0 : i32
    return %c0_i32, %c0_i32_0, %c0_i32_1 : i32, i32, i32
  }
  func.func @transform_3(%arg0: i32) -> (i32, i32) {
    %c0_i32 = arith.constant 0 : i32
    %c0_i32_0 = arith.constant 0 : i32
    %c0_i32_1 = arith.constant 0 : i32
    return %c0_i32, %c0_i32_0 : i32, i32
  }
  func.func @transform_4(%arg0: i32) -> (i32, i32, i32, i32) {
    %c0_i32 = arith.constant 0 : i32
    %c0_i32_0 = arith.constant 0 : i32
    %c0_i32_1 = arith.constant 0 : i32
    %c0_i32_2 = arith.constant 0 : i32
    return %arg0, %c0_i32, %c0_i32_0, %c0_i32_1 : i32, i32, i32, i32
  }
}

</mosaic_0001>

<llo_original>
// kernel: tpu_custom_call.1
$region0: #{tpu_custom_call.1}
  #allocation0 [shape = 'u32[]', space=smem, size = 0x4, offset = 0x4, fixed_abs, tag = 'smem constant byte address 0x4 - core index']
  #allocation1 [shape = 'u32[144,128]{1,0:T(1,128)}', space=vmem, size = 0x12000, scoped, tag = 'internal scratch']
  #allocation2 [shape = 'f32[18,16,12]{2,1,0:T(8,128)}', space=vmem, size = 0x24000, scoped, tag = 'scratch operand']
  %s0 = inlined_call_operand.vmem [shape: f32[2,16,16,4], index: 0, kind: input, shape index: {}]
  %s1 = inlined_call_operand.vmem [shape: f32[3,12,4], index: 1, kind: input, shape index: {}]
  %s2 = inlined_call_operand.vmem [shape: f32[3,12,4], index: 2, kind: input, shape index: {}]
  %s3 = inlined_call_operand.vmem [shape: f32[1,4], index: 3, kind: input, shape index: {}]
  %s4 = inlined_call_operand.vmem [shape: f32[2,16,16,4], index: 4, kind: output, shape index: {}]
  %s5 = sld [smem:[#allocation0]]
  $region49: #{tpu_custom_call.1} parent=0
    _
  %s7 = ssub.s32 1, %s5
  %s8 = scalar_select 0, %s7, %s5
  loop: start=0, step=1, limit=4
  $region2: #{tpu_custom_call.1} parent=0 // loop_pre_header
    _
  $region3: #{tpu_custom_call.1} parent=0 // loop_header
    %s10 = sphi 0, %s14
    %p11 = scmp.ge.s32.totalorder %s10, 4
    %s20 = sphi 0, %s22
    %s23 = sphi 0, %s20
    %s24 = sphi 0, %s23
    %s40 = sphi 0, %s24
    %s44 = sphi 0, %s44
    %s46 = sphi 0, %s44
    %s47 = sphi 0, %s46
    %s61 = sphi 0, %s47
    %s65 = sphi 0, %s65
    %s67 = sphi 0, %s65
    %s68 = sphi 0, %s67
    %s82 = sphi 0, %s68
    %s86 = sphi 0, %s86
    %s88 = sphi 0, %s86
    %s89 = sphi 0, %s88
    %s103 = sphi 0, %s89
    %s109 = sphi 0, %s111
    %s112 = sphi 0, %s109
    %s113 = sphi 0, %s112
    %s129 = sphi 0, %s113
  $region4: #{tpu_custom_call.1} parent=0 // loop_header_branch
    %13 = sbr.rel (%p11) target = $region8
  $region5: #{tpu_custom_call.1} parent=0 // loop_body
    %s15 = ssub.s32 %s10, 1
    %s16 = ssub.s32 %s10, 2
    %s17 = sadd.s32 %s10, 1
    %s18 = ssub.s32 %s10, %s17
    %p19 = scmp.eq.s32.totalorder %s18, 0
    %s21 = sadd.s32 %s20, 1
    %s22 = scalar_select %p19, %s20, %s21
    %p25 = pneg %p19
    %p26 = scmp.eq.s32.totalorder %s10, 1
    %p27 = por %p25, %p26
    %p28 = scmp.ne.s32.totalorder %s20, %s23
    %p29 = scmp.eq.s32.totalorder %s10, 0
    %p30 = por %p28, %p29
    %p31 = scmp.ne.s32.totalorder %s20, %s23
    %p32 = scmp.eq.s32.totalorder %s15, 1
    %p33 = por %p31, %p32
    %p34 = scmp.ne.s32.totalorder %s23, %s24
    %p35 = scmp.eq.s32.totalorder %s15, 0
    %p36 = por %p34, %p35
    %p37 = scmp.ne.s32.totalorder %s23, %s24
    %p38 = scmp.eq.s32.totalorder %s16, 1
    %p39 = por %p37, %p38
    %p41 = scmp.ne.s32.totalorder %s24, %s40
    %p42 = scmp.eq.s32.totalorder %s16, 0
    %p43 = por %p41, %p42
    %s45 = sadd.s32 %s44, 1
    %p48 = scmp.eq.s32.totalorder %s10, 1
    %p49 = scmp.ne.s32.totalorder %s44, %s46
    %p50 = scmp.eq.s32.totalorder %s10, 0
    %p51 = por %p49, %p50
    %p52 = scmp.ne.s32.totalorder %s44, %s46
    %p53 = scmp.eq.s32.totalorder %s15, 1
    %p54 = por %p52, %p53
    %p55 = scmp.ne.s32.totalorder %s46, %s47
    %p56 = scmp.eq.s32.totalorder %s15, 0
    %p57 = por %p55, %p56
    %p58 = scmp.ne.s32.totalorder %s46, %s47
    %p59 = scmp.eq.s32.totalorder %s16, 1
    %p60 = por %p58, %p59
    %p62 = scmp.ne.s32.totalorder %s47, %s61
    %p63 = scmp.eq.s32.totalorder %s16, 0
    %p64 = por %p62, %p63
    %s66 = sadd.s32 %s65, 1
    %p69 = scmp.eq.s32.totalorder %s10, 1
    %p70 = scmp.ne.s32.totalorder %s65, %s67
    %p71 = scmp.eq.s32.totalorder %s10, 0
    %p72 = por %p70, %p71
    %p73 = scmp.ne.s32.totalorder %s65, %s67
    %p74 = scmp.eq.s32.totalorder %s15, 1
    %p75 = por %p73, %p74
    %p76 = scmp.ne.s32.totalorder %s67, %s68
    %p77 = scmp.eq.s32.totalorder %s15, 0
    %p78 = por %p76, %p77
    %p79 = scmp.ne.s32.totalorder %s67, %s68
    %p80 = scmp.eq.s32.totalorder %s16, 1
    %p81 = por %p79, %p80
    %p83 = scmp.ne.s32.totalorder %s68, %s82
    %p84 = scmp.eq.s32.totalorder %s16, 0
    %p85 = por %p83, %p84
    %s87 = sadd.s32 %s86, 1
    %p90 = scmp.eq.s32.totalorder %s10, 1
    %p91 = scmp.ne.s32.totalorder %s86, %s88
    %p92 = scmp.eq.s32.totalorder %s10, 0
    %p93 = por %p91, %p92
    %p94 = scmp.ne.s32.totalorder %s86, %s88
    %p95 = scmp.eq.s32.totalorder %s15, 1
    %p96 = por %p94, %p95
    %p97 = scmp.ne.s32.totalorder %s88, %s89
    %p98 = scmp.eq.s32.totalorder %s15, 0
    %p99 = por %p97, %p98
    %p100 = scmp.ne.s32.totalorder %s88, %s89
    %p101 = scmp.eq.s32.totalorder %s16, 1
    %p102 = por %p100, %p101
    %p104 = scmp.ne.s32.totalorder %s89, %s103
    %p105 = scmp.eq.s32.totalorder %s16, 0
    %p106 = por %p104, %p105
    %s107 = ssub.s32 %s10, %s17
    %p108 = scmp.eq.s32.totalorder %s107, 0
    %s110 = sadd.s32 %s109, 1
    %s111 = scalar_select %p108, %s109, %s110
    %p114 = pneg %p108
    %p115 = scmp.eq.s32.totalorder %s10, 1
    %p116 = por %p114, %p115
    %p117 = scmp.ne.s32.totalorder %s109, %s112
    %p118 = scmp.eq.s32.totalorder %s10, 0
    %p119 = por %p117, %p118
    %p120 = scmp.ne.s32.totalorder %s109, %s112
    %p121 = scmp.eq.s32.totalorder %s15, 1
    %p122 = por %p120, %p121
    %p123 = scmp.ne.s32.totalorder %s112, %s113
    %p124 = scmp.eq.s32.totalorder %s15, 0
    %p125 = por %p123, %p124
    %p126 = scmp.ne.s32.totalorder %s112, %s113
    %p127 = scmp.eq.s32.totalorder %s16, 1
    %p128 = por %p126, %p127
    %p130 = scmp.ne.s32.totalorder %s113, %s129
    %p131 = scmp.eq.s32.totalorder %s16, 0
    %p132 = por %p130, %p131
    %p133 = scmp.le.s32.totalorder 1, %s10
    %p134 = scmp.lt.s32.totalorder %s10, 3
    %p135 = pnand %p133, %p134
    %p136 = pneg %p135
    // Predicated region
    $region9: #{tpu_custom_call.1} parent=5 // pred_check
      _
    $region10: #{tpu_custom_call.1} parent=5 // pred_check_branch
      %138 = sbr.rel (%p135) target = $region12
    $region11: #{tpu_custom_call.1} parent=5 // pred_region
      %s139 = ssub.s32 %s10, 1
      // Predicated region
      $region13: #{tpu_custom_call.1} parent=11 // pred_check
        %p140 = pneg %p57
      $region14: #{tpu_custom_call.1} parent=11 // pred_check_branch
        %142 = sbr.rel (%p140) target = $region16
      $region15: #{tpu_custom_call.1} parent=11 // pred_region
        _
      $region16: #{tpu_custom_call.1} parent=11 // pred_fallthru
        _
      // Predicated region
      $region17: #{tpu_custom_call.1} parent=11 // pred_check
        %p143 = pneg %p78
      $region18: #{tpu_custom_call.1} parent=11 // pred_check_branch
        %145 = sbr.rel (%p143) target = $region20
      $region19: #{tpu_custom_call.1} parent=11 // pred_region
        _
      $region20: #{tpu_custom_call.1} parent=11 // pred_fallthru
        _
      // Predicated region
      $region21: #{tpu_custom_call.1} parent=11 // pred_check
        %p146 = pneg %p99
      $region22: #{tpu_custom_call.1} parent=11 // pred_check_branch
        %148 = sbr.rel (%p146) target = $region24
      $region23: #{tpu_custom_call.1} parent=11 // pred_region
        _
      $region24: #{tpu_custom_call.1} parent=11 // pred_fallthru
        _
    $region12: #{tpu_custom_call.1} parent=5 // pred_fallthru
      _
    %p149 = scmp.lt.s32.totalorder %s10, 2
    // Predicated region
    $region25: #{tpu_custom_call.1} parent=5 // pred_check
      %p150 = pneg %p149
    $region26: #{tpu_custom_call.1} parent=5 // pred_check_branch
      %152 = sbr.rel (%p150) target = $region28
    $region27: #{tpu_custom_call.1} parent=5 // pred_region
      // Predicated region
      $region29: #{tpu_custom_call.1} parent=27 // pred_check
        %p153 = pneg %p30
      $region30: #{tpu_custom_call.1} parent=27 // pred_check_branch
        %155 = sbr.rel (%p153) target = $region32
      $region31: #{tpu_custom_call.1} parent=27 // pred_region
        %p156 = scmp.lt.s32.totalorder %s10, 1
        %s157 = scalar_select %p156, %s10, 1
        %s158 = smul.addr %s157, 32
        %s159 = smul.addr %s158, 8
        %s160 = scalar_lea.vmem %s0, %s159
      $region32: #{tpu_custom_call.1} parent=27 // pred_fallthru
        _
    $region28: #{tpu_custom_call.1} parent=5 // pred_fallthru
      _
    %p161 = scmp.le.s32.totalorder 1, %s10
    %p162 = scmp.lt.s32.totalorder %s10, 3
    %p163 = pnand %p161, %p162
    %p164 = pneg %p163
    // Predicated region
    $region33: #{tpu_custom_call.1} parent=5 // pred_check
      _
    $region34: #{tpu_custom_call.1} parent=5 // pred_check_branch
      %166 = sbr.rel (%p163) target = $region36
    $region35: #{tpu_custom_call.1} parent=5 // pred_region
      %s167 = ssub.s32 %s10, 1
      %p168 = scmp.lt.s32.totalorder %s15, 1
      %s169 = scalar_select %p168, %s15, 1
      %s170 = smul.addr %s169, 32
      %s171 = smul.addr %s170, 8
      %s172 = scalar_lea.vmem %s0, %s171
      %p173 = pneg %p36
      %p174 = pneg %p33
      %p175 = pneg %p57
      %p176 = pneg %p54
      %p177 = pneg %p78
      %p178 = pneg %p75
      %p179 = pneg %p99
      %p180 = pneg %p96
      %p181 = pneg %p125
      %p182 = pneg %p122
      %p183 = scmp.lt.s32.totalorder %s15, 1
      %s184 = scalar_select %p183, %s15, 1
      %s185 = smul.addr %s184, 32
      %s186 = smul.addr %s185, 8
      %s187 = scalar_lea.vmem %s4, %s186
      %p188 = scmp.lt.s32.totalorder %s15, 1
      %s189 = scalar_select %p188, %s15, 1
      %s190 = smul.addr %s189, 32
      %s191 = smul.addr %s190, 8
      %s192 = scalar_lea.vmem %s0, %s191
      %p193 = scmp.lt.s32.totalorder %s15, 1
      %s194 = scalar_select %p193, %s15, 1
      %s195 = smul.addr %s194, 32
      %s196 = smul.addr %s195, 8
      %s197 = scalar_lea.vmem %s4, %s196
      %vm198 = vcmask 97280
      %199 = vst.msk [vmem:[#allocation2] sm:$0xff] %vm198, 0.0
      %200 = vst.msk [vmem:[#allocation2 + $0x8] sm:$0xff] %vm198, 0.0
      %s201 = scalar_lea.vmem [#allocation2], 272
      %202 = vst.msk [vmem:[%s201] sm:$0xff] %vm198, 0.0
      %203 = vst.msk [vmem:[%s201 + $0x8] sm:$0xff] %vm198, 0.0
      %s204 = scalar_lea.vmem [#allocation2], 16
      %vm205 = vcmask 24576
      %206 = vst.msk [vmem:[%s204] sm:$0x1] %vm205, 0.0
      %207 = vst.msk [vmem:[%s204 + $0x10] sm:$0x1] %vm205, 0.0
      %208 = vst.msk [vmem:[%s204 + $0x20] sm:$0x1] %vm205, 0.0
      %209 = vst.msk [vmem:[%s204 + $0x30] sm:$0x1] %vm205, 0.0
      %210 = vst.msk [vmem:[%s204 + $0x40] sm:$0x1] %vm205, 0.0
      %211 = vst.msk [vmem:[%s204 + $0x50] sm:$0x1] %vm205, 0.0
      %212 = vst.msk [vmem:[%s204 + $0x60] sm:$0x1] %vm205, 0.0
      %213 = vst.msk [vmem:[%s204 + $0x70] sm:$0x1] %vm205, 0.0
      %214 = vst.msk [vmem:[%s204 + $0x80] sm:$0x1] %vm205, 0.0
      %215 = vst.msk [vmem:[%s204 + $0x90] sm:$0x1] %vm205, 0.0
      %216 = vst.msk [vmem:[%s204 + $0xa0] sm:$0x1] %vm205, 0.0
      %217 = vst.msk [vmem:[%s204 + $0xb0] sm:$0x1] %vm205, 0.0
      %218 = vst.msk [vmem:[%s204 + $0xc0] sm:$0x1] %vm205, 0.0
      %219 = vst.msk [vmem:[%s204 + $0xd0] sm:$0x1] %vm205, 0.0
      %220 = vst.msk [vmem:[%s204 + $0xe0] sm:$0x1] %vm205, 0.0
      %221 = vst.msk [vmem:[%s204 + $0xf0] sm:$0x1] %vm205, 0.0
      %vm222 = vcmask 90176
      %223 = vst.msk [vmem:[%s204 + $0xf] sm:$0x1] %vm222, 0.0
      %224 = vst.msk [vmem:[%s204 + $0x1f] sm:$0x1] %vm222, 0.0
      %225 = vst.msk [vmem:[%s204 + $0x2f] sm:$0x1] %vm222, 0.0
      %226 = vst.msk [vmem:[%s204 + $0x3f] sm:$0x1] %vm222, 0.0
      %227 = vst.msk [vmem:[%s204 + $0x4f] sm:$0x1] %vm222, 0.0
      %228 = vst.msk [vmem:[%s204 + $0x5f] sm:$0x1] %vm222, 0.0
      %229 = vst.msk [vmem:[%s204 + $0x6f] sm:$0x1] %vm222, 0.0
      %230 = vst.msk [vmem:[%s204 + $0x7f] sm:$0x1] %vm222, 0.0
      %231 = vst.msk [vmem:[%s204 + $0x8f] sm:$0x1] %vm222, 0.0
      %232 = vst.msk [vmem:[%s204 + $0x9f] sm:$0x1] %vm222, 0.0
      %233 = vst.msk [vmem:[%s204 + $0xaf] sm:$0x1] %vm222, 0.0
      %234 = vst.msk [vmem:[%s204 + $0xbf] sm:$0x1] %vm222, 0.0
      %235 = vst.msk [vmem:[%s204 + $0xcf] sm:$0x1] %vm222, 0.0
      %236 = vst.msk [vmem:[%s204 + $0xdf] sm:$0x1] %vm222, 0.0
      %237 = vst.msk [vmem:[%s204 + $0xef] sm:$0x1] %vm222, 0.0
      %238 = vst.msk [vmem:[%s204 + $0xff] sm:$0x1] %vm222, 0.0
      %v239 = vld [vmem:[%s192] sm:$0xff]
      %v240 = vld [vmem:[%s192 + $0x8] sm:$0xff]
      %v241 = vld [vmem:[%s192 + $0x10] sm:$0xff]
      %v242 = vld [vmem:[%s192 + $0x18] sm:$0xff]
      %v243 = vld [vmem:[%s192 + $0x20] sm:$0xff]
      %v244 = vld [vmem:[%s192 + $0x28] sm:$0xff]
      %v245 = vld [vmem:[%s192 + $0x30] sm:$0xff]
      %v246 = vld [vmem:[%s192 + $0x38] sm:$0xff]
      %v247 = vld [vmem:[%s192 + $0x40] sm:$0xff]
      %v248 = vld [vmem:[%s192 + $0x48] sm:$0xff]
      %v249 = vld [vmem:[%s192 + $0x50] sm:$0xff]
      %v250 = vld [vmem:[%s192 + $0x58] sm:$0xff]
      %v251 = vld [vmem:[%s192 + $0x60] sm:$0xff]
      %v252 = vld [vmem:[%s192 + $0x68] sm:$0xff]
      %v253 = vld [vmem:[%s192 + $0x70] sm:$0xff]
      %v254 = vld [vmem:[%s192 + $0x78] sm:$0xff]
      %v255 = vld [vmem:[%s192 + $0x80] sm:$0xff]
      %v256 = vld [vmem:[%s192 + $0x88] sm:$0xff]
      %v257 = vld [vmem:[%s192 + $0x90] sm:$0xff]
      %v258 = vld [vmem:[%s192 + $0x98] sm:$0xff]
      %v259 = vld [vmem:[%s192 + $0xa0] sm:$0xff]
      %v260 = vld [vmem:[%s192 + $0xa8] sm:$0xff]
      %v261 = vld [vmem:[%s192 + $0xb0] sm:$0xff]
      %v262 = vld [vmem:[%s192 + $0xb8] sm:$0xff]
      %v263 = vld [vmem:[%s192 + $0xc0] sm:$0xff]
      %v264 = vld [vmem:[%s192 + $0xc8] sm:$0xff]
      %v265 = vld [vmem:[%s192 + $0xd0] sm:$0xff]
      %v266 = vld [vmem:[%s192 + $0xd8] sm:$0xff]
      %v267 = vld [vmem:[%s192 + $0xe0] sm:$0xff]
      %v268 = vld [vmem:[%s192 + $0xe8] sm:$0xff]
      %v269 = vld [vmem:[%s192 + $0xf0] sm:$0xff]
      %v270 = vld [vmem:[%s192 + $0xf8] sm:$0xff]
      %v271 = vmax.f32 %v239, 0.0
      %v272 = vmax.f32 %v240, 0.0
      %v273 = vmax.f32 %v241, 0.0
      %v274 = vmax.f32 %v242, 0.0
      %v275 = vmax.f32 %v243, 0.0
      %v276 = vmax.f32 %v244, 0.0
      %v277 = vmax.f32 %v245, 0.0
      %v278 = vmax.f32 %v246, 0.0
      %v279 = vmax.f32 %v247, 0.0
      %v280 = vmax.f32 %v248, 0.0
      %v281 = vmax.f32 %v249, 0.0
      %v282 = vmax.f32 %v250, 0.0
      %v283 = vmax.f32 %v251, 0.0
      %v284 = vmax.f32 %v252, 0.0
      %v285 = vmax.f32 %v253, 0.0
      %v286 = vmax.f32 %v254, 0.0
      %v287 = vmax.f32 %v255, 0.0
      %v288 = vmax.f32 %v256, 0.0
      %v289 = vmax.f32 %v257, 0.0
      %v290 = vmax.f32 %v258, 0.0
      %v291 = vmax.f32 %v259, 0.0
      %v292 = vmax.f32 %v260, 0.0
      %v293 = vmax.f32 %v261, 0.0
      %v294 = vmax.f32 %v262, 0.0
      %v295 = vmax.f32 %v263, 0.0
      %v296 = vmax.f32 %v264, 0.0
      %v297 = vmax.f32 %v265, 0.0
      %v298 = vmax.f32 %v266, 0.0
      %v299 = vmax.f32 %v267, 0.0
      %v300 = vmax.f32 %v268, 0.0
      %v301 = vmax.f32 %v269, 0.0
      %v302 = vmax.f32 %v270, 0.0
      %vm303 = vcmask 31744
      %304 = vst.msk [vmem:[%s204 + $0x1] sm:$0xff] %vm303, %v271
      %vm305 = vcmask 30720
      %306 = vst.msk [vmem:[%s204 + $0x9] sm:$0x7f] %vm305, %v272
      %307 = vst.msk [vmem:[%s204 + $0x11] sm:$0xff] %vm303, %v273
      %308 = vst.msk [vmem:[%s204 + $0x19] sm:$0x7f] %vm305, %v274
      %309 = vst.msk [vmem:[%s204 + $0x21] sm:$0xff] %vm303, %v275
      %310 = vst.msk [vmem:[%s204 + $0x29] sm:$0x7f] %vm305, %v276
      %311 = vst.msk [vmem:[%s204 + $0x31] sm:$0xff] %vm303, %v277
      %312 = vst.msk [vmem:[%s204 + $0x39] sm:$0x7f] %vm305, %v278
      %313 = vst.msk [vmem:[%s204 + $0x41] sm:$0xff] %vm303, %v279
      %314 = vst.msk [vmem:[%s204 + $0x49] sm:$0x7f] %vm305, %v280
      %315 = vst.msk [vmem:[%s204 + $0x51] sm:$0xff] %vm303, %v281
      %316 = vst.msk [vmem:[%s204 + $0x59] sm:$0x7f] %vm305, %v282
      %317 = vst.msk [vmem:[%s204 + $0x61] sm:$0xff] %vm303, %v283
      %318 = vst.msk [vmem:[%s204 + $0x69] sm:$0x7f] %vm305, %v284
      %319 = vst.msk [vmem:[%s204 + $0x71] sm:$0xff] %vm303, %v285
      %320 = vst.msk [vmem:[%s204 + $0x79] sm:$0x7f] %vm305, %v286
      %321 = vst.msk [vmem:[%s204 + $0x81] sm:$0xff] %vm303, %v287
      %322 = vst.msk [vmem:[%s204 + $0x89] sm:$0x7f] %vm305, %v288
      %323 = vst.msk [vmem:[%s204 + $0x91] sm:$0xff] %vm303, %v289
      %324 = vst.msk [vmem:[%s204 + $0x99] sm:$0x7f] %vm305, %v290
      %325 = vst.msk [vmem:[%s204 + $0xa1] sm:$0xff] %vm303, %v291
      %326 = vst.msk [vmem:[%s204 + $0xa9] sm:$0x7f] %vm305, %v292
      %327 = vst.msk [vmem:[%s204 + $0xb1] sm:$0xff] %vm303, %v293
      %328 = vst.msk [vmem:[%s204 + $0xb9] sm:$0x7f] %vm305, %v294
      %329 = vst.msk [vmem:[%s204 + $0xc1] sm:$0xff] %vm303, %v295
      %330 = vst.msk [vmem:[%s204 + $0xc9] sm:$0x7f] %vm305, %v296
      %331 = vst.msk [vmem:[%s204 + $0xd1] sm:$0xff] %vm303, %v297
      %332 = vst.msk [vmem:[%s204 + $0xd9] sm:$0x7f] %vm305, %v298
      %333 = vst.msk [vmem:[%s204 + $0xe1] sm:$0xff] %vm303, %v299
      %334 = vst.msk [vmem:[%s204 + $0xe9] sm:$0x7f] %vm305, %v300
      %335 = vst.msk [vmem:[%s204 + $0xf1] sm:$0xff] %vm303, %v301
      %336 = vst.msk [vmem:[%s204 + $0xf9] sm:$0x7f] %vm305, %v302
      %369 = vrot.lane.b32.xlu0 %v271, 4
      %v370 = vpop.permute.xlu0 %369
      %371 = vrot.lane.b32.xlu0 %v272, 4
      %v372 = vpop.permute.xlu0 %371
      %373 = vrot.lane.b32.xlu0 %v273, 4
      %v374 = vpop.permute.xlu0 %373
      %375 = vrot.lane.b32.xlu0 %v274, 4
      %v376 = vpop.permute.xlu0 %375
      %377 = vrot.lane.b32.xlu0 %v275, 4
      %v378 = vpop.permute.xlu0 %377
      %379 = vrot.lane.b32.xlu0 %v276, 4
      %v380 = vpop.permute.xlu0 %379
      %381 = vrot.lane.b32.xlu0 %v277, 4
      %v382 = vpop.permute.xlu0 %381
      %383 = vrot.lane.b32.xlu0 %v278, 4
      %v384 = vpop.permute.xlu0 %383
      %385 = vrot.lane.b32.xlu0 %v279, 4
      %v386 = vpop.permute.xlu0 %385
      %387 = vrot.lane.b32.xlu0 %v280, 4
      %v388 = vpop.permute.xlu0 %387
      %389 = vrot.lane.b32.xlu0 %v281, 4
      %v390 = vpop.permute.xlu0 %389
      %391 = vrot.lane.b32.xlu0 %v282, 4
      %v392 = vpop.permute.xlu0 %391
      %393 = vrot.lane.b32.xlu0 %v283, 4
      %v394 = vpop.permute.xlu0 %393
      %395 = vrot.lane.b32.xlu0 %v284, 4
      %v396 = vpop.permute.xlu0 %395
      %397 = vrot.lane.b32.xlu0 %v285, 4
      %v398 = vpop.permute.xlu0 %397
      %399 = vrot.lane.b32.xlu0 %v286, 4
      %v400 = vpop.permute.xlu0 %399
      %401 = vrot.lane.b32.xlu0 %v287, 4
      %v402 = vpop.permute.xlu0 %401
      %403 = vrot.lane.b32.xlu0 %v288, 4
      %v404 = vpop.permute.xlu0 %403
      %405 = vrot.lane.b32.xlu0 %v289, 4
      %v406 = vpop.permute.xlu0 %405
      %407 = vrot.lane.b32.xlu0 %v290, 4
      %v408 = vpop.permute.xlu0 %407
      %409 = vrot.lane.b32.xlu0 %v291, 4
      %v410 = vpop.permute.xlu0 %409
      %411 = vrot.lane.b32.xlu0 %v292, 4
      %v412 = vpop.permute.xlu0 %411
      %413 = vrot.lane.b32.xlu0 %v293, 4
      %v414 = vpop.permute.xlu0 %413
      %415 = vrot.lane.b32.xlu0 %v294, 4
      %v416 = vpop.permute.xlu0 %415
      %417 = vrot.lane.b32.xlu0 %v295, 4
      %v418 = vpop.permute.xlu0 %417
      %419 = vrot.lane.b32.xlu0 %v296, 4
      %v420 = vpop.permute.xlu0 %419
      %421 = vrot.lane.b32.xlu0 %v297, 4
      %v422 = vpop.permute.xlu0 %421
      %423 = vrot.lane.b32.xlu0 %v298, 4
      %v424 = vpop.permute.xlu0 %423
      %425 = vrot.lane.b32.xlu0 %v299, 4
      %v426 = vpop.permute.xlu0 %425
      %427 = vrot.lane.b32.xlu0 %v300, 4
      %v428 = vpop.permute.xlu0 %427
      %429 = vrot.lane.b32.xlu0 %v301, 4
      %v430 = vpop.permute.xlu0 %429
      %431 = vrot.lane.b32.xlu0 %v302, 4
      %v432 = vpop.permute.xlu0 %431
      %vm465 = vcmask 64544
      %466 = vst.msk [vmem:[%s204] sm:$0xff] %vm465, %v370
      %467 = vst.msk [vmem:[%s204 + $0x8] sm:$0xff] %vm465, %v372
      %468 = vst.msk [vmem:[%s204 + $0x10] sm:$0xff] %vm465, %v374
      %469 = vst.msk [vmem:[%s204 + $0x18] sm:$0xff] %vm465, %v376
      %470 = vst.msk [vmem:[%s204 + $0x20] sm:$0xff] %vm465, %v378
      %471 = vst.msk [vmem:[%s204 + $0x28] sm:$0xff] %vm465, %v380
      %472 = vst.msk [vmem:[%s204 + $0x30] sm:$0xff] %vm465, %v382
      %473 = vst.msk [vmem:[%s204 + $0x38] sm:$0xff] %vm465, %v384
      %474 = vst.msk [vmem:[%s204 + $0x40] sm:$0xff] %vm465, %v386
      %475 = vst.msk [vmem:[%s204 + $0x48] sm:$0xff] %vm465, %v388
      %476 = vst.msk [vmem:[%s204 + $0x50] sm:$0xff] %vm465, %v390
      %477 = vst.msk [vmem:[%s204 + $0x58] sm:$0xff] %vm465, %v392
      %478 = vst.msk [vmem:[%s204 + $0x60] sm:$0xff] %vm465, %v394
      %479 = vst.msk [vmem:[%s204 + $0x68] sm:$0xff] %vm465, %v396
      %480 = vst.msk [vmem:[%s204 + $0x70] sm:$0xff] %vm465, %v398
      %481 = vst.msk [vmem:[%s204 + $0x78] sm:$0xff] %vm465, %v400
      %482 = vst.msk [vmem:[%s204 + $0x80] sm:$0xff] %vm465, %v402
      %483 = vst.msk [vmem:[%s204 + $0x88] sm:$0xff] %vm465, %v404
      %484 = vst.msk [vmem:[%s204 + $0x90] sm:$0xff] %vm465, %v406
      %485 = vst.msk [vmem:[%s204 + $0x98] sm:$0xff] %vm465, %v408
      %486 = vst.msk [vmem:[%s204 + $0xa0] sm:$0xff] %vm465, %v410
      %487 = vst.msk [vmem:[%s204 + $0xa8] sm:$0xff] %vm465, %v412
      %488 = vst.msk [vmem:[%s204 + $0xb0] sm:$0xff] %vm465, %v414
      %489 = vst.msk [vmem:[%s204 + $0xb8] sm:$0xff] %vm465, %v416
      %490 = vst.msk [vmem:[%s204 + $0xc0] sm:$0xff] %vm465, %v418
      %491 = vst.msk [vmem:[%s204 + $0xc8] sm:$0xff] %vm465, %v420
      %492 = vst.msk [vmem:[%s204 + $0xd0] sm:$0xff] %vm465, %v422
      %493 = vst.msk [vmem:[%s204 + $0xd8] sm:$0xff] %vm465, %v424
      %494 = vst.msk [vmem:[%s204 + $0xe0] sm:$0xff] %vm465, %v426
      %495 = vst.msk [vmem:[%s204 + $0xe8] sm:$0xff] %vm465, %v428
      %496 = vst.msk [vmem:[%s204 + $0xf0] sm:$0xff] %vm465, %v430
      %497 = vst.msk [vmem:[%s204 + $0xf8] sm:$0xff] %vm465, %v432
      %498 = vrot.lane.b32.xlu0 %v271, 8
      %v499 = vpop.permute.xlu0 %498
      %500 = vrot.lane.b32.xlu0 %v272, 8
      %v501 = vpop.permute.xlu0 %500
      %502 = vrot.lane.b32.xlu0 %v273, 8
      %v503 = vpop.permute.xlu0 %502
      %504 = vrot.lane.b32.xlu0 %v274, 8
      %v505 = vpop.permute.xlu0 %504
      %506 = vrot.lane.b32.xlu0 %v275, 8
      %v507 = vpop.permute.xlu0 %506
      %508 = vrot.lane.b32.xlu0 %v276, 8
      %v509 = vpop.permute.xlu0 %508
      %510 = vrot.lane.b32.xlu0 %v277, 8
      %v511 = vpop.permute.xlu0 %510
      %512 = vrot.lane.b32.xlu0 %v278, 8
      %v513 = vpop.permute.xlu0 %512
      %514 = vrot.lane.b32.xlu0 %v279, 8
      %v515 = vpop.permute.xlu0 %514
      %516 = vrot.lane.b32.xlu0 %v280, 8
      %v517 = vpop.permute.xlu0 %516
      %518 = vrot.lane.b32.xlu0 %v281, 8
      %v519 = vpop.permute.xlu0 %518
      %520 = vrot.lane.b32.xlu0 %v282, 8
      %v521 = vpop.permute.xlu0 %520
      %522 = vrot.lane.b32.xlu0 %v283, 8
      %v523 = vpop.permute.xlu0 %522
      %524 = vrot.lane.b32.xlu0 %v284, 8
      %v525 = vpop.permute.xlu0 %524
      %526 = vrot.lane.b32.xlu0 %v285, 8
      %v527 = vpop.permute.xlu0 %526
      %528 = vrot.lane.b32.xlu0 %v286, 8
      %v529 = vpop.permute.xlu0 %528
      %530 = vrot.lane.b32.xlu0 %v287, 8
      %v531 = vpop.permute.xlu0 %530
      %532 = vrot.lane.b32.xlu0 %v288, 8
      %v533 = vpop.permute.xlu0 %532
      %534 = vrot.lane.b32.xlu0 %v289, 8
      %v535 = vpop.permute.xlu0 %534
      %536 = vrot.lane.b32.xlu0 %v290, 8
      %v537 = vpop.permute.xlu0 %536
      %538 = vrot.lane.b32.xlu0 %v291, 8
      %v539 = vpop.permute.xlu0 %538
      %540 = vrot.lane.b32.xlu0 %v292, 8
      %v541 = vpop.permute.xlu0 %540
      %542 = vrot.lane.b32.xlu0 %v293, 8
      %v543 = vpop.permute.xlu0 %542
      %544 = vrot.lane.b32.xlu0 %v294, 8
      %v545 = vpop.permute.xlu0 %544
      %546 = vrot.lane.b32.xlu0 %v295, 8
      %v547 = vpop.permute.xlu0 %546
      %548 = vrot.lane.b32.xlu0 %v296, 8
      %v549 = vpop.permute.xlu0 %548
      %550 = vrot.lane.b32.xlu0 %v297, 8
      %v551 = vpop.permute.xlu0 %550
      %552 = vrot.lane.b32.xlu0 %v298, 8
      %v553 = vpop.permute.xlu0 %552
      %554 = vrot.lane.b32.xlu0 %v299, 8
      %v555 = vpop.permute.xlu0 %554
      %556 = vrot.lane.b32.xlu0 %v300, 8
      %v557 = vpop.permute.xlu0 %556
      %558 = vrot.lane.b32.xlu0 %v301, 8
      %v559 = vpop.permute.xlu0 %558
      %560 = vrot.lane.b32.xlu0 %v302, 8
      %v561 = vpop.permute.xlu0 %560
      %vm594 = vcmask 97345
      %595 = vst.msk [vmem:[%s204 - $0x1] sm:$0xfe] %vm594, %v499
      %vm596 = vcmask 97344
      %597 = vst.msk [vmem:[%s204 + $0x7] sm:$0xff] %vm596, %v501
      %598 = vst.msk [vmem:[%s204 + $0xf] sm:$0xfe] %vm594, %v503
      %599 = vst.msk [vmem:[%s204 + $0x17] sm:$0xff] %vm596, %v505
      %600 = vst.msk [vmem:[%s204 + $0x1f] sm:$0xfe] %vm594, %v507
      %601 = vst.msk [vmem:[%s204 + $0x27] sm:$0xff] %vm596, %v509
      %602 = vst.msk [vmem:[%s204 + $0x2f] sm:$0xfe] %vm594, %v511
      %603 = vst.msk [vmem:[%s204 + $0x37] sm:$0xff] %vm596, %v513
      %604 = vst.msk [vmem:[%s204 + $0x3f] sm:$0xfe] %vm594, %v515
      %605 = vst.msk [vmem:[%s204 + $0x47] sm:$0xff] %vm596, %v517
      %606 = vst.msk [vmem:[%s204 + $0x4f] sm:$0xfe] %vm594, %v519
      %607 = vst.msk [vmem:[%s204 + $0x57] sm:$0xff] %vm596, %v521
      %608 = vst.msk [vmem:[%s204 + $0x5f] sm:$0xfe] %vm594, %v523
      %609 = vst.msk [vmem:[%s204 + $0x67] sm:$0xff] %vm596, %v525
      %610 = vst.msk [vmem:[%s204 + $0x6f] sm:$0xfe] %vm594, %v527
      %611 = vst.msk [vmem:[%s204 + $0x77] sm:$0xff] %vm596, %v529
      %612 = vst.msk [vmem:[%s204 + $0x7f] sm:$0xfe] %vm594, %v531
      %613 = vst.msk [vmem:[%s204 + $0x87] sm:$0xff] %vm596, %v533
      %614 = vst.msk [vmem:[%s204 + $0x8f] sm:$0xfe] %vm594, %v535
      %615 = vst.msk [vmem:[%s204 + $0x97] sm:$0xff] %vm596, %v537
      %616 = vst.msk [vmem:[%s204 + $0x9f] sm:$0xfe] %vm594, %v539
      %617 = vst.msk [vmem:[%s204 + $0xa7] sm:$0xff] %vm596, %v541
      %618 = vst.msk [vmem:[%s204 + $0xaf] sm:$0xfe] %vm594, %v543
      %619 = vst.msk [vmem:[%s204 + $0xb7] sm:$0xff] %vm596, %v545
      %620 = vst.msk [vmem:[%s204 + $0xbf] sm:$0xfe] %vm594, %v547
      %621 = vst.msk [vmem:[%s204 + $0xc7] sm:$0xff] %vm596, %v549
      %622 = vst.msk [vmem:[%s204 + $0xcf] sm:$0xfe] %vm594, %v551
      %623 = vst.msk [vmem:[%s204 + $0xd7] sm:$0xff] %vm596, %v553
      %624 = vst.msk [vmem:[%s204 + $0xdf] sm:$0xfe] %vm594, %v555
      %625 = vst.msk [vmem:[%s204 + $0xe7] sm:$0xff] %vm596, %v557
      %626 = vst.msk [vmem:[%s204 + $0xef] sm:$0xfe] %vm594, %v559
      %627 = vst.msk [vmem:[%s204 + $0xf7] sm:$0xff] %vm596, %v561
      %v628 = vld [vmem:[#allocation2] sm:$0xff]
      %v629 = vld [vmem:[#allocation2 + $0x8] sm:$0xff]
      %v630 = vld [vmem:[#allocation2 + $0x10] sm:$0xff]
      %v631 = vld [vmem:[#allocation2 + $0x18] sm:$0xff]
      %v632 = vld [vmem:[#allocation2 + $0x20] sm:$0xff]
      %v633 = vld [vmem:[#allocation2 + $0x28] sm:$0xff]
      %v634 = vld [vmem:[#allocation2 + $0x30] sm:$0xff]
      %v635 = vld [vmem:[#allocation2 + $0x38] sm:$0xff]
      %v636 = vld [vmem:[#allocation2 + $0x40] sm:$0xff]
      %v637 = vld [vmem:[#allocation2 + $0x48] sm:$0xff]
      %v638 = vld [vmem:[#allocation2 + $0x50] sm:$0xff]
      %v639 = vld [vmem:[#allocation2 + $0x58] sm:$0xff]
      %v640 = vld [vmem:[#allocation2 + $0x60] sm:$0xff]
      %v641 = vld [vmem:[#allocation2 + $0x68] sm:$0xff]
      %v642 = vld [vmem:[#allocation2 + $0x70] sm:$0xff]
      %v643 = vld [vmem:[#allocation2 + $0x78] sm:$0xff]
      %v644 = vld [vmem:[#allocation2 + $0x80] sm:$0xff]
      %v645 = vld [vmem:[#allocation2 + $0x88] sm:$0xff]
      %v646 = vld [vmem:[#allocation2 + $0x90] sm:$0xff]
      %v647 = vld [vmem:[#allocation2 + $0x98] sm:$0xff]
      %v648 = vld [vmem:[#allocation2 + $0xa0] sm:$0xff]
      %v649 = vld [vmem:[#allocation2 + $0xa8] sm:$0xff]
      %v650 = vld [vmem:[#allocation2 + $0xb0] sm:$0xff]
      %v651 = vld [vmem:[#allocation2 + $0xb8] sm:$0xff]
      %v652 = vld [vmem:[#allocation2 + $0xc0] sm:$0xff]
      %v653 = vld [vmem:[#allocation2 + $0xc8] sm:$0xff]
      %v654 = vld [vmem:[#allocation2 + $0xd0] sm:$0xff]
      %v655 = vld [vmem:[#allocation2 + $0xd8] sm:$0xff]
      %v656 = vld [vmem:[#allocation2 + $0xe0] sm:$0xff]
      %v657 = vld [vmem:[#allocation2 + $0xe8] sm:$0xff]
      %v658 = vld [vmem:[#allocation2 + $0xf0] sm:$0xff]
      %v659 = vld [vmem:[#allocation2 + $0xf8] sm:$0xff]
      %v660 = vld [vmem:[%s1] sm:$0xff]
      %v661 = vld [vmem:[%s1 + $0x8] sm:$0xf]
      %v662 = vld [vmem:[%s204] sm:$0xff]
      %v663 = vld [vmem:[%s204 + $0x8] sm:$0xff]
      %v664 = vld [vmem:[%s204 + $0x10] sm:$0xff]
      %v665 = vld [vmem:[%s204 + $0x18] sm:$0xff]
      %v666 = vld [vmem:[%s204 + $0x20] sm:$0xff]
      %v667 = vld [vmem:[%s204 + $0x28] sm:$0xff]
      %v668 = vld [vmem:[%s204 + $0x30] sm:$0xff]
      %v669 = vld [vmem:[%s204 + $0x38] sm:$0xff]
      %v670 = vld [vmem:[%s204 + $0x40] sm:$0xff]
      %v671 = vld [vmem:[%s204 + $0x48] sm:$0xff]
      %v672 = vld [vmem:[%s204 + $0x50] sm:$0xff]
      %v673 = vld [vmem:[%s204 + $0x58] sm:$0xff]
      %v674 = vld [vmem:[%s204 + $0x60] sm:$0xff]
      %v675 = vld [vmem:[%s204 + $0x68] sm:$0xff]
      %v676 = vld [vmem:[%s204 + $0x70] sm:$0xff]
      %v677 = vld [vmem:[%s204 + $0x78] sm:$0xff]
      %v678 = vld [vmem:[%s204 + $0x80] sm:$0xff]
      %v679 = vld [vmem:[%s204 + $0x88] sm:$0xff]
      %v680 = vld [vmem:[%s204 + $0x90] sm:$0xff]
      %v681 = vld [vmem:[%s204 + $0x98] sm:$0xff]
      %v682 = vld [vmem:[%s204 + $0xa0] sm:$0xff]
      %v683 = vld [vmem:[%s204 + $0xa8] sm:$0xff]
      %v684 = vld [vmem:[%s204 + $0xb0] sm:$0xff]
      %v685 = vld [vmem:[%s204 + $0xb8] sm:$0xff]
      %v686 = vld [vmem:[%s204 + $0xc0] sm:$0xff]
      %v687 = vld [vmem:[%s204 + $0xc8] sm:$0xff]
      %v688 = vld [vmem:[%s204 + $0xd0] sm:$0xff]
      %v689 = vld [vmem:[%s204 + $0xd8] sm:$0xff]
      %v690 = vld [vmem:[%s204 + $0xe0] sm:$0xff]
      %v691 = vld [vmem:[%s204 + $0xe8] sm:$0xff]
      %v692 = vld [vmem:[%s204 + $0xf0] sm:$0xff]
      %v693 = vld [vmem:[%s204 + $0xf8] sm:$0xff]
      %s694 = scalar_lea.vmem %s1, 16
      %v695 = vld [vmem:[%s694] sm:$0xff]
      %v696 = vld [vmem:[%s694 + $0x8] sm:$0xf]
      %v698 = vsel %vm198, %v662, 0
      %v701 = vsel %vm198, %v663, 0
      %v704 = vsel %vm198, %v664, 0
      %v707 = vsel %vm198, %v665, 0
      %v710 = vsel %vm198, %v666, 0
      %v713 = vsel %vm198, %v667, 0
      %v716 = vsel %vm198, %v668, 0
      %v719 = vsel %vm198, %v669, 0
      %v722 = vsel %vm198, %v670, 0
      %v725 = vsel %vm198, %v671, 0
      %v728 = vsel %vm198, %v672, 0
      %v731 = vsel %vm198, %v673, 0
      %v734 = vsel %vm198, %v674, 0
      %v737 = vsel %vm198, %v675, 0
      %v740 = vsel %vm198, %v676, 0
      %v743 = vsel %vm198, %v677, 0
      %v746 = vsel %vm198, %v678, 0
      %v749 = vsel %vm198, %v679, 0
      %v752 = vsel %vm198, %v680, 0
      %v755 = vsel %vm198, %v681, 0
      %v758 = vsel %vm198, %v682, 0
      %v761 = vsel %vm198, %v683, 0
      %v764 = vsel %vm198, %v684, 0
      %v767 = vsel %vm198, %v685, 0
      %v770 = vsel %vm198, %v686, 0
      %v773 = vsel %vm198, %v687, 0
      %v776 = vsel %vm198, %v688, 0
      %v779 = vsel %vm198, %v689, 0
      %v782 = vsel %vm198, %v690, 0
      %v785 = vsel %vm198, %v691, 0
      %v788 = vsel %vm198, %v692, 0
      %v791 = vsel %vm198, %v693, 0
      %vm793 = vcmask 1043456
      %v795 = vsel %vm793, %v696, 0
      %797 = vmatprep.subr.mxu0 0.0
      %798 = vmatpush1.msra.mxu0 %v695
      %799 = vmatprep.subr.mxu0 0.0
      %800 = vmatpush1.msra.mxu0 %v795
      %801 = vmatprep.subr.mxu0 0.0
      %802 = vmatpush1.msra.mxu0 0.0
      %803 = vmatprep.subr.mxu0 0.0
      %804 = vmatpush1.msra.mxu0 0.0
      %805 = vmatprep.subr.mxu0 0.0
      %806 = vmatpush1.msra.mxu0 0.0
      %807 = vmatprep.subr.mxu0 0.0
      %808 = vmatpush1.msra.mxu0 0.0
      %809 = vmatprep.subr.mxu0 0.0
      %810 = vmatpush1.msra.mxu0 0.0
      %811 = vmatprep.subr.mxu0 0.0
      %812 = vmatpush1.msra.mxu0 0.0
      %813 = vmatprep.subr.mxu0 0.0
      %814 = vmatpush1.msra.mxu0 0.0
      %815 = vmatprep.subr.mxu0 0.0
      %816 = vmatpush1.msra.mxu0 0.0
      %817 = vmatprep.subr.mxu0 0.0
      %818 = vmatpush1.msra.mxu0 0.0
      %819 = vmatprep.subr.mxu0 0.0
      %820 = vmatpush1.msra.mxu0 0.0
      %821 = vmatprep.subr.mxu0 0.0
      %822 = vmatpush1.msra.mxu0 0.0
      %823 = vmatprep.subr.mxu0 0.0
      %824 = vmatpush1.msra.mxu0 0.0
      %825 = vmatprep.subr.mxu0 0.0
      %826 = vmatpush1.msra.mxu0 0.0
      %827 = vmatprep.subr.mxu0 0.0
      %828 = vmatpush1.msra.mxu0 0.0
      %829 = vmatprep.subr.mxu0 0.0
      %830 = vmatpush1.msra.mxu0 0.0
      %831 = vmatprep.subr.mxu0 0.0
      %832 = vmatpush1.msra.mxu0 0.0
      %833 = vmatprep.subr.mxu0 0.0
      %834 = vmatpush1.msra.mxu0 0.0
      %835 = vmatprep.subr.mxu0 0.0
      %836 = vmatpush1.msra.mxu0 0.0
      %837 = vmatprep.subr.mxu0 0.0
      %838 = vmatpush1.msra.mxu0 0.0
      %839 = vmatprep.subr.mxu0 0.0
      %840 = vmatpush1.msra.mxu0 0.0
      %841 = vmatprep.subr.mxu0 0.0
      %842 = vmatpush1.msra.mxu0 0.0
      %843 = vmatprep.subr.mxu0 0.0
      %844 = vmatpush1.msra.mxu0 0.0
      %845 = vmatprep.subr.mxu0 0.0
      %846 = vmatpush1.msra.mxu0 0.0
      %847 = vmatprep.subr.mxu0 0.0
      %848 = vmatpush1.msra.mxu0 0.0
      %849 = vmatprep.subr.mxu0 0.0
      %850 = vmatpush1.msra.mxu0 0.0
      %851 = vmatprep.subr.mxu0 0.0
      %852 = vmatpush1.msra.mxu0 0.0
      %853 = vmatprep.subr.mxu0 0.0
      %854 = vmatpush1.msra.mxu0 0.0
      %855 = vmatprep.subr.mxu0 0.0
      %856 = vmatpush1.msra.mxu0 0.0
      %857 = vmatprep.subr.mxu0 0.0
      %858 = vmatpush1.msra.mxu0 0.0
      %859 = vmatprep.subr.mxu0 0.0
      %860 = vmatpush1.msra.mxu0 0.0
      %861 = vmatprep.mubr.f32.mxu0 0.0
      %862 = vmatmul.mubr.f32.gmra.mrb[0].mxu0 %v698
      %v863 = vpop.f32.mrb[0].mxu0
      %v864 = vadd.f32 0.0, %v863
      %v865 = vpop.f32.mrb[0].mxu0
      %866 = vmatprep.mubr.f32.mxu0 0.0
      %867 = vmatmul.mubr.f32.gmra.mrb[0].mxu0 %v701
      %v868 = vpop.f32.mrb[0].mxu0
      %v869 = vadd.f32 0.0, %v868
      %v870 = vpop.f32.mrb[0].mxu0
      %871 = vmatprep.mubr.f32.mxu0 0.0
      %872 = vmatmul.mubr.f32.gmra.mrb[0].mxu0 %v704
      %v873 = vpop.f32.mrb[0].mxu0
      %v874 = vadd.f32 0.0, %v873
      %v875 = vpop.f32.mrb[0].mxu0
      %876 = vmatprep.mubr.f32.mxu0 0.0
      %877 = vmatmul.mubr.f32.gmra.mrb[0].mxu0 %v707
      %v878 = vpop.f32.mrb[0].mxu0
      %v879 = vadd.f32 0.0, %v878
      %v880 = vpop.f32.mrb[0].mxu0
      %881 = vmatprep.mubr.f32.mxu0 0.0
      %882 = vmatmul.mubr.f32.gmra.mrb[0].mxu0 %v710
      %v883 = vpop.f32.mrb[0].mxu0
      %v884 = vadd.f32 0.0, %v883
      %v885 = vpop.f32.mrb[0].mxu0
      %886 = vmatprep.mubr.f32.mxu0 0.0
      %887 = vmatmul.mubr.f32.gmra.mrb[0].mxu0 %v713
      %v888 = vpop.f32.mrb[0].mxu0
      %v889 = vadd.f32 0.0, %v888
      %v890 = vpop.f32.mrb[0].mxu0
      %891 = vmatprep.mubr.f32.mxu0 0.0
      %892 = vmatmul.mubr.f32.gmra.mrb[0].mxu0 %v716
      %v893 = vpop.f32.mrb[0].mxu0
      %v894 = vadd.f32 0.0, %v893
      %v895 = vpop.f32.mrb[0].mxu0
      %896 = vmatprep.mubr.f32.mxu0 0.0
      %897 = vmatmul.mubr.f32.gmra.mrb[0].mxu0 %v719
      %v898 = vpop.f32.mrb[0].mxu0
      %v899 = vadd.f32 0.0, %v898
      %v900 = vpop.f32.mrb[0].mxu0
      %901 = vmatprep.mubr.f32.mxu0 0.0
      %902 = vmatmul.mubr.f32.gmra.mrb[0].mxu0 %v722
      %v903 = vpop.f32.mrb[0].mxu0
      %v904 = vadd.f32 0.0, %v903
      %v905 = vpop.f32.mrb[0].mxu0
      %906 = vmatprep.mubr.f32.mxu0 0.0
      %907 = vmatmul.mubr.f32.gmra.mrb[0].mxu0 %v725
      %v908 = vpop.f32.mrb[0].mxu0
      %v909 = vadd.f32 0.0, %v908
      %v910 = vpop.f32.mrb[0].mxu0
      %911 = vmatprep.mubr.f32.mxu0 0.0
      %912 = vmatmul.mubr.f32.gmra.mrb[0].mxu0 %v728
      %v913 = vpop.f32.mrb[0].mxu0
      %v914 = vadd.f32 0.0, %v913
      %v915 = vpop.f32.mrb[0].mxu0
      %916 = vmatprep.mubr.f32.mxu0 0.0
      %917 = vmatmul.mubr.f32.gmra.mrb[0].mxu0 %v731
      %v918 = vpop.f32.mrb[0].mxu0
      %v919 = vadd.f32 0.0, %v918
      %v920 = vpop.f32.mrb[0].mxu0
      %921 = vmatprep.mubr.f32.mxu0 0.0
      %922 = vmatmul.mubr.f32.gmra.mrb[0].mxu0 %v734
      %v923 = vpop.f32.mrb[0].mxu0
      %v924 = vadd.f32 0.0, %v923
      %v925 = vpop.f32.mrb[0].mxu0
      %926 = vmatprep.mubr.f32.mxu0 0.0
      %927 = vmatmul.mubr.f32.gmra.mrb[0].mxu0 %v737
      %v928 = vpop.f32.mrb[0].mxu0
      %v929 = vadd.f32 0.0, %v928
      %v930 = vpop.f32.mrb[0].mxu0
      %931 = vmatprep.mubr.f32.mxu0 0.0
      %932 = vmatmul.mubr.f32.gmra.mrb[0].mxu0 %v740
      %v933 = vpop.f32.mrb[0].mxu0
      %v934 = vadd.f32 0.0, %v933
      %v935 = vpop.f32.mrb[0].mxu0
      %936 = vmatprep.mubr.f32.mxu0 0.0
      %937 = vmatmul.mubr.f32.gmra.mrb[0].mxu0 %v743
      %v938 = vpop.f32.mrb[0].mxu0
      %v939 = vadd.f32 0.0, %v938
      %v940 = vpop.f32.mrb[0].mxu0
      %941 = vmatprep.mubr.f32.mxu0 0.0
      %942 = vmatmul.mubr.f32.gmra.mrb[0].mxu0 %v746
      %v943 = vpop.f32.mrb[0].mxu0
      %v944 = vadd.f32 0.0, %v943
      %v945 = vpop.f32.mrb[0].mxu0
      %946 = vmatprep.mubr.f32.mxu0 0.0
      %947 = vmatmul.mubr.f32.gmra.mrb[0].mxu0 %v749
      %v948 = vpop.f32.mrb[0].mxu0
      %v949 = vadd.f32 0.0, %v948
      %v950 = vpop.f32.mrb[0].mxu0
      %951 = vmatprep.mubr.f32.mxu0 0.0
      %952 = vmatmul.mubr.f32.gmra.mrb[0].mxu0 %v752
      %v953 = vpop.f32.mrb[0].mxu0
      %v954 = vadd.f32 0.0, %v953
      %v955 = vpop.f32.mrb[0].mxu0
      %956 = vmatprep.mubr.f32.mxu0 0.0
      %957 = vmatmul.mubr.f32.gmra.mrb[0].mxu0 %v755
      %v958 = vpop.f32.mrb[0].mxu0
      %v959 = vadd.f32 0.0, %v958
      %v960 = vpop.f32.mrb[0].mxu0
      %961 = vmatprep.mubr.f32.mxu0 0.0
      %962 = vmatmul.mubr.f32.gmra.mrb[0].mxu0 %v758
      %v963 = vpop.f32.mrb[0].mxu0
      %v964 = vadd.f32 0.0, %v963
      %v965 = vpop.f32.mrb[0].mxu0
      %966 = vmatprep.mubr.f32.mxu0 0.0
      %967 = vmatmul.mubr.f32.gmra.mrb[0].mxu0 %v761
      %v968 = vpop.f32.mrb[0].mxu0
      %v969 = vadd.f32 0.0, %v968
      %v970 = vpop.f32.mrb[0].mxu0
      %971 = vmatprep.mubr.f32.mxu0 0.0
      %972 = vmatmul.mubr.f32.gmra.mrb[0].mxu0 %v764
      %v973 = vpop.f32.mrb[0].mxu0
      %v974 = vadd.f32 0.0, %v973
      %v975 = vpop.f32.mrb[0].mxu0
      %976 = vmatprep.mubr.f32.mxu0 0.0
      %977 = vmatmul.mubr.f32.gmra.mrb[0].mxu0 %v767
      %v978 = vpop.f32.mrb[0].mxu0
      %v979 = vadd.f32 0.0, %v978
      %v980 = vpop.f32.mrb[0].mxu0
      %981 = vmatprep.mubr.f32.mxu0 0.0
      %982 = vmatmul.mubr.f32.gmra.mrb[0].mxu0 %v770
      %v983 = vpop.f32.mrb[0].mxu0
      %v984 = vadd.f32 0.0, %v983
      %v985 = vpop.f32.mrb[0].mxu0
      %986 = vmatprep.mubr.f32.mxu0 0.0
      %987 = vmatmul.mubr.f32.gmra.mrb[0].mxu0 %v773
      %v988 = vpop.f32.mrb[0].mxu0
      %v989 = vadd.f32 0.0, %v988
      %v990 = vpop.f32.mrb[0].mxu0
      %991 = vmatprep.mubr.f32.mxu0 0.0
      %992 = vmatmul.mubr.f32.gmra.mrb[0].mxu0 %v776
      %v993 = vpop.f32.mrb[0].mxu0
      %v994 = vadd.f32 0.0, %v993
      %v995 = vpop.f32.mrb[0].mxu0
      %996 = vmatprep.mubr.f32.mxu0 0.0
      %997 = vmatmul.mubr.f32.gmra.mrb[0].mxu0 %v779
      %v998 = vpop.f32.mrb[0].mxu0
      %v999 = vadd.f32 0.0, %v998
      %v1000 = vpop.f32.mrb[0].mxu0
      %1001 = vmatprep.mubr.f32.mxu0 0.0
      %1002 = vmatmul.mubr.f32.gmra.mrb[0].mxu0 %v782
      %v1003 = vpop.f32.mrb[0].mxu0
      %v1004 = vadd.f32 0.0, %v1003
      %v1005 = vpop.f32.mrb[0].mxu0
      %1006 = vmatprep.mubr.f32.mxu0 0.0
      %1007 = vmatmul.mubr.f32.gmra.mrb[0].mxu0 %v785
      %v1008 = vpop.f32.mrb[0].mxu0
      %v1009 = vadd.f32 0.0, %v1008
      %v1010 = vpop.f32.mrb[0].mxu0
      %1011 = vmatprep.mubr.f32.mxu0 0.0
      %1012 = vmatmul.mubr.f32.gmra.mrb[0].mxu0 %v788
      %v1013 = vpop.f32.mrb[0].mxu0
      %v1014 = vadd.f32 0.0, %v1013
      %v1015 = vpop.f32.mrb[0].mxu0
      %1016 = vmatprep.mubr.f32.mxu0 0.0
      %1017 = vmatmul.mubr.f32.gmra.mrb[0].mxu0 %v791
      %v1018 = vpop.f32.mrb[0].mxu0
      %v1019 = vadd.f32 0.0, %v1018
      %v1020 = vpop.f32.mrb[0].mxu0
      %1021 = vdwg.mxu0
      %v1023 = vsel %vm198, %v628, 0
      %v1026 = vsel %vm198, %v629, 0
      %v1029 = vsel %vm198, %v630, 0
      %v1032 = vsel %vm198, %v631, 0
      %v1035 = vsel %vm198, %v632, 0
      %v1038 = vsel %vm198, %v633, 0
      %v1041 = vsel %vm198, %v634, 0
      %v1044 = vsel %vm198, %v635, 0
      %v1047 = vsel %vm198, %v636, 0
      %v1050 = vsel %vm198, %v637, 0
      %v1053 = vsel %vm198, %v638, 0
      %v1056 = vsel %vm198, %v639, 0
      %v1059 = vsel %vm198, %v640, 0
      %v1062 = vsel %vm198, %v641, 0
      %v1065 = vsel %vm198, %v642, 0
      %v1068 = vsel %vm198, %v643, 0
      %v1071 = vsel %vm198, %v644, 0
      %v1074 = vsel %vm198, %v645, 0
      %v1077 = vsel %vm198, %v646, 0
      %v1080 = vsel %vm198, %v647, 0
      %v1083 = vsel %vm198, %v648, 0
      %v1086 = vsel %vm198, %v649, 0
      %v1089 = vsel %vm198, %v650, 0
      %v1092 = vsel %vm198, %v651, 0
      %v1095 = vsel %vm198, %v652, 0
      %v1098 = vsel %vm198, %v653, 0
      %v1101 = vsel %vm198, %v654, 0
      %v1104 = vsel %vm198, %v655, 0
      %v1107 = vsel %vm198, %v656, 0
      %v1110 = vsel %vm198, %v657, 0
      %v1113 = vsel %vm198, %v658, 0
      %v1116 = vsel %vm198, %v659, 0
      %v1119 = vsel %vm793, %v661, 0
      %1121 = vmatprep.subr.mxu0 0.0
      %1122 = vmatpush1.msra.mxu0 %v660
      %1123 = vmatprep.subr.mxu0 0.0
      %1124 = vmatpush1.msra.mxu0 %v1119
      %1125 = vmatprep.subr.mxu0 0.0
      %1126 = vmatpush1.msra.mxu0 0.0
      %1127 = vmatprep.subr.mxu0 0.0
      %1128 = vmatpush1.msra.mxu0 0.0
      %1129 = vmatprep.subr.mxu0 0.0
      %1130 = vmatpush1.msra.mxu0 0.0
      %1131 = vmatprep.subr.mxu0 0.0
      %1132 = vmatpush1.msra.mxu0 0.0
      %1133 = vmatprep.subr.mxu0 0.0
      %1134 = vmatpush1.msra.mxu0 0.0
      %1135 = vmatprep.subr.mxu0 0.0
      %1136 = vmatpush1.msra.mxu0 0.0
      %1137 = vmatprep.subr.mxu0 0.0
      %1138 = vmatpush1.msra.mxu0 0.0
      %1139 = vmatprep.subr.mxu0 0.0
      %1140 = vmatpush1.msra.mxu0 0.0
      %1141 = vmatprep.subr.mxu0 0.0
      %1142 = vmatpush1.msra.mxu0 0.0
      %1143 = vmatprep.subr.mxu0 0.0
      %1144 = vmatpush1.msra.mxu0 0.0
      %1145 = vmatprep.subr.mxu0 0.0
      %1146 = vmatpush1.msra.mxu0 0.0
      %1147 = vmatprep.subr.mxu0 0.0
      %1148 = vmatpush1.msra.mxu0 0.0
      %1149 = vmatprep.subr.mxu0 0.0
      %1150 = vmatpush1.msra.mxu0 0.0
      %1151 = vmatprep.subr.mxu0 0.0
      %1152 = vmatpush1.msra.mxu0 0.0
      %1153 = vmatprep.subr.mxu0 0.0
      %1154 = vmatpush1.msra.mxu0 0.0
      %1155 = vmatprep.subr.mxu0 0.0
      %1156 = vmatpush1.msra.mxu0 0.0
      %1157 = vmatprep.subr.mxu0 0.0
      %1158 = vmatpush1.msra.mxu0 0.0
      %1159 = vmatprep.subr.mxu0 0.0
      %1160 = vmatpush1.msra.mxu0 0.0
      %1161 = vmatprep.subr.mxu0 0.0
      %1162 = vmatpush1.msra.mxu0 0.0
      %1163 = vmatprep.subr.mxu0 0.0
      %1164 = vmatpush1.msra.mxu0 0.0
      %1165 = vmatprep.subr.mxu0 0.0
      %1166 = vmatpush1.msra.mxu0 0.0
      %1167 = vmatprep.subr.mxu0 0.0
      %1168 = vmatpush1.msra.mxu0 0.0
      %1169 = vmatprep.subr.mxu0 0.0
      %1170 = vmatpush1.msra.mxu0 0.0
      %1171 = vmatprep.subr.mxu0 0.0
      %1172 = vmatpush1.msra.mxu0 0.0
      %1173 = vmatprep.subr.mxu0 0.0
      %1174 = vmatpush1.msra.mxu0 0.0
      %1175 = vmatprep.subr.mxu0 0.0
      %1176 = vmatpush1.msra.mxu0 0.0
      %1177 = vmatprep.subr.mxu0 0.0
      %1178 = vmatpush1.msra.mxu0 0.0
      %1179 = vmatprep.subr.mxu0 0.0
      %1180 = vmatpush1.msra.mxu0 0.0
      %1181 = vmatprep.subr.mxu0 0.0
      %1182 = vmatpush1.msra.mxu0 0.0
      %1183 = vmatprep.subr.mxu0 0.0
      %1184 = vmatpush1.msra.mxu0 0.0
      %1185 = vmatprep.mubr.f32.mxu0 0.0
      %1186 = vmatmul.mubr.f32.gmra.mrb[0].mxu0 %v1023
      %v1187 = vpop.f32.mrb[0].mxu0
      %v1188 = vadd.f32 %v864, %v1187
      %v1189 = vpop.f32.mrb[0].mxu0
      %1190 = vmatprep.mubr.f32.mxu0 0.0
      %1191 = vmatmul.mubr.f32.gmra.mrb[0].mxu0 %v1026
      %v1192 = vpop.f32.mrb[0].mxu0
      %v1193 = vadd.f32 %v869, %v1192
      %v1194 = vpop.f32.mrb[0].mxu0
      %1195 = vmatprep.mubr.f32.mxu0 0.0
      %1196 = vmatmul.mubr.f32.gmra.mrb[0].mxu0 %v1029
      %v1197 = vpop.f32.mrb[0].mxu0
      %v1198 = vadd.f32 %v874, %v1197
      %v1199 = vpop.f32.mrb[0].mxu0
      %1200 = vmatprep.mubr.f32.mxu0 0.0
      %1201 = vmatmul.mubr.f32.gmra.mrb[0].mxu0 %v1032
      %v1202 = vpop.f32.mrb[0].mxu0
      %v1203 = vadd.f32 %v879, %v1202
      %v1204 = vpop.f32.mrb[0].mxu0
      %1205 = vmatprep.mubr.f32.mxu0 0.0
      %1206 = vmatmul.mubr.f32.gmra.mrb[0].mxu0 %v1035
      %v1207 = vpop.f32.mrb[0].mxu0
      %v1208 = vadd.f32 %v884, %v1207
      %v1209 = vpop.f32.mrb[0].mxu0
      %1210 = vmatprep.mubr.f32.mxu0 0.0
      %1211 = vmatmul.mubr.f32.gmra.mrb[0].mxu0 %v1038
      %v1212 = vpop.f32.mrb[0].mxu0
      %v1213 = vadd.f32 %v889, %v1212
      %v1214 = vpop.f32.mrb[0].mxu0
      %1215 = vmatprep.mubr.f32.mxu0 0.0
      %1216 = vmatmul.mubr.f32.gmra.mrb[0].mxu0 %v1041
      %v1217 = vpop.f32.mrb[0].mxu0
      %v1218 = vadd.f32 %v894, %v1217
      %v1219 = vpop.f32.mrb[0].mxu0
      %1220 = vmatprep.mubr.f32.mxu0 0.0
      %1221 = vmatmul.mubr.f32.gmra.mrb[0].mxu0 %v1044
      %v1222 = vpop.f32.mrb[0].mxu0
      %v1223 = vadd.f32 %v899, %v1222
      %v1224 = vpop.f32.mrb[0].mxu0
      %1225 = vmatprep.mubr.f32.mxu0 0.0
      %1226 = vmatmul.mubr.f32.gmra.mrb[0].mxu0 %v1047
      %v1227 = vpop.f32.mrb[0].mxu0
      %v1228 = vadd.f32 %v904, %v1227
      %v1229 = vpop.f32.mrb[0].mxu0
      %1230 = vmatprep.mubr.f32.mxu0 0.0
      %1231 = vmatmul.mubr.f32.gmra.mrb[0].mxu0 %v1050
      %v1232 = vpop.f32.mrb[0].mxu0
      %v1233 = vadd.f32 %v909, %v1232
      %v1234 = vpop.f32.mrb[0].mxu0
      %1235 = vmatprep.mubr.f32.mxu0 0.0
      %1236 = vmatmul.mubr.f32.gmra.mrb[0].mxu0 %v1053
      %v1237 = vpop.f32.mrb[0].mxu0
      %v1238 = vadd.f32 %v914, %v1237
      %v1239 = vpop.f32.mrb[0].mxu0
      %1240 = vmatprep.mubr.f32.mxu0 0.0
      %1241 = vmatmul.mubr.f32.gmra.mrb[0].mxu0 %v1056
      %v1242 = vpop.f32.mrb[0].mxu0
      %v1243 = vadd.f32 %v919, %v1242
      %v1244 = vpop.f32.mrb[0].mxu0
      %1245 = vmatprep.mubr.f32.mxu0 0.0
      %1246 = vmatmul.mubr.f32.gmra.mrb[0].mxu0 %v1059
      %v1247 = vpop.f32.mrb[0].mxu0
      %v1248 = vadd.f32 %v924, %v1247
      %v1249 = vpop.f32.mrb[0].mxu0
      %1250 = vmatprep.mubr.f32.mxu0 0.0
      %1251 = vmatmul.mubr.f32.gmra.mrb[0].mxu0 %v1062
      %v1252 = vpop.f32.mrb[0].mxu0
      %v1253 = vadd.f32 %v929, %v1252
      %v1254 = vpop.f32.mrb[0].mxu0
      %1255 = vmatprep.mubr.f32.mxu0 0.0
      %1256 = vmatmul.mubr.f32.gmra.mrb[0].mxu0 %v1065
      %v1257 = vpop.f32.mrb[0].mxu0
      %v1258 = vadd.f32 %v934, %v1257
      %v1259 = vpop.f32.mrb[0].mxu0
      %1260 = vmatprep.mubr.f32.mxu0 0.0
      %1261 = vmatmul.mubr.f32.gmra.mrb[0].mxu0 %v1068
      %v1262 = vpop.f32.mrb[0].mxu0
      %v1263 = vadd.f32 %v939, %v1262
      %v1264 = vpop.f32.mrb[0].mxu0
      %1265 = vmatprep.mubr.f32.mxu0 0.0
      %1266 = vmatmul.mubr.f32.gmra.mrb[0].mxu0 %v1071
      %v1267 = vpop.f32.mrb[0].mxu0
      %v1268 = vadd.f32 %v944, %v1267
      %v1269 = vpop.f32.mrb[0].mxu0
      %1270 = vmatprep.mubr.f32.mxu0 0.0
      %1271 = vmatmul.mubr.f32.gmra.mrb[0].mxu0 %v1074
      %v1272 = vpop.f32.mrb[0].mxu0
      %v1273 = vadd.f32 %v949, %v1272
      %v1274 = vpop.f32.mrb[0].mxu0
      %1275 = vmatprep.mubr.f32.mxu0 0.0
      %1276 = vmatmul.mubr.f32.gmra.mrb[0].mxu0 %v1077
      %v1277 = vpop.f32.mrb[0].mxu0
      %v1278 = vadd.f32 %v954, %v1277
      %v1279 = vpop.f32.mrb[0].mxu0
      %1280 = vmatprep.mubr.f32.mxu0 0.0
      %1281 = vmatmul.mubr.f32.gmra.mrb[0].mxu0 %v1080
      %v1282 = vpop.f32.mrb[0].mxu0
      %v1283 = vadd.f32 %v959, %v1282
      %v1284 = vpop.f32.mrb[0].mxu0
      %1285 = vmatprep.mubr.f32.mxu0 0.0
      %1286 = vmatmul.mubr.f32.gmra.mrb[0].mxu0 %v1083
      %v1287 = vpop.f32.mrb[0].mxu0
      %v1288 = vadd.f32 %v964, %v1287
      %v1289 = vpop.f32.mrb[0].mxu0
      %1290 = vmatprep.mubr.f32.mxu0 0.0
      %1291 = vmatmul.mubr.f32.gmra.mrb[0].mxu0 %v1086
      %v1292 = vpop.f32.mrb[0].mxu0
      %v1293 = vadd.f32 %v969, %v1292
      %v1294 = vpop.f32.mrb[0].mxu0
      %1295 = vmatprep.mubr.f32.mxu0 0.0
      %1296 = vmatmul.mubr.f32.gmra.mrb[0].mxu0 %v1089
      %v1297 = vpop.f32.mrb[0].mxu0
      %v1298 = vadd.f32 %v974, %v1297
      %v1299 = vpop.f32.mrb[0].mxu0
      %1300 = vmatprep.mubr.f32.mxu0 0.0
      %1301 = vmatmul.mubr.f32.gmra.mrb[0].mxu0 %v1092
      %v1302 = vpop.f32.mrb[0].mxu0
      %v1303 = vadd.f32 %v979, %v1302
      %v1304 = vpop.f32.mrb[0].mxu0
      %1305 = vmatprep.mubr.f32.mxu0 0.0
      %1306 = vmatmul.mubr.f32.gmra.mrb[0].mxu0 %v1095
      %v1307 = vpop.f32.mrb[0].mxu0
      %v1308 = vadd.f32 %v984, %v1307
      %v1309 = vpop.f32.mrb[0].mxu0
      %1310 = vmatprep.mubr.f32.mxu0 0.0
      %1311 = vmatmul.mubr.f32.gmra.mrb[0].mxu0 %v1098
      %v1312 = vpop.f32.mrb[0].mxu0
      %v1313 = vadd.f32 %v989, %v1312
      %v1314 = vpop.f32.mrb[0].mxu0
      %1315 = vmatprep.mubr.f32.mxu0 0.0
      %1316 = vmatmul.mubr.f32.gmra.mrb[0].mxu0 %v1101
      %v1317 = vpop.f32.mrb[0].mxu0
      %v1318 = vadd.f32 %v994, %v1317
      %v1319 = vpop.f32.mrb[0].mxu0
      %1320 = vmatprep.mubr.f32.mxu0 0.0
      %1321 = vmatmul.mubr.f32.gmra.mrb[0].mxu0 %v1104
      %v1322 = vpop.f32.mrb[0].mxu0
      %v1323 = vadd.f32 %v999, %v1322
      %v1324 = vpop.f32.mrb[0].mxu0
      %1325 = vmatprep.mubr.f32.mxu0 0.0
      %1326 = vmatmul.mubr.f32.gmra.mrb[0].mxu0 %v1107
      %v1327 = vpop.f32.mrb[0].mxu0
      %v1328 = vadd.f32 %v1004, %v1327
      %v1329 = vpop.f32.mrb[0].mxu0
      %1330 = vmatprep.mubr.f32.mxu0 0.0
      %1331 = vmatmul.mubr.f32.gmra.mrb[0].mxu0 %v1110
      %v1332 = vpop.f32.mrb[0].mxu0
      %v1333 = vadd.f32 %v1009, %v1332
      %v1334 = vpop.f32.mrb[0].mxu0
      %1335 = vmatprep.mubr.f32.mxu0 0.0
      %1336 = vmatmul.mubr.f32.gmra.mrb[0].mxu0 %v1113
      %v1337 = vpop.f32.mrb[0].mxu0
      %v1338 = vadd.f32 %v1014, %v1337
      %v1339 = vpop.f32.mrb[0].mxu0
      %1340 = vmatprep.mubr.f32.mxu0 0.0
      %1341 = vmatmul.mubr.f32.gmra.mrb[0].mxu0 %v1116
      %v1342 = vpop.f32.mrb[0].mxu0
      %v1343 = vadd.f32 %v1019, %v1342
      %v1344 = vpop.f32.mrb[0].mxu0
      %1345 = vdwg.mxu0
      %s1346 = scalar_lea.vmem [#allocation2], 32
      %v1347 = vld [vmem:[%s1346] sm:$0xff]
      %v1348 = vld [vmem:[%s1346 + $0x8] sm:$0xff]
      %v1349 = vld [vmem:[%s1346 + $0x10] sm:$0xff]
      %v1350 = vld [vmem:[%s1346 + $0x18] sm:$0xff]
      %v1351 = vld [vmem:[%s1346 + $0x20] sm:$0xff]
      %v1352 = vld [vmem:[%s1346 + $0x28] sm:$0xff]
      %v1353 = vld [vmem:[%s1346 + $0x30] sm:$0xff]
      %v1354 = vld [vmem:[%s1346 + $0x38] sm:$0xff]
      %v1355 = vld [vmem:[%s1346 + $0x40] sm:$0xff]
      %v1356 = vld [vmem:[%s1346 + $0x48] sm:$0xff]
      %v1357 = vld [vmem:[%s1346 + $0x50] sm:$0xff]
      %v1358 = vld [vmem:[%s1346 + $0x58] sm:$0xff]
      %v1359 = vld [vmem:[%s1346 + $0x60] sm:$0xff]
      %v1360 = vld [vmem:[%s1346 + $0x68] sm:$0xff]
      %v1361 = vld [vmem:[%s1346 + $0x70] sm:$0xff]
      %v1362 = vld [vmem:[%s1346 + $0x78] sm:$0xff]
      %v1363 = vld [vmem:[%s1346 + $0x80] sm:$0xff]
      %v1364 = vld [vmem:[%s1346 + $0x88] sm:$0xff]
      %v1365 = vld [vmem:[%s1346 + $0x90] sm:$0xff]
      %v1366 = vld [vmem:[%s1346 + $0x98] sm:$0xff]
      %v1367 = vld [vmem:[%s1346 + $0xa0] sm:$0xff]
      %v1368 = vld [vmem:[%s1346 + $0xa8] sm:$0xff]
      %v1369 = vld [vmem:[%s1346 + $0xb0] sm:$0xff]
      %v1370 = vld [vmem:[%s1346 + $0xb8] sm:$0xff]
      %v1371 = vld [vmem:[%s1346 + $0xc0] sm:$0xff]
      %v1372 = vld [vmem:[%s1346 + $0xc8] sm:$0xff]
      %v1373 = vld [vmem:[%s1346 + $0xd0] sm:$0xff]
      %v1374 = vld [vmem:[%s1346 + $0xd8] sm:$0xff]
      %v1375 = vld [vmem:[%s1346 + $0xe0] sm:$0xff]
      %v1376 = vld [vmem:[%s1346 + $0xe8] sm:$0xff]
      %v1377 = vld [vmem:[%s1346 + $0xf0] sm:$0xff]
      %v1378 = vld [vmem:[%s1346 + $0xf8] sm:$0xff]
      %s1379 = scalar_lea.vmem %s1, 32
      %v1380 = vld [vmem:[%s1379] sm:$0xff]
      %v1381 = vld [vmem:[%s1379 + $0x8] sm:$0xf]
      %v1383 = vsel %vm198, %v1347, 0
      %v1386 = vsel %vm198, %v1348, 0
      %v1389 = vsel %vm198, %v1349, 0
      %v1392 = vsel %vm198, %v1350, 0
      %v1395 = vsel %vm198, %v1351, 0
      %v1398 = vsel %vm198, %v1352, 0
      %v1401 = vsel %vm198, %v1353, 0
      %v1404 = vsel %vm198, %v1354, 0
      %v1407 = vsel %vm198, %v1355, 0
      %v1410 = vsel %vm198, %v1356, 0
      %v1413 = vsel %vm198, %v1357, 0
      %v1416 = vsel %vm198, %v1358, 0
      %v1419 = vsel %vm198, %v1359, 0
      %v1422 = vsel %vm198, %v1360, 0
      %v1425 = vsel %vm198, %v1361, 0
      %v1428 = vsel %vm198, %v1362, 0
      %v1431 = vsel %vm198, %v1363, 0
      %v1434 = vsel %vm198, %v1364, 0
      %v1437 = vsel %vm198, %v1365, 0
      %v1440 = vsel %vm198, %v1366, 0
      %v1443 = vsel %vm198, %v1367, 0
      %v1446 = vsel %vm198, %v1368, 0
      %v1449 = vsel %vm198, %v1369, 0
      %v1452 = vsel %vm198, %v1370, 0
      %v1455 = vsel %vm198, %v1371, 0
      %v1458 = vsel %vm198, %v1372, 0
      %v1461 = vsel %vm198, %v1373, 0
      %v1464 = vsel %vm198, %v1374, 0
      %v1467 = vsel %vm198, %v1375, 0
      %v1470 = vsel %vm198, %v1376, 0
      %v1473 = vsel %vm198, %v1377, 0
      %v1476 = vsel %vm198, %v1378, 0
      %v1479 = vsel %vm793, %v1381, 0
      %1481 = vmatprep.subr.mxu0 0.0
      %1482 = vmatpush1.msra.mxu0 %v1380
      %1483 = vmatprep.subr.mxu0 0.0
      %1484 = vmatpush1.msra.mxu0 %v1479
      %1485 = vmatprep.subr.mxu0 0.0
      %1486 = vmatpush1.msra.mxu0 0.0
      %1487 = vmatprep.subr.mxu0 0.0
      %1488 = vmatpush1.msra.mxu0 0.0
      %1489 = vmatprep.subr.mxu0 0.0
      %1490 = vmatpush1.msra.mxu0 0.0
      %1491 = vmatprep.subr.mxu0 0.0
      %1492 = vmatpush1.msra.mxu0 0.0
      %1493 = vmatprep.subr.mxu0 0.0
      %1494 = vmatpush1.msra.mxu0 0.0
      %1495 = vmatprep.subr.mxu0 0.0
      %1496 = vmatpush1.msra.mxu0 0.0
      %1497 = vmatprep.subr.mxu0 0.0
      %1498 = vmatpush1.msra.mxu0 0.0
      %1499 = vmatprep.subr.mxu0 0.0
      %1500 = vmatpush1.msra.mxu0 0.0
      %1501 = vmatprep.subr.mxu0 0.0
      %1502 = vmatpush1.msra.mxu0 0.0
      %1503 = vmatprep.subr.mxu0 0.0
      %1504 = vmatpush1.msra.mxu0 0.0
      %1505 = vmatprep.subr.mxu0 0.0
      %1506 = vmatpush1.msra.mxu0 0.0
      %1507 = vmatprep.subr.mxu0 0.0
      %1508 = vmatpush1.msra.mxu0 0.0
      %1509 = vmatprep.subr.mxu0 0.0
      %1510 = vmatpush1.msra.mxu0 0.0
      %1511 = vmatprep.subr.mxu0 0.0
      %1512 = vmatpush1.msra.mxu0 0.0
      %1513 = vmatprep.subr.mxu0 0.0
      %1514 = vmatpush1.msra.mxu0 0.0
      %1515 = vmatprep.subr.mxu0 0.0
      %1516 = vmatpush1.msra.mxu0 0.0
      %1517 = vmatprep.subr.mxu0 0.0
      %1518 = vmatpush1.msra.mxu0 0.0
      %1519 = vmatprep.subr.mxu0 0.0
      %1520 = vmatpush1.msra.mxu0 0.0
      %1521 = vmatprep.subr.mxu0 0.0
      %1522 = vmatpush1.msra.mxu0 0.0
      %1523 = vmatprep.subr.mxu0 0.0
      %1524 = vmatpush1.msra.mxu0 0.0
      %1525 = vmatprep.subr.mxu0 0.0
      %1526 = vmatpush1.msra.mxu0 0.0
      %1527 = vmatprep.subr.mxu0 0.0
      %1528 = vmatpush1.msra.mxu0 0.0
      %1529 = vmatprep.subr.mxu0 0.0
      %1530 = vmatpush1.msra.mxu0 0.0
      %1531 = vmatprep.subr.mxu0 0.0
      %1532 = vmatpush1.msra.mxu0 0.0
      %1533 = vmatprep.subr.mxu0 0.0
      %1534 = vmatpush1.msra.mxu0 0.0
      %1535 = vmatprep.subr.mxu0 0.0
      %1536 = vmatpush1.msra.mxu0 0.0
      %1537 = vmatprep.subr.mxu0 0.0
      %1538 = vmatpush1.msra.mxu0 0.0
      %1539 = vmatprep.subr.mxu0 0.0
      %1540 = vmatpush1.msra.mxu0 0.0
      %1541 = vmatprep.subr.mxu0 0.0
      %1542 = vmatpush1.msra.mxu0 0.0
      %1543 = vmatprep.subr.mxu0 0.0
      %1544 = vmatpush1.msra.mxu0 0.0
      %1545 = vmatprep.mubr.f32.mxu0 0.0
      %1546 = vmatmul.mubr.f32.gmra.mrb[0].mxu0 %v1383
      %v1547 = vpop.f32.mrb[0].mxu0
      %v1548 = vadd.f32 0.0, %v1547
      %v1549 = vpop.f32.mrb[0].mxu0
      %1550 = vmatprep.mubr.f32.mxu0 0.0
      %1551 = vmatmul.mubr.f32.gmra.mrb[0].mxu0 %v1386
      %v1552 = vpop.f32.mrb[0].mxu0
      %v1553 = vadd.f32 0.0, %v1552
      %v1554 = vpop.f32.mrb[0].mxu0
      %1555 = vmatprep.mubr.f32.mxu0 0.0
      %1556 = vmatmul.mubr.f32.gmra.mrb[0].mxu0 %v1389
      %v1557 = vpop.f32.mrb[0].mxu0
      %v1558 = vadd.f32 0.0, %v1557
      %v1559 = vpop.f32.mrb[0].mxu0
      %1560 = vmatprep.mubr.f32.mxu0 0.0
      %1561 = vmatmul.mubr.f32.gmra.mrb[0].mxu0 %v1392
      %v1562 = vpop.f32.mrb[0].mxu0
      %v1563 = vadd.f32 0.0, %v1562
      %v1564 = vpop.f32.mrb[0].mxu0
      %1565 = vmatprep.mubr.f32.mxu0 0.0
      %1566 = vmatmul.mubr.f32.gmra.mrb[0].mxu0 %v1395
      %v1567 = vpop.f32.mrb[0].mxu0
      %v1568 = vadd.f32 0.0, %v1567
      %v1569 = vpop.f32.mrb[0].mxu0
      %1570 = vmatprep.mubr.f32.mxu0 0.0
      %1571 = vmatmul.mubr.f32.gmra.mrb[0].mxu0 %v1398
      %v1572 = vpop.f32.mrb[0].mxu0
      %v1573 = vadd.f32 0.0, %v1572
      %v1574 = vpop.f32.mrb[0].mxu0
      %1575 = vmatprep.mubr.f32.mxu0 0.0
      %1576 = vmatmul.mubr.f32.gmra.mrb[0].mxu0 %v1401
      %v1577 = vpop.f32.mrb[0].mxu0
      %v1578 = vadd.f32 0.0, %v1577
      %v1579 = vpop.f32.mrb[0].mxu0
      %1580 = vmatprep.mubr.f32.mxu0 0.0
      %1581 = vmatmul.mubr.f32.gmra.mrb[0].mxu0 %v1404
      %v1582 = vpop.f32.mrb[0].mxu0
      %v1583 = vadd.f32 0.0, %v1582
      %v1584 = vpop.f32.mrb[0].mxu0
      %1585 = vmatprep.mubr.f32.mxu0 0.0
      %1586 = vmatmul.mubr.f32.gmra.mrb[0].mxu0 %v1407
      %v1587 = vpop.f32.mrb[0].mxu0
      %v1588 = vadd.f32 0.0, %v1587
      %v1589 = vpop.f32.mrb[0].mxu0
      %1590 = vmatprep.mubr.f32.mxu0 0.0
      %1591 = vmatmul.mubr.f32.gmra.mrb[0].mxu0 %v1410
      %v1592 = vpop.f32.mrb[0].mxu0
      %v1593 = vadd.f32 0.0, %v1592
      %v1594 = vpop.f32.mrb[0].mxu0
      %1595 = vmatprep.mubr.f32.mxu0 0.0
      %1596 = vmatmul.mubr.f32.gmra.mrb[0].mxu0 %v1413
      %v1597 = vpop.f32.mrb[0].mxu0
      %v1598 = vadd.f32 0.0, %v1597
      %v1599 = vpop.f32.mrb[0].mxu0
      %1600 = vmatprep.mubr.f32.mxu0 0.0
      %1601 = vmatmul.mubr.f32.gmra.mrb[0].mxu0 %v1416
      %v1602 = vpop.f32.mrb[0].mxu0
      %v1603 = vadd.f32 0.0, %v1602
      %v1604 = vpop.f32.mrb[0].mxu0
      %1605 = vmatprep.mubr.f32.mxu0 0.0
      %1606 = vmatmul.mubr.f32.gmra.mrb[0].mxu0 %v1419
      %v1607 = vpop.f32.mrb[0].mxu0
      %v1608 = vadd.f32 0.0, %v1607
      %v1609 = vpop.f32.mrb[0].mxu0
      %1610 = vmatprep.mubr.f32.mxu0 0.0
      %1611 = vmatmul.mubr.f32.gmra.mrb[0].mxu0 %v1422
      %v1612 = vpop.f32.mrb[0].mxu0
      %v1613 = vadd.f32 0.0, %v1612
      %v1614 = vpop.f32.mrb[0].mxu0
      %1615 = vmatprep.mubr.f32.mxu0 0.0
      %1616 = vmatmul.mubr.f32.gmra.mrb[0].mxu0 %v1425
      %v1617 = vpop.f32.mrb[0].mxu0
      %v1618 = vadd.f32 0.0, %v1617
      %v1619 = vpop.f32.mrb[0].mxu0
      %1620 = vmatprep.mubr.f32.mxu0 0.0
      %1621 = vmatmul.mubr.f32.gmra.mrb[0].mxu0 %v1428
      %v1622 = vpop.f32.mrb[0].mxu0
      %v1623 = vadd.f32 0.0, %v1622
      %v1624 = vpop.f32.mrb[0].mxu0
      %1625 = vmatprep.mubr.f32.mxu0 0.0
      %1626 = vmatmul.mubr.f32.gmra.mrb[0].mxu0 %v1431
      %v1627 = vpop.f32.mrb[0].mxu0
      %v1628 = vadd.f32 0.0, %v1627
      %v1629 = vpop.f32.mrb[0].mxu0
      %1630 = vmatprep.mubr.f32.mxu0 0.0
      %1631 = vmatmul.mubr.f32.gmra.mrb[0].mxu0 %v1434
      %v1632 = vpop.f32.mrb[0].mxu0
      %v1633 = vadd.f32 0.0, %v1632
      %v1634 = vpop.f32.mrb[0].mxu0
      %1635 = vmatprep.mubr.f32.mxu0 0.0
      %1636 = vmatmul.mubr.f32.gmra.mrb[0].mxu0 %v1437
      %v1637 = vpop.f32.mrb[0].mxu0
      %v1638 = vadd.f32 0.0, %v1637
      %v1639 = vpop.f32.mrb[0].mxu0
      %1640 = vmatprep.mubr.f32.mxu0 0.0
      %1641 = vmatmul.mubr.f32.gmra.mrb[0].mxu0 %v1440
      %v1642 = vpop.f32.mrb[0].mxu0
      %v1643 = vadd.f32 0.0, %v1642
      %v1644 = vpop.f32.mrb[0].mxu0
      %1645 = vmatprep.mubr.f32.mxu0 0.0
      %1646 = vmatmul.mubr.f32.gmra.mrb[0].mxu0 %v1443
      %v1647 = vpop.f32.mrb[0].mxu0
      %v1648 = vadd.f32 0.0, %v1647
      %v1649 = vpop.f32.mrb[0].mxu0
      %1650 = vmatprep.mubr.f32.mxu0 0.0
      %1651 = vmatmul.mubr.f32.gmra.mrb[0].mxu0 %v1446
      %v1652 = vpop.f32.mrb[0].mxu0
      %v1653 = vadd.f32 0.0, %v1652
      %v1654 = vpop.f32.mrb[0].mxu0
      %1655 = vmatprep.mubr.f32.mxu0 0.0
      %1656 = vmatmul.mubr.f32.gmra.mrb[0].mxu0 %v1449
      %v1657 = vpop.f32.mrb[0].mxu0
      %v1658 = vadd.f32 0.0, %v1657
      %v1659 = vpop.f32.mrb[0].mxu0
      %1660 = vmatprep.mubr.f32.mxu0 0.0
      %1661 = vmatmul.mubr.f32.gmra.mrb[0].mxu0 %v1452
      %v1662 = vpop.f32.mrb[0].mxu0
      %v1663 = vadd.f32 0.0, %v1662
      %v1664 = vpop.f32.mrb[0].mxu0
      %1665 = vmatprep.mubr.f32.mxu0 0.0
      %1666 = vmatmul.mubr.f32.gmra.mrb[0].mxu0 %v1455
      %v1667 = vpop.f32.mrb[0].mxu0
      %v1668 = vadd.f32 0.0, %v1667
      %v1669 = vpop.f32.mrb[0].mxu0
      %1670 = vmatprep.mubr.f32.mxu0 0.0
      %1671 = vmatmul.mubr.f32.gmra.mrb[0].mxu0 %v1458
      %v1672 = vpop.f32.mrb[0].mxu0
      %v1673 = vadd.f32 0.0, %v1672
      %v1674 = vpop.f32.mrb[0].mxu0
      %1675 = vmatprep.mubr.f32.mxu0 0.0
      %1676 = vmatmul.mubr.f32.gmra.mrb[0].mxu0 %v1461
      %v1677 = vpop.f32.mrb[0].mxu0
      %v1678 = vadd.f32 0.0, %v1677
      %v1679 = vpop.f32.mrb[0].mxu0
      %1680 = vmatprep.mubr.f32.mxu0 0.0
      %1681 = vmatmul.mubr.f32.gmra.mrb[0].mxu0 %v1464
      %v1682 = vpop.f32.mrb[0].mxu0
      %v1683 = vadd.f32 0.0, %v1682
      %v1684 = vpop.f32.mrb[0].mxu0
      %1685 = vmatprep.mubr.f32.mxu0 0.0
      %1686 = vmatmul.mubr.f32.gmra.mrb[0].mxu0 %v1467
      %v1687 = vpop.f32.mrb[0].mxu0
      %v1688 = vadd.f32 0.0, %v1687
      %v1689 = vpop.f32.mrb[0].mxu0
      %1690 = vmatprep.mubr.f32.mxu0 0.0
      %1691 = vmatmul.mubr.f32.gmra.mrb[0].mxu0 %v1470
      %v1692 = vpop.f32.mrb[0].mxu0
      %v1693 = vadd.f32 0.0, %v1692
      %v1694 = vpop.f32.mrb[0].mxu0
      %1695 = vmatprep.mubr.f32.mxu0 0.0
      %1696 = vmatmul.mubr.f32.gmra.mrb[0].mxu0 %v1473
      %v1697 = vpop.f32.mrb[0].mxu0
      %v1698 = vadd.f32 0.0, %v1697
      %v1699 = vpop.f32.mrb[0].mxu0
      %1700 = vmatprep.mubr.f32.mxu0 0.0
      %1701 = vmatmul.mubr.f32.gmra.mrb[0].mxu0 %v1476
      %v1702 = vpop.f32.mrb[0].mxu0
      %v1703 = vadd.f32 0.0, %v1702
      %v1704 = vpop.f32.mrb[0].mxu0
      %1705 = vdwg.mxu0
      %v1706 = vadd.f32 %v1188, %v1548
      %v1707 = vadd.f32 %v1193, %v1553
      %v1708 = vadd.f32 %v1198, %v1558
      %v1709 = vadd.f32 %v1203, %v1563
      %v1710 = vadd.f32 %v1208, %v1568
      %v1711 = vadd.f32 %v1213, %v1573
      %v1712 = vadd.f32 %v1218, %v1578
      %v1713 = vadd.f32 %v1223, %v1583
      %v1714 = vadd.f32 %v1228, %v1588
      %v1715 = vadd.f32 %v1233, %v1593
      %v1716 = vadd.f32 %v1238, %v1598
      %v1717 = vadd.f32 %v1243, %v1603
      %v1718 = vadd.f32 %v1248, %v1608
      %v1719 = vadd.f32 %v1253, %v1613
      %v1720 = vadd.f32 %v1258, %v1618
      %v1721 = vadd.f32 %v1263, %v1623
      %v1722 = vadd.f32 %v1268, %v1628
      %v1723 = vadd.f32 %v1273, %v1633
      %v1724 = vadd.f32 %v1278, %v1638
      %v1725 = vadd.f32 %v1283, %v1643
      %v1726 = vadd.f32 %v1288, %v1648
      %v1727 = vadd.f32 %v1293, %v1653
      %v1728 = vadd.f32 %v1298, %v1658
      %v1729 = vadd.f32 %v1303, %v1663
      %v1730 = vadd.f32 %v1308, %v1668
      %v1731 = vadd.f32 %v1313, %v1673
      %v1732 = vadd.f32 %v1318, %v1678
      %v1733 = vadd.f32 %v1323, %v1683
      %v1734 = vadd.f32 %v1328, %v1688
      %v1735 = vadd.f32 %v1333, %v1693
      %v1736 = vadd.f32 %v1338, %v1698
      %v1737 = vadd.f32 %v1343, %v1703
      %v1738 = vld [vmem:[%s3] sm:$0x1]
      %v1740 = vlaneseq
      %v1741 = vshrl.u32 %v1740, 7
      %v1742 = vsub.s32 0, %v1741
      %v1743 = vrot.slane %v1738, %v1742
      %v1745 = vadd.f32 %v1706, %v1743
      %v1746 = vadd.f32 %v1707, %v1743
      %v1747 = vadd.f32 %v1708, %v1743
      %v1748 = vadd.f32 %v1709, %v1743
      %v1749 = vadd.f32 %v1710, %v1743
      %v1750 = vadd.f32 %v1711, %v1743
      %v1751 = vadd.f32 %v1712, %v1743
      %v1752 = vadd.f32 %v1713, %v1743
      %v1753 = vadd.f32 %v1714, %v1743
      %v1754 = vadd.f32 %v1715, %v1743
      %v1755 = vadd.f32 %v1716, %v1743
      %v1756 = vadd.f32 %v1717, %v1743
      %v1757 = vadd.f32 %v1718, %v1743
      %v1758 = vadd.f32 %v1719, %v1743
      %v1759 = vadd.f32 %v1720, %v1743
      %v1760 = vadd.f32 %v1721, %v1743
      %v1761 = vadd.f32 %v1722, %v1743
      %v1762 = vadd.f32 %v1723, %v1743
      %v1763 = vadd.f32 %v1724, %v1743
      %v1764 = vadd.f32 %v1725, %v1743
      %v1765 = vadd.f32 %v1726, %v1743
      %v1766 = vadd.f32 %v1727, %v1743
      %v1767 = vadd.f32 %v1728, %v1743
      %v1768 = vadd.f32 %v1729, %v1743
      %v1769 = vadd.f32 %v1730, %v1743
      %v1770 = vadd.f32 %v1731, %v1743
      %v1771 = vadd.f32 %v1732, %v1743
      %v1772 = vadd.f32 %v1733, %v1743
      %v1773 = vadd.f32 %v1734, %v1743
      %v1774 = vadd.f32 %v1735, %v1743
      %v1775 = vadd.f32 %v1736, %v1743
      %v1776 = vadd.f32 %v1737, %v1743
      %v1777 = vmax.f32 %v1745, 0.0
      %v1778 = vmax.f32 %v1746, 0.0
      %v1779 = vmax.f32 %v1747, 0.0
      %v1780 = vmax.f32 %v1748, 0.0
      %v1781 = vmax.f32 %v1749, 0.0
      %v1782 = vmax.f32 %v1750, 0.0
      %v1783 = vmax.f32 %v1751, 0.0
      %v1784 = vmax.f32 %v1752, 0.0
      %v1785 = vmax.f32 %v1753, 0.0
      %v1786 = vmax.f32 %v1754, 0.0
      %v1787 = vmax.f32 %v1755, 0.0
      %v1788 = vmax.f32 %v1756, 0.0
      %v1789 = vmax.f32 %v1757, 0.0
      %v1790 = vmax.f32 %v1758, 0.0
      %v1791 = vmax.f32 %v1759, 0.0
      %v1792 = vmax.f32 %v1760, 0.0
      %v1793 = vmax.f32 %v1761, 0.0
      %v1794 = vmax.f32 %v1762, 0.0
      %v1795 = vmax.f32 %v1763, 0.0
      %v1796 = vmax.f32 %v1764, 0.0
      %v1797 = vmax.f32 %v1765, 0.0
      %v1798 = vmax.f32 %v1766, 0.0
      %v1799 = vmax.f32 %v1767, 0.0
      %v1800 = vmax.f32 %v1768, 0.0
      %v1801 = vmax.f32 %v1769, 0.0
      %v1802 = vmax.f32 %v1770, 0.0
      %v1803 = vmax.f32 %v1771, 0.0
      %v1804 = vmax.f32 %v1772, 0.0
      %v1805 = vmax.f32 %v1773, 0.0
      %v1806 = vmax.f32 %v1774, 0.0
      %v1807 = vmax.f32 %v1775, 0.0
      %v1808 = vmax.f32 %v1776, 0.0
      %1809 = vst.msk [vmem:[%s204 + $0x1] sm:$0xff] %vm303, %v1777
      %1810 = vst.msk [vmem:[%s204 + $0x9] sm:$0x7f] %vm305, %v1778
      %1811 = vst.msk [vmem:[%s204 + $0x11] sm:$0xff] %vm303, %v1779
      %1812 = vst.msk [vmem:[%s204 + $0x19] sm:$0x7f] %vm305, %v1780
      %1813 = vst.msk [vmem:[%s204 + $0x21] sm:$0xff] %vm303, %v1781
      %1814 = vst.msk [vmem:[%s204 + $0x29] sm:$0x7f] %vm305, %v1782
      %1815 = vst.msk [vmem:[%s204 + $0x31] sm:$0xff] %vm303, %v1783
      %1816 = vst.msk [vmem:[%s204 + $0x39] sm:$0x7f] %vm305, %v1784
      %1817 = vst.msk [vmem:[%s204 + $0x41] sm:$0xff] %vm303, %v1785
      %1818 = vst.msk [vmem:[%s204 + $0x49] sm:$0x7f] %vm305, %v1786
      %1819 = vst.msk [vmem:[%s204 + $0x51] sm:$0xff] %vm303, %v1787
      %1820 = vst.msk [vmem:[%s204 + $0x59] sm:$0x7f] %vm305, %v1788
      %1821 = vst.msk [vmem:[%s204 + $0x61] sm:$0xff] %vm303, %v1789
      %1822 = vst.msk [vmem:[%s204 + $0x69] sm:$0x7f] %vm305, %v1790
      %1823 = vst.msk [vmem:[%s204 + $0x71] sm:$0xff] %vm303, %v1791
      %1824 = vst.msk [vmem:[%s204 + $0x79] sm:$0x7f] %vm305, %v1792
      %1825 = vst.msk [vmem:[%s204 + $0x81] sm:$0xff] %vm303, %v1793
      %1826 = vst.msk [vmem:[%s204 + $0x89] sm:$0x7f] %vm305, %v1794
      %1827 = vst.msk [vmem:[%s204 + $0x91] sm:$0xff] %vm303, %v1795
      %1828 = vst.msk [vmem:[%s204 + $0x99] sm:$0x7f] %vm305, %v1796
      %1829 = vst.msk [vmem:[%s204 + $0xa1] sm:$0xff] %vm303, %v1797
      %1830 = vst.msk [vmem:[%s204 + $0xa9] sm:$0x7f] %vm305, %v1798
      %1831 = vst.msk [vmem:[%s204 + $0xb1] sm:$0xff] %vm303, %v1799
      %1832 = vst.msk [vmem:[%s204 + $0xb9] sm:$0x7f] %vm305, %v1800
      %1833 = vst.msk [vmem:[%s204 + $0xc1] sm:$0xff] %vm303, %v1801
      %1834 = vst.msk [vmem:[%s204 + $0xc9] sm:$0x7f] %vm305, %v1802
      %1835 = vst.msk [vmem:[%s204 + $0xd1] sm:$0xff] %vm303, %v1803
      %1836 = vst.msk [vmem:[%s204 + $0xd9] sm:$0x7f] %vm305, %v1804
      %1837 = vst.msk [vmem:[%s204 + $0xe1] sm:$0xff] %vm303, %v1805
      %1838 = vst.msk [vmem:[%s204 + $0xe9] sm:$0x7f] %vm305, %v1806
      %1839 = vst.msk [vmem:[%s204 + $0xf1] sm:$0xff] %vm303, %v1807
      %1840 = vst.msk [vmem:[%s204 + $0xf9] sm:$0x7f] %vm305, %v1808
      %1873 = vrot.lane.b32.xlu0 %v1777, 4
      %v1874 = vpop.permute.xlu0 %1873
      %1875 = vrot.lane.b32.xlu0 %v1778, 4
      %v1876 = vpop.permute.xlu0 %1875
      %1877 = vrot.lane.b32.xlu0 %v1779, 4
      %v1878 = vpop.permute.xlu0 %1877
      %1879 = vrot.lane.b32.xlu0 %v1780, 4
      %v1880 = vpop.permute.xlu0 %1879
      %1881 = vrot.lane.b32.xlu0 %v1781, 4
      %v1882 = vpop.permute.xlu0 %1881
      %1883 = vrot.lane.b32.xlu0 %v1782, 4
      %v1884 = vpop.permute.xlu0 %1883
      %1885 = vrot.lane.b32.xlu0 %v1783, 4
      %v1886 = vpop.permute.xlu0 %1885
      %1887 = vrot.lane.b32.xlu0 %v1784, 4
      %v1888 = vpop.permute.xlu0 %1887
      %1889 = vrot.lane.b32.xlu0 %v1785, 4
      %v1890 = vpop.permute.xlu0 %1889
      %1891 = vrot.lane.b32.xlu0 %v1786, 4
      %v1892 = vpop.permute.xlu0 %1891
      %1893 = vrot.lane.b32.xlu0 %v1787, 4
      %v1894 = vpop.permute.xlu0 %1893
      %1895 = vrot.lane.b32.xlu0 %v1788, 4
      %v1896 = vpop.permute.xlu0 %1895
      %1897 = vrot.lane.b32.xlu0 %v1789, 4
      %v1898 = vpop.permute.xlu0 %1897
      %1899 = vrot.lane.b32.xlu0 %v1790, 4
      %v1900 = vpop.permute.xlu0 %1899
      %1901 = vrot.lane.b32.xlu0 %v1791, 4
      %v1902 = vpop.permute.xlu0 %1901
      %1903 = vrot.lane.b32.xlu0 %v1792, 4
      %v1904 = vpop.permute.xlu0 %1903
      %1905 = vrot.lane.b32.xlu0 %v1793, 4
      %v1906 = vpop.permute.xlu0 %1905
      %1907 = vrot.lane.b32.xlu0 %v1794, 4
      %v1908 = vpop.permute.xlu0 %1907
      %1909 = vrot.lane.b32.xlu0 %v1795, 4
      %v1910 = vpop.permute.xlu0 %1909
      %1911 = vrot.lane.b32.xlu0 %v1796, 4
      %v1912 = vpop.permute.xlu0 %1911
      %1913 = vrot.lane.b32.xlu0 %v1797, 4
      %v1914 = vpop.permute.xlu0 %1913
      %1915 = vrot.lane.b32.xlu0 %v1798, 4
      %v1916 = vpop.permute.xlu0 %1915
      %1917 = vrot.lane.b32.xlu0 %v1799, 4
      %v1918 = vpop.permute.xlu0 %1917
      %1919 = vrot.lane.b32.xlu0 %v1800, 4
      %v1920 = vpop.permute.xlu0 %1919
      %1921 = vrot.lane.b32.xlu0 %v1801, 4
      %v1922 = vpop.permute.xlu0 %1921
      %1923 = vrot.lane.b32.xlu0 %v1802, 4
      %v1924 = vpop.permute.xlu0 %1923
      %1925 = vrot.lane.b32.xlu0 %v1803, 4
      %v1926 = vpop.permute.xlu0 %1925
      %1927 = vrot.lane.b32.xlu0 %v1804, 4
      %v1928 = vpop.permute.xlu0 %1927
      %1929 = vrot.lane.b32.xlu0 %v1805, 4
      %v1930 = vpop.permute.xlu0 %1929
      %1931 = vrot.lane.b32.xlu0 %v1806, 4
      %v1932 = vpop.permute.xlu0 %1931
      %1933 = vrot.lane.b32.xlu0 %v1807, 4
      %v1934 = vpop.permute.xlu0 %1933
      %1935 = vrot.lane.b32.xlu0 %v1808, 4
      %v1936 = vpop.permute.xlu0 %1935
      %1969 = vst.msk [vmem:[%s204] sm:$0xff] %vm465, %v1874
      %1970 = vst.msk [vmem:[%s204 + $0x8] sm:$0xff] %vm465, %v1876
      %1971 = vst.msk [vmem:[%s204 + $0x10] sm:$0xff] %vm465, %v1878
      %1972 = vst.msk [vmem:[%s204 + $0x18] sm:$0xff] %vm465, %v1880
      %1973 = vst.msk [vmem:[%s204 + $0x20] sm:$0xff] %vm465, %v1882
      %1974 = vst.msk [vmem:[%s204 + $0x28] sm:$0xff] %vm465, %v1884
      %1975 = vst.msk [vmem:[%s204 + $0x30] sm:$0xff] %vm465, %v1886
      %1976 = vst.msk [vmem:[%s204 + $0x38] sm:$0xff] %vm465, %v1888
      %1977 = vst.msk [vmem:[%s204 + $0x40] sm:$0xff] %vm465, %v1890
      %1978 = vst.msk [vmem:[%s204 + $0x48] sm:$0xff] %vm465, %v1892
      %1979 = vst.msk [vmem:[%s204 + $0x50] sm:$0xff] %vm465, %v1894
      %1980 = vst.msk [vmem:[%s204 + $0x58] sm:$0xff] %vm465, %v1896
      %1981 = vst.msk [vmem:[%s204 + $0x60] sm:$0xff] %vm465, %v1898
      %1982 = vst.msk [vmem:[%s204 + $0x68] sm:$0xff] %vm465, %v1900
      %1983 = vst.msk [vmem:[%s204 + $0x70] sm:$0xff] %vm465, %v1902
      %1984 = vst.msk [vmem:[%s204 + $0x78] sm:$0xff] %vm465, %v1904
      %1985 = vst.msk [vmem:[%s204 + $0x80] sm:$0xff] %vm465, %v1906
      %1986 = vst.msk [vmem:[%s204 + $0x88] sm:$0xff] %vm465, %v1908
      %1987 = vst.msk [vmem:[%s204 + $0x90] sm:$0xff] %vm465, %v1910
      %1988 = vst.msk [vmem:[%s204 + $0x98] sm:$0xff] %vm465, %v1912
      %1989 = vst.msk [vmem:[%s204 + $0xa0] sm:$0xff] %vm465, %v1914
      %1990 = vst.msk [vmem:[%s204 + $0xa8] sm:$0xff] %vm465, %v1916
      %1991 = vst.msk [vmem:[%s204 + $0xb0] sm:$0xff] %vm465, %v1918
      %1992 = vst.msk [vmem:[%s204 + $0xb8] sm:$0xff] %vm465, %v1920
      %1993 = vst.msk [vmem:[%s204 + $0xc0] sm:$0xff] %vm465, %v1922
      %1994 = vst.msk [vmem:[%s204 + $0xc8] sm:$0xff] %vm465, %v1924
      %1995 = vst.msk [vmem:[%s204 + $0xd0] sm:$0xff] %vm465, %v1926
      %1996 = vst.msk [vmem:[%s204 + $0xd8] sm:$0xff] %vm465, %v1928
      %1997 = vst.msk [vmem:[%s204 + $0xe0] sm:$0xff] %vm465, %v1930
      %1998 = vst.msk [vmem:[%s204 + $0xe8] sm:$0xff] %vm465, %v1932
      %1999 = vst.msk [vmem:[%s204 + $0xf0] sm:$0xff] %vm465, %v1934
      %2000 = vst.msk [vmem:[%s204 + $0xf8] sm:$0xff] %vm465, %v1936
      %2001 = vrot.lane.b32.xlu0 %v1777, 8
      %v2002 = vpop.permute.xlu0 %2001
      %2003 = vrot.lane.b32.xlu0 %v1778, 8
      %v2004 = vpop.permute.xlu0 %2003
      %2005 = vrot.lane.b32.xlu0 %v1779, 8
      %v2006 = vpop.permute.xlu0 %2005
      %2007 = vrot.lane.b32.xlu0 %v1780, 8
      %v2008 = vpop.permute.xlu0 %2007
      %2009 = vrot.lane.b32.xlu0 %v1781, 8
      %v2010 = vpop.permute.xlu0 %2009
      %2011 = vrot.lane.b32.xlu0 %v1782, 8
      %v2012 = vpop.permute.xlu0 %2011
      %2013 = vrot.lane.b32.xlu0 %v1783, 8
      %v2014 = vpop.permute.xlu0 %2013
      %2015 = vrot.lane.b32.xlu0 %v1784, 8
      %v2016 = vpop.permute.xlu0 %2015
      %2017 = vrot.lane.b32.xlu0 %v1785, 8
      %v2018 = vpop.permute.xlu0 %2017
      %2019 = vrot.lane.b32.xlu0 %v1786, 8
      %v2020 = vpop.permute.xlu0 %2019
      %2021 = vrot.lane.b32.xlu0 %v1787, 8
      %v2022 = vpop.permute.xlu0 %2021
      %2023 = vrot.lane.b32.xlu0 %v1788, 8
      %v2024 = vpop.permute.xlu0 %2023
      %2025 = vrot.lane.b32.xlu0 %v1789, 8
      %v2026 = vpop.permute.xlu0 %2025
      %2027 = vrot.lane.b32.xlu0 %v1790, 8
      %v2028 = vpop.permute.xlu0 %2027
      %2029 = vrot.lane.b32.xlu0 %v1791, 8
      %v2030 = vpop.permute.xlu0 %2029
      %2031 = vrot.lane.b32.xlu0 %v1792, 8
      %v2032 = vpop.permute.xlu0 %2031
      %2033 = vrot.lane.b32.xlu0 %v1793, 8
      %v2034 = vpop.permute.xlu0 %2033
      %2035 = vrot.lane.b32.xlu0 %v1794, 8
      %v2036 = vpop.permute.xlu0 %2035
      %2037 = vrot.lane.b32.xlu0 %v1795, 8
      %v2038 = vpop.permute.xlu0 %2037
      %2039 = vrot.lane.b32.xlu0 %v1796, 8
      %v2040 = vpop.permute.xlu0 %2039
      %2041 = vrot.lane.b32.xlu0 %v1797, 8
      %v2042 = vpop.permute.xlu0 %2041
      %2043 = vrot.lane.b32.xlu0 %v1798, 8
      %v2044 = vpop.permute.xlu0 %2043
      %2045 = vrot.lane.b32.xlu0 %v1799, 8
      %v2046 = vpop.permute.xlu0 %2045
      %2047 = vrot.lane.b32.xlu0 %v1800, 8
      %v2048 = vpop.permute.xlu0 %2047
      %2049 = vrot.lane.b32.xlu0 %v1801, 8
      %v2050 = vpop.permute.xlu0 %2049
      %2051 = vrot.lane.b32.xlu0 %v1802, 8
      %v2052 = vpop.permute.xlu0 %2051
      %2053 = vrot.lane.b32.xlu0 %v1803, 8
      %v2054 = vpop.permute.xlu0 %2053
      %2055 = vrot.lane.b32.xlu0 %v1804, 8
      %v2056 = vpop.permute.xlu0 %2055
      %2057 = vrot.lane.b32.xlu0 %v1805, 8
      %v2058 = vpop.permute.xlu0 %2057
      %2059 = vrot.lane.b32.xlu0 %v1806, 8
      %v2060 = vpop.permute.xlu0 %2059
      %2061 = vrot.lane.b32.xlu0 %v1807, 8
      %v2062 = vpop.permute.xlu0 %2061
      %2063 = vrot.lane.b32.xlu0 %v1808, 8
      %v2064 = vpop.permute.xlu0 %2063
      %2097 = vst.msk [vmem:[%s204 - $0x1] sm:$0xfe] %vm594, %v2002
      %2098 = vst.msk [vmem:[%s204 + $0x7] sm:$0xff] %vm596, %v2004
      %2099 = vst.msk [vmem:[%s204 + $0xf] sm:$0xfe] %vm594, %v2006
      %2100 = vst.msk [vmem:[%s204 + $0x17] sm:$0xff] %vm596, %v2008
      %2101 = vst.msk [vmem:[%s204 + $0x1f] sm:$0xfe] %vm594, %v2010
      %2102 = vst.msk [vmem:[%s204 + $0x27] sm:$0xff] %vm596, %v2012
      %2103 = vst.msk [vmem:[%s204 + $0x2f] sm:$0xfe] %vm594, %v2014
      %2104 = vst.msk [vmem:[%s204 + $0x37] sm:$0xff] %vm596, %v2016
      %2105 = vst.msk [vmem:[%s204 + $0x3f] sm:$0xfe] %vm594, %v2018
      %2106 = vst.msk [vmem:[%s204 + $0x47] sm:$0xff] %vm596, %v2020
      %2107 = vst.msk [vmem:[%s204 + $0x4f] sm:$0xfe] %vm594, %v2022
      %2108 = vst.msk [vmem:[%s204 + $0x57] sm:$0xff] %vm596, %v2024
      %2109 = vst.msk [vmem:[%s204 + $0x5f] sm:$0xfe] %vm594, %v2026
      %2110 = vst.msk [vmem:[%s204 + $0x67] sm:$0xff] %vm596, %v2028
      %2111 = vst.msk [vmem:[%s204 + $0x6f] sm:$0xfe] %vm594, %v2030
      %2112 = vst.msk [vmem:[%s204 + $0x77] sm:$0xff] %vm596, %v2032
      %2113 = vst.msk [vmem:[%s204 + $0x7f] sm:$0xfe] %vm594, %v2034
      %2114 = vst.msk [vmem:[%s204 + $0x87] sm:$0xff] %vm596, %v2036
      %2115 = vst.msk [vmem:[%s204 + $0x8f] sm:$0xfe] %vm594, %v2038
      %2116 = vst.msk [vmem:[%s204 + $0x97] sm:$0xff] %vm596, %v2040
      %2117 = vst.msk [vmem:[%s204 + $0x9f] sm:$0xfe] %vm594, %v2042
      %2118 = vst.msk [vmem:[%s204 + $0xa7] sm:$0xff] %vm596, %v2044
      %2119 = vst.msk [vmem:[%s204 + $0xaf] sm:$0xfe] %vm594, %v2046
      %2120 = vst.msk [vmem:[%s204 + $0xb7] sm:$0xff] %vm596, %v2048
      %2121 = vst.msk [vmem:[%s204 + $0xbf] sm:$0xfe] %vm594, %v2050
      %2122 = vst.msk [vmem:[%s204 + $0xc7] sm:$0xff] %vm596, %v2052
      %2123 = vst.msk [vmem:[%s204 + $0xcf] sm:$0xfe] %vm594, %v2054
      %2124 = vst.msk [vmem:[%s204 + $0xd7] sm:$0xff] %vm596, %v2056
      %2125 = vst.msk [vmem:[%s204 + $0xdf] sm:$0xfe] %vm594, %v2058
      %2126 = vst.msk [vmem:[%s204 + $0xe7] sm:$0xff] %vm596, %v2060
      %2127 = vst.msk [vmem:[%s204 + $0xef] sm:$0xfe] %vm594, %v2062
      %2128 = vst.msk [vmem:[%s204 + $0xf7] sm:$0xff] %vm596, %v2064
      %v2129 = vld [vmem:[#allocation2] sm:$0xff]
      %v2130 = vld [vmem:[#allocation2 + $0x8] sm:$0xff]
      %v2131 = vld [vmem:[#allocation2 + $0x10] sm:$0xff]
      %v2132 = vld [vmem:[#allocation2 + $0x18] sm:$0xff]
      %v2133 = vld [vmem:[#allocation2 + $0x20] sm:$0xff]
      %v2134 = vld [vmem:[#allocation2 + $0x28] sm:$0xff]
      %v2135 = vld [vmem:[#allocation2 + $0x30] sm:$0xff]
      %v2136 = vld [vmem:[#allocation2 + $0x38] sm:$0xff]
      %v2137 = vld [vmem:[#allocation2 + $0x40] sm:$0xff]
      %v2138 = vld [vmem:[#allocation2 + $0x48] sm:$0xff]
      %v2139 = vld [vmem:[#allocation2 + $0x50] sm:$0xff]
      %v2140 = vld [vmem:[#allocation2 + $0x58] sm:$0xff]
      %v2141 = vld [vmem:[#allocation2 + $0x60] sm:$0xff]
      %v2142 = vld [vmem:[#allocation2 + $0x68] sm:$0xff]
      %v2143 = vld [vmem:[#allocation2 + $0x70] sm:$0xff]
      %v2144 = vld [vmem:[#allocation2 + $0x78] sm:$0xff]
      %v2145 = vld [vmem:[#allocation2 + $0x80] sm:$0xff]
      %v2146 = vld [vmem:[#allocation2 + $0x88] sm:$0xff]
      %v2147 = vld [vmem:[#allocation2 + $0x90] sm:$0xff]
      %v2148 = vld [vmem:[#allocation2 + $0x98] sm:$0xff]
      %v2149 = vld [vmem:[#allocation2 + $0xa0] sm:$0xff]
      %v2150 = vld [vmem:[#allocation2 + $0xa8] sm:$0xff]
      %v2151 = vld [vmem:[#allocation2 + $0xb0] sm:$0xff]
      %v2152 = vld [vmem:[#allocation2 + $0xb8] sm:$0xff]
      %v2153 = vld [vmem:[#allocation2 + $0xc0] sm:$0xff]
      %v2154 = vld [vmem:[#allocation2 + $0xc8] sm:$0xff]
      %v2155 = vld [vmem:[#allocation2 + $0xd0] sm:$0xff]
      %v2156 = vld [vmem:[#allocation2 + $0xd8] sm:$0xff]
      %v2157 = vld [vmem:[#allocation2 + $0xe0] sm:$0xff]
      %v2158 = vld [vmem:[#allocation2 + $0xe8] sm:$0xff]
      %v2159 = vld [vmem:[#allocation2 + $0xf0] sm:$0xff]
      %v2160 = vld [vmem:[#allocation2 + $0xf8] sm:$0xff]
      %v2161 = vld [vmem:[%s2] sm:$0xff]
      %v2162 = vld [vmem:[%s2 + $0x8] sm:$0xf]
      %v2163 = vld [vmem:[%s204] sm:$0xff]
      %v2164 = vld [vmem:[%s204 + $0x8] sm:$0xff]
      %v2165 = vld [vmem:[%s204 + $0x10] sm:$0xff]
      %v2166 = vld [vmem:[%s204 + $0x18] sm:$0xff]
      %v2167 = vld [vmem:[%s204 + $0x20] sm:$0xff]
      %v2168 = vld [vmem:[%s204 + $0x28] sm:$0xff]
      %v2169 = vld [vmem:[%s204 + $0x30] sm:$0xff]
      %v2170 = vld [vmem:[%s204 + $0x38] sm:$0xff]
      %v2171 = vld [vmem:[%s204 + $0x40] sm:$0xff]
      %v2172 = vld [vmem:[%s204 + $0x48] sm:$0xff]
      %v2173 = vld [vmem:[%s204 + $0x50] sm:$0xff]
      %v2174 = vld [vmem:[%s204 + $0x58] sm:$0xff]
      %v2175 = vld [vmem:[%s204 + $0x60] sm:$0xff]
      %v2176 = vld [vmem:[%s204 + $0x68] sm:$0xff]
      %v2177 = vld [vmem:[%s204 + $0x70] sm:$0xff]
      %v2178 = vld [vmem:[%s204 + $0x78] sm:$0xff]
      %v2179 = vld [vmem:[%s204 + $0x80] sm:$0xff]
      %v2180 = vld [vmem:[%s204 + $0x88] sm:$0xff]
      %v2181 = vld [vmem:[%s204 + $0x90] sm:$0xff]
      %v2182 = vld [vmem:[%s204 + $0x98] sm:$0xff]
      %v2183 = vld [vmem:[%s204 + $0xa0] sm:$0xff]
      %v2184 = vld [vmem:[%s204 + $0xa8] sm:$0xff]
      %v2185 = vld [vmem:[%s204 + $0xb0] sm:$0xff]
      %v2186 = vld [vmem:[%s204 + $0xb8] sm:$0xff]
      %v2187 = vld [vmem:[%s204 + $0xc0] sm:$0xff]
      %v2188 = vld [vmem:[%s204 + $0xc8] sm:$0xff]
      %v2189 = vld [vmem:[%s204 + $0xd0] sm:$0xff]
      %v2190 = vld [vmem:[%s204 + $0xd8] sm:$0xff]
      %v2191 = vld [vmem:[%s204 + $0xe0] sm:$0xff]
      %v2192 = vld [vmem:[%s204 + $0xe8] sm:$0xff]
      %v2193 = vld [vmem:[%s204 + $0xf0] sm:$0xff]
      %v2194 = vld [vmem:[%s204 + $0xf8] sm:$0xff]
      %s2195 = scalar_lea.vmem %s2, 16
      %v2196 = vld [vmem:[%s2195] sm:$0xff]
      %v2197 = vld [vmem:[%s2195 + $0x8] sm:$0xf]
      %v2199 = vsel %vm198, %v2163, 0
      %v2202 = vsel %vm198, %v2164, 0
      %v2205 = vsel %vm198, %v2165, 0
      %v2208 = vsel %vm198, %v2166, 0
      %v2211 = vsel %vm198, %v2167, 0
      %v2214 = vsel %vm198, %v2168, 0
      %v2217 = vsel %vm198, %v2169, 0
      %v2220 = vsel %vm198, %v2170, 0
      %v2223 = vsel %vm198, %v2171, 0
      %v2226 = vsel %vm198, %v2172, 0
      %v2229 = vsel %vm198, %v2173, 0
      %v2232 = vsel %vm198, %v2174, 0
      %v2235 = vsel %vm198, %v2175, 0
      %v2238 = vsel %vm198, %v2176, 0
      %v2241 = vsel %vm198, %v2177, 0
      %v2244 = vsel %vm198, %v2178, 0
      %v2247 = vsel %vm198, %v2179, 0
      %v2250 = vsel %vm198, %v2180, 0
      %v2253 = vsel %vm198, %v2181, 0
      %v2256 = vsel %vm198, %v2182, 0
      %v2259 = vsel %vm198, %v2183, 0
      %v2262 = vsel %vm198, %v2184, 0
      %v2265 = vsel %vm198, %v2185, 0
      %v2268 = vsel %vm198, %v2186, 0
      %v2271 = vsel %vm198, %v2187, 0
      %v2274 = vsel %vm198, %v2188, 0
      %v2277 = vsel %vm198, %v2189, 0
      %v2280 = vsel %vm198, %v2190, 0
      %v2283 = vsel %vm198, %v2191, 0
      %v2286 = vsel %vm198, %v2192, 0
      %v2289 = vsel %vm198, %v2193, 0
      %v2292 = vsel %vm198, %v2194, 0
      %v2295 = vsel %vm793, %v2197, 0
      %2297 = vmatprep.subr.mxu0 0.0
      %2298 = vmatpush1.msra.mxu0 %v2196
      %2299 = vmatprep.subr.mxu0 0.0
      %2300 = vmatpush1.msra.mxu0 %v2295
      %2301 = vmatprep.subr.mxu0 0.0
      %2302 = vmatpush1.msra.mxu0 0.0
      %2303 = vmatprep.subr.mxu0 0.0
      %2304 = vmatpush1.msra.mxu0 0.0
      %2305 = vmatprep.subr.mxu0 0.0
      %2306 = vmatpush1.msra.mxu0 0.0
      %2307 = vmatprep.subr.mxu0 0.0
      %2308 = vmatpush1.msra.mxu0 0.0
      %2309 = vmatprep.subr.mxu0 0.0
      %2310 = vmatpush1.msra.mxu0 0.0
      %2311 = vmatprep.subr.mxu0 0.0
      %2312 = vmatpush1.msra.mxu0 0.0
      %2313 = vmatprep.subr.mxu0 0.0
      %2314 = vmatpush1.msra.mxu0 0.0
      %2315 = vmatprep.subr.mxu0 0.0
      %2316 = vmatpush1.msra.mxu0 0.0
      %2317 = vmatprep.subr.mxu0 0.0
      %2318 = vmatpush1.msra.mxu0 0.0
      %2319 = vmatprep.subr.mxu0 0.0
      %2320 = vmatpush1.msra.mxu0 0.0
      %2321 = vmatprep.subr.mxu0 0.0
      %2322 = vmatpush1.msra.mxu0 0.0
      %2323 = vmatprep.subr.mxu0 0.0
      %2324 = vmatpush1.msra.mxu0 0.0
      %2325 = vmatprep.subr.mxu0 0.0
      %2326 = vmatpush1.msra.mxu0 0.0
      %2327 = vmatprep.subr.mxu0 0.0
      %2328 = vmatpush1.msra.mxu0 0.0
      %2329 = vmatprep.subr.mxu0 0.0
      %2330 = vmatpush1.msra.mxu0 0.0
      %2331 = vmatprep.subr.mxu0 0.0
      %2332 = vmatpush1.msra.mxu0 0.0
      %2333 = vmatprep.subr.mxu0 0.0
      %2334 = vmatpush1.msra.mxu0 0.0
      %2335 = vmatprep.subr.mxu0 0.0
      %2336 = vmatpush1.msra.mxu0 0.0
      %2337 = vmatprep.subr.mxu0 0.0
      %2338 = vmatpush1.msra.mxu0 0.0
      %2339 = vmatprep.subr.mxu0 0.0
      %2340 = vmatpush1.msra.mxu0 0.0
      %2341 = vmatprep.subr.mxu0 0.0
      %2342 = vmatpush1.msra.mxu0 0.0
      %2343 = vmatprep.subr.mxu0 0.0
      %2344 = vmatpush1.msra.mxu0 0.0
      %2345 = vmatprep.subr.mxu0 0.0
      %2346 = vmatpush1.msra.mxu0 0.0
      %2347 = vmatprep.subr.mxu0 0.0
      %2348 = vmatpush1.msra.mxu0 0.0
      %2349 = vmatprep.subr.mxu0 0.0
      %2350 = vmatpush1.msra.mxu0 0.0
      %2351 = vmatprep.subr.mxu0 0.0
      %2352 = vmatpush1.msra.mxu0 0.0
      %2353 = vmatprep.subr.mxu0 0.0
      %2354 = vmatpush1.msra.mxu0 0.0
      %2355 = vmatprep.subr.mxu0 0.0
      %2356 = vmatpush1.msra.mxu0 0.0
      %2357 = vmatprep.subr.mxu0 0.0
      %2358 = vmatpush1.msra.mxu0 0.0
      %2359 = vmatprep.subr.mxu0 0.0
      %2360 = vmatpush1.msra.mxu0 0.0
      %2361 = vmatprep.mubr.f32.mxu0 0.0
      %2362 = vmatmul.mubr.f32.gmra.mrb[0].mxu0 %v2199
      %v2363 = vpop.f32.mrb[0].mxu0
      %v2364 = vadd.f32 0.0, %v2363
      %v2365 = vpop.f32.mrb[0].mxu0
      %2366 = vmatprep.mubr.f32.mxu0 0.0
      %2367 = vmatmul.mubr.f32.gmra.mrb[0].mxu0 %v2202
      %v2368 = vpop.f32.mrb[0].mxu0
      %v2369 = vadd.f32 0.0, %v2368
      %v2370 = vpop.f32.mrb[0].mxu0
      %2371 = vmatprep.mubr.f32.mxu0 0.0
      %2372 = vmatmul.mubr.f32.gmra.mrb[0].mxu0 %v2205
      %v2373 = vpop.f32.mrb[0].mxu0
      %v2374 = vadd.f32 0.0, %v2373
      %v2375 = vpop.f32.mrb[0].mxu0
      %2376 = vmatprep.mubr.f32.mxu0 0.0
      %2377 = vmatmul.mubr.f32.gmra.mrb[0].mxu0 %v2208
      %v2378 = vpop.f32.mrb[0].mxu0
      %v2379 = vadd.f32 0.0, %v2378
      %v2380 = vpop.f32.mrb[0].mxu0
      %2381 = vmatprep.mubr.f32.mxu0 0.0
      %2382 = vmatmul.mubr.f32.gmra.mrb[0].mxu0 %v2211
      %v2383 = vpop.f32.mrb[0].mxu0
      %v2384 = vadd.f32 0.0, %v2383
      %v2385 = vpop.f32.mrb[0].mxu0
      %2386 = vmatprep.mubr.f32.mxu0 0.0
      %2387 = vmatmul.mubr.f32.gmra.mrb[0].mxu0 %v2214
      %v2388 = vpop.f32.mrb[0].mxu0
      %v2389 = vadd.f32 0.0, %v2388
      %v2390 = vpop.f32.mrb[0].mxu0
      %2391 = vmatprep.mubr.f32.mxu0 0.0
      %2392 = vmatmul.mubr.f32.gmra.mrb[0].mxu0 %v2217
      %v2393 = vpop.f32.mrb[0].mxu0
      %v2394 = vadd.f32 0.0, %v2393
      %v2395 = vpop.f32.mrb[0].mxu0
      %2396 = vmatprep.mubr.f32.mxu0 0.0
      %2397 = vmatmul.mubr.f32.gmra.mrb[0].mxu0 %v2220
      %v2398 = vpop.f32.mrb[0].mxu0
      %v2399 = vadd.f32 0.0, %v2398
      %v2400 = vpop.f32.mrb[0].mxu0
      %2401 = vmatprep.mubr.f32.mxu0 0.0
      %2402 = vmatmul.mubr.f32.gmra.mrb[0].mxu0 %v2223
      %v2403 = vpop.f32.mrb[0].mxu0
      %v2404 = vadd.f32 0.0, %v2403
      %v2405 = vpop.f32.mrb[0].mxu0
      %2406 = vmatprep.mubr.f32.mxu0 0.0
      %2407 = vmatmul.mubr.f32.gmra.mrb[0].mxu0 %v2226
      %v2408 = vpop.f32.mrb[0].mxu0
      %v2409 = vadd.f32 0.0, %v2408
      %v2410 = vpop.f32.mrb[0].mxu0
      %2411 = vmatprep.mubr.f32.mxu0 0.0
      %2412 = vmatmul.mubr.f32.gmra.mrb[0].mxu0 %v2229
      %v2413 = vpop.f32.mrb[0].mxu0
      %v2414 = vadd.f32 0.0, %v2413
      %v2415 = vpop.f32.mrb[0].mxu0
      %2416 = vmatprep.mubr.f32.mxu0 0.0
      %2417 = vmatmul.mubr.f32.gmra.mrb[0].mxu0 %v2232
      %v2418 = vpop.f32.mrb[0].mxu0
      %v2419 = vadd.f32 0.0, %v2418
      %v2420 = vpop.f32.mrb[0].mxu0
      %2421 = vmatprep.mubr.f32.mxu0 0.0
      %2422 = vmatmul.mubr.f32.gmra.mrb[0].mxu0 %v2235
      %v2423 = vpop.f32.mrb[0].mxu0
      %v2424 = vadd.f32 0.0, %v2423
      %v2425 = vpop.f32.mrb[0].mxu0
      %2426 = vmatprep.mubr.f32.mxu0 0.0
      %2427 = vmatmul.mubr.f32.gmra.mrb[0].mxu0 %v2238
      %v2428 = vpop.f32.mrb[0].mxu0
      %v2429 = vadd.f32 0.0, %v2428
      %v2430 = vpop.f32.mrb[0].mxu0
      %2431 = vmatprep.mubr.f32.mxu0 0.0
      %2432 = vmatmul.mubr.f32.gmra.mrb[0].mxu0 %v2241
      %v2433 = vpop.f32.mrb[0].mxu0
      %v2434 = vadd.f32 0.0, %v2433
      %v2435 = vpop.f32.mrb[0].mxu0
      %2436 = vmatprep.mubr.f32.mxu0 0.0
      %2437 = vmatmul.mubr.f32.gmra.mrb[0].mxu0 %v2244
      %v2438 = vpop.f32.mrb[0].mxu0
      %v2439 = vadd.f32 0.0, %v2438
      %v2440 = vpop.f32.mrb[0].mxu0
      %2441 = vmatprep.mubr.f32.mxu0 0.0
      %2442 = vmatmul.mubr.f32.gmra.mrb[0].mxu0 %v2247
      %v2443 = vpop.f32.mrb[0].mxu0
      %v2444 = vadd.f32 0.0, %v2443
      %v2445 = vpop.f32.mrb[0].mxu0
      %2446 = vmatprep.mubr.f32.mxu0 0.0
      %2447 = vmatmul.mubr.f32.gmra.mrb[0].mxu0 %v2250
      %v2448 = vpop.f32.mrb[0].mxu0
      %v2449 = vadd.f32 0.0, %v2448
      %v2450 = vpop.f32.mrb[0].mxu0
      %2451 = vmatprep.mubr.f32.mxu0 0.0
      %2452 = vmatmul.mubr.f32.gmra.mrb[0].mxu0 %v2253
      %v2453 = vpop.f32.mrb[0].mxu0
      %v2454 = vadd.f32 0.0, %v2453
      %v2455 = vpop.f32.mrb[0].mxu0
      %2456 = vmatprep.mubr.f32.mxu0 0.0
      %2457 = vmatmul.mubr.f32.gmra.mrb[0].mxu0 %v2256
      %v2458 = vpop.f32.mrb[0].mxu0
      %v2459 = vadd.f32 0.0, %v2458
      %v2460 = vpop.f32.mrb[0].mxu0
      %2461 = vmatprep.mubr.f32.mxu0 0.0
      %2462 = vmatmul.mubr.f32.gmra.mrb[0].mxu0 %v2259
      %v2463 = vpop.f32.mrb[0].mxu0
      %v2464 = vadd.f32 0.0, %v2463
      %v2465 = vpop.f32.mrb[0].mxu0
      %2466 = vmatprep.mubr.f32.mxu0 0.0
      %2467 = vmatmul.mubr.f32.gmra.mrb[0].mxu0 %v2262
      %v2468 = vpop.f32.mrb[0].mxu0
      %v2469 = vadd.f32 0.0, %v2468
      %v2470 = vpop.f32.mrb[0].mxu0
      %2471 = vmatprep.mubr.f32.mxu0 0.0
      %2472 = vmatmul.mubr.f32.gmra.mrb[0].mxu0 %v2265
      %v2473 = vpop.f32.mrb[0].mxu0
      %v2474 = vadd.f32 0.0, %v2473
      %v2475 = vpop.f32.mrb[0].mxu0
      %2476 = vmatprep.mubr.f32.mxu0 0.0
      %2477 = vmatmul.mubr.f32.gmra.mrb[0].mxu0 %v2268
      %v2478 = vpop.f32.mrb[0].mxu0
      %v2479 = vadd.f32 0.0, %v2478
      %v2480 = vpop.f32.mrb[0].mxu0
      %2481 = vmatprep.mubr.f32.mxu0 0.0
      %2482 = vmatmul.mubr.f32.gmra.mrb[0].mxu0 %v2271
      %v2483 = vpop.f32.mrb[0].mxu0
      %v2484 = vadd.f32 0.0, %v2483
      %v2485 = vpop.f32.mrb[0].mxu0
      %2486 = vmatprep.mubr.f32.mxu0 0.0
      %2487 = vmatmul.mubr.f32.gmra.mrb[0].mxu0 %v2274
      %v2488 = vpop.f32.mrb[0].mxu0
      %v2489 = vadd.f32 0.0, %v2488
      %v2490 = vpop.f32.mrb[0].mxu0
      %2491 = vmatprep.mubr.f32.mxu0 0.0
      %2492 = vmatmul.mubr.f32.gmra.mrb[0].mxu0 %v2277
      %v2493 = vpop.f32.mrb[0].mxu0
      %v2494 = vadd.f32 0.0, %v2493
      %v2495 = vpop.f32.mrb[0].mxu0
      %2496 = vmatprep.mubr.f32.mxu0 0.0
      %2497 = vmatmul.mubr.f32.gmra.mrb[0].mxu0 %v2280
      %v2498 = vpop.f32.mrb[0].mxu0
      %v2499 = vadd.f32 0.0, %v2498
      %v2500 = vpop.f32.mrb[0].mxu0
      %2501 = vmatprep.mubr.f32.mxu0 0.0
      %2502 = vmatmul.mubr.f32.gmra.mrb[0].mxu0 %v2283
      %v2503 = vpop.f32.mrb[0].mxu0
      %v2504 = vadd.f32 0.0, %v2503
      %v2505 = vpop.f32.mrb[0].mxu0
      %2506 = vmatprep.mubr.f32.mxu0 0.0
      %2507 = vmatmul.mubr.f32.gmra.mrb[0].mxu0 %v2286
      %v2508 = vpop.f32.mrb[0].mxu0
      %v2509 = vadd.f32 0.0, %v2508
      %v2510 = vpop.f32.mrb[0].mxu0
      %2511 = vmatprep.mubr.f32.mxu0 0.0
      %2512 = vmatmul.mubr.f32.gmra.mrb[0].mxu0 %v2289
      %v2513 = vpop.f32.mrb[0].mxu0
      %v2514 = vadd.f32 0.0, %v2513
      %v2515 = vpop.f32.mrb[0].mxu0
      %2516 = vmatprep.mubr.f32.mxu0 0.0
      %2517 = vmatmul.mubr.f32.gmra.mrb[0].mxu0 %v2292
      %v2518 = vpop.f32.mrb[0].mxu0
      %v2519 = vadd.f32 0.0, %v2518
      %v2520 = vpop.f32.mrb[0].mxu0
      %2521 = vdwg.mxu0
      %v2523 = vsel %vm198, %v2129, 0
      %v2526 = vsel %vm198, %v2130, 0
      %v2529 = vsel %vm198, %v2131, 0
      %v2532 = vsel %vm198, %v2132, 0
      %v2535 = vsel %vm198, %v2133, 0
      %v2538 = vsel %vm198, %v2134, 0
      %v2541 = vsel %vm198, %v2135, 0
      %v2544 = vsel %vm198, %v2136, 0
      %v2547 = vsel %vm198, %v2137, 0
      %v2550 = vsel %vm198, %v2138, 0
      %v2553 = vsel %vm198, %v2139, 0
      %v2556 = vsel %vm198, %v2140, 0
      %v2559 = vsel %vm198, %v2141, 0
      %v2562 = vsel %vm198, %v2142, 0
      %v2565 = vsel %vm198, %v2143, 0
      %v2568 = vsel %vm198, %v2144, 0
      %v2571 = vsel %vm198, %v2145, 0
      %v2574 = vsel %vm198, %v2146, 0
      %v2577 = vsel %vm198, %v2147, 0
      %v2580 = vsel %vm198, %v2148, 0
      %v2583 = vsel %vm198, %v2149, 0
      %v2586 = vsel %vm198, %v2150, 0
      %v2589 = vsel %vm198, %v2151, 0
      %v2592 = vsel %vm198, %v2152, 0
      %v2595 = vsel %vm198, %v2153, 0
      %v2598 = vsel %vm198, %v2154, 0
      %v2601 = vsel %vm198, %v2155, 0
      %v2604 = vsel %vm198, %v2156, 0
      %v2607 = vsel %vm198, %v2157, 0
      %v2610 = vsel %vm198, %v2158, 0
      %v2613 = vsel %vm198, %v2159, 0
      %v2616 = vsel %vm198, %v2160, 0
      %v2619 = vsel %vm793, %v2162, 0
      %2621 = vmatprep.subr.mxu0 0.0
      %2622 = vmatpush1.msra.mxu0 %v2161
      %2623 = vmatprep.subr.mxu0 0.0
      %2624 = vmatpush1.msra.mxu0 %v2619
      %2625 = vmatprep.subr.mxu0 0.0
      %2626 = vmatpush1.msra.mxu0 0.0
      %2627 = vmatprep.subr.mxu0 0.0
      %2628 = vmatpush1.msra.mxu0 0.0
      %2629 = vmatprep.subr.mxu0 0.0
      %2630 = vmatpush1.msra.mxu0 0.0
      %2631 = vmatprep.subr.mxu0 0.0
      %2632 = vmatpush1.msra.mxu0 0.0
      %2633 = vmatprep.subr.mxu0 0.0
      %2634 = vmatpush1.msra.mxu0 0.0
      %2635 = vmatprep.subr.mxu0 0.0
      %2636 = vmatpush1.msra.mxu0 0.0
      %2637 = vmatprep.subr.mxu0 0.0
      %2638 = vmatpush1.msra.mxu0 0.0
      %2639 = vmatprep.subr.mxu0 0.0
      %2640 = vmatpush1.msra.mxu0 0.0
      %2641 = vmatprep.subr.mxu0 0.0
      %2642 = vmatpush1.msra.mxu0 0.0
      %2643 = vmatprep.subr.mxu0 0.0
      %2644 = vmatpush1.msra.mxu0 0.0
      %2645 = vmatprep.subr.mxu0 0.0
      %2646 = vmatpush1.msra.mxu0 0.0
      %2647 = vmatprep.subr.mxu0 0.0
      %2648 = vmatpush1.msra.mxu0 0.0
      %2649 = vmatprep.subr.mxu0 0.0
      %2650 = vmatpush1.msra.mxu0 0.0
      %2651 = vmatprep.subr.mxu0 0.0
      %2652 = vmatpush1.msra.mxu0 0.0
      %2653 = vmatprep.subr.mxu0 0.0
      %2654 = vmatpush1.msra.mxu0 0.0
      %2655 = vmatprep.subr.mxu0 0.0
      %2656 = vmatpush1.msra.mxu0 0.0
      %2657 = vmatprep.subr.mxu0 0.0
      %2658 = vmatpush1.msra.mxu0 0.0
      %2659 = vmatprep.subr.mxu0 0.0
      %2660 = vmatpush1.msra.mxu0 0.0
      %2661 = vmatprep.subr.mxu0 0.0
      %2662 = vmatpush1.msra.mxu0 0.0
      %2663 = vmatprep.subr.mxu0 0.0
      %2664 = vmatpush1.msra.mxu0 0.0
      %2665 = vmatprep.subr.mxu0 0.0
      %2666 = vmatpush1.msra.mxu0 0.0
      %2667 = vmatprep.subr.mxu0 0.0
      %2668 = vmatpush1.msra.mxu0 0.0
      %2669 = vmatprep.subr.mxu0 0.0
      %2670 = vmatpush1.msra.mxu0 0.0
      %2671 = vmatprep.subr.mxu0 0.0
      %2672 = vmatpush1.msra.mxu0 0.0
      %2673 = vmatprep.subr.mxu0 0.0
      %2674 = vmatpush1.msra.mxu0 0.0
      %2675 = vmatprep.subr.mxu0 0.0
      %2676 = vmatpush1.msra.mxu0 0.0
      %2677 = vmatprep.subr.mxu0 0.0
      %2678 = vmatpush1.msra.mxu0 0.0
      %2679 = vmatprep.subr.mxu0 0.0
      %2680 = vmatpush1.msra.mxu0 0.0
      %2681 = vmatprep.subr.mxu0 0.0
      %2682 = vmatpush1.msra.mxu0 0.0
      %2683 = vmatprep.subr.mxu0 0.0
      %2684 = vmatpush1.msra.mxu0 0.0
      %2685 = vmatprep.mubr.f32.mxu0 0.0
      %2686 = vmatmul.mubr.f32.gmra.mrb[0].mxu0 %v2523
      %v2687 = vpop.f32.mrb[0].mxu0
      %v2688 = vadd.f32 %v2364, %v2687
      %v2689 = vpop.f32.mrb[0].mxu0
      %2690 = vmatprep.mubr.f32.mxu0 0.0
      %2691 = vmatmul.mubr.f32.gmra.mrb[0].mxu0 %v2526
      %v2692 = vpop.f32.mrb[0].mxu0
      %v2693 = vadd.f32 %v2369, %v2692
      %v2694 = vpop.f32.mrb[0].mxu0
      %2695 = vmatprep.mubr.f32.mxu0 0.0
      %2696 = vmatmul.mubr.f32.gmra.mrb[0].mxu0 %v2529
      %v2697 = vpop.f32.mrb[0].mxu0
      %v2698 = vadd.f32 %v2374, %v2697
      %v2699 = vpop.f32.mrb[0].mxu0
      %2700 = vmatprep.mubr.f32.mxu0 0.0
      %2701 = vmatmul.mubr.f32.gmra.mrb[0].mxu0 %v2532
      %v2702 = vpop.f32.mrb[0].mxu0
      %v2703 = vadd.f32 %v2379, %v2702
      %v2704 = vpop.f32.mrb[0].mxu0
      %2705 = vmatprep.mubr.f32.mxu0 0.0
      %2706 = vmatmul.mubr.f32.gmra.mrb[0].mxu0 %v2535
      %v2707 = vpop.f32.mrb[0].mxu0
      %v2708 = vadd.f32 %v2384, %v2707
      %v2709 = vpop.f32.mrb[0].mxu0
      %2710 = vmatprep.mubr.f32.mxu0 0.0
      %2711 = vmatmul.mubr.f32.gmra.mrb[0].mxu0 %v2538
      %v2712 = vpop.f32.mrb[0].mxu0
      %v2713 = vadd.f32 %v2389, %v2712
      %v2714 = vpop.f32.mrb[0].mxu0
      %2715 = vmatprep.mubr.f32.mxu0 0.0
      %2716 = vmatmul.mubr.f32.gmra.mrb[0].mxu0 %v2541
      %v2717 = vpop.f32.mrb[0].mxu0
      %v2718 = vadd.f32 %v2394, %v2717
      %v2719 = vpop.f32.mrb[0].mxu0
      %2720 = vmatprep.mubr.f32.mxu0 0.0
      %2721 = vmatmul.mubr.f32.gmra.mrb[0].mxu0 %v2544
      %v2722 = vpop.f32.mrb[0].mxu0
      %v2723 = vadd.f32 %v2399, %v2722
      %v2724 = vpop.f32.mrb[0].mxu0
      %2725 = vmatprep.mubr.f32.mxu0 0.0
      %2726 = vmatmul.mubr.f32.gmra.mrb[0].mxu0 %v2547
      %v2727 = vpop.f32.mrb[0].mxu0
      %v2728 = vadd.f32 %v2404, %v2727
      %v2729 = vpop.f32.mrb[0].mxu0
      %2730 = vmatprep.mubr.f32.mxu0 0.0
      %2731 = vmatmul.mubr.f32.gmra.mrb[0].mxu0 %v2550
      %v2732 = vpop.f32.mrb[0].mxu0
      %v2733 = vadd.f32 %v2409, %v2732
      %v2734 = vpop.f32.mrb[0].mxu0
      %2735 = vmatprep.mubr.f32.mxu0 0.0
      %2736 = vmatmul.mubr.f32.gmra.mrb[0].mxu0 %v2553
      %v2737 = vpop.f32.mrb[0].mxu0
      %v2738 = vadd.f32 %v2414, %v2737
      %v2739 = vpop.f32.mrb[0].mxu0
      %2740 = vmatprep.mubr.f32.mxu0 0.0
      %2741 = vmatmul.mubr.f32.gmra.mrb[0].mxu0 %v2556
      %v2742 = vpop.f32.mrb[0].mxu0
      %v2743 = vadd.f32 %v2419, %v2742
      %v2744 = vpop.f32.mrb[0].mxu0
      %2745 = vmatprep.mubr.f32.mxu0 0.0
      %2746 = vmatmul.mubr.f32.gmra.mrb[0].mxu0 %v2559
      %v2747 = vpop.f32.mrb[0].mxu0
      %v2748 = vadd.f32 %v2424, %v2747
      %v2749 = vpop.f32.mrb[0].mxu0
      %2750 = vmatprep.mubr.f32.mxu0 0.0
      %2751 = vmatmul.mubr.f32.gmra.mrb[0].mxu0 %v2562
      %v2752 = vpop.f32.mrb[0].mxu0
      %v2753 = vadd.f32 %v2429, %v2752
      %v2754 = vpop.f32.mrb[0].mxu0
      %2755 = vmatprep.mubr.f32.mxu0 0.0
      %2756 = vmatmul.mubr.f32.gmra.mrb[0].mxu0 %v2565
      %v2757 = vpop.f32.mrb[0].mxu0
      %v2758 = vadd.f32 %v2434, %v2757
      %v2759 = vpop.f32.mrb[0].mxu0
      %2760 = vmatprep.mubr.f32.mxu0 0.0
      %2761 = vmatmul.mubr.f32.gmra.mrb[0].mxu0 %v2568
      %v2762 = vpop.f32.mrb[0].mxu0
      %v2763 = vadd.f32 %v2439, %v2762
      %v2764 = vpop.f32.mrb[0].mxu0
      %2765 = vmatprep.mubr.f32.mxu0 0.0
      %2766 = vmatmul.mubr.f32.gmra.mrb[0].mxu0 %v2571
      %v2767 = vpop.f32.mrb[0].mxu0
      %v2768 = vadd.f32 %v2444, %v2767
      %v2769 = vpop.f32.mrb[0].mxu0
      %2770 = vmatprep.mubr.f32.mxu0 0.0
      %2771 = vmatmul.mubr.f32.gmra.mrb[0].mxu0 %v2574
      %v2772 = vpop.f32.mrb[0].mxu0
      %v2773 = vadd.f32 %v2449, %v2772
      %v2774 = vpop.f32.mrb[0].mxu0
      %2775 = vmatprep.mubr.f32.mxu0 0.0
      %2776 = vmatmul.mubr.f32.gmra.mrb[0].mxu0 %v2577
      %v2777 = vpop.f32.mrb[0].mxu0
      %v2778 = vadd.f32 %v2454, %v2777
      %v2779 = vpop.f32.mrb[0].mxu0
      %2780 = vmatprep.mubr.f32.mxu0 0.0
      %2781 = vmatmul.mubr.f32.gmra.mrb[0].mxu0 %v2580
      %v2782 = vpop.f32.mrb[0].mxu0
      %v2783 = vadd.f32 %v2459, %v2782
      %v2784 = vpop.f32.mrb[0].mxu0
      %2785 = vmatprep.mubr.f32.mxu0 0.0
      %2786 = vmatmul.mubr.f32.gmra.mrb[0].mxu0 %v2583
      %v2787 = vpop.f32.mrb[0].mxu0
      %v2788 = vadd.f32 %v2464, %v2787
      %v2789 = vpop.f32.mrb[0].mxu0
      %2790 = vmatprep.mubr.f32.mxu0 0.0
      %2791 = vmatmul.mubr.f32.gmra.mrb[0].mxu0 %v2586
      %v2792 = vpop.f32.mrb[0].mxu0
      %v2793 = vadd.f32 %v2469, %v2792
      %v2794 = vpop.f32.mrb[0].mxu0
      %2795 = vmatprep.mubr.f32.mxu0 0.0
      %2796 = vmatmul.mubr.f32.gmra.mrb[0].mxu0 %v2589
      %v2797 = vpop.f32.mrb[0].mxu0
      %v2798 = vadd.f32 %v2474, %v2797
      %v2799 = vpop.f32.mrb[0].mxu0
      %2800 = vmatprep.mubr.f32.mxu0 0.0
      %2801 = vmatmul.mubr.f32.gmra.mrb[0].mxu0 %v2592
      %v2802 = vpop.f32.mrb[0].mxu0
      %v2803 = vadd.f32 %v2479, %v2802
      %v2804 = vpop.f32.mrb[0].mxu0
      %2805 = vmatprep.mubr.f32.mxu0 0.0
      %2806 = vmatmul.mubr.f32.gmra.mrb[0].mxu0 %v2595
      %v2807 = vpop.f32.mrb[0].mxu0
      %v2808 = vadd.f32 %v2484, %v2807
      %v2809 = vpop.f32.mrb[0].mxu0
      %2810 = vmatprep.mubr.f32.mxu0 0.0
      %2811 = vmatmul.mubr.f32.gmra.mrb[0].mxu0 %v2598
      %v2812 = vpop.f32.mrb[0].mxu0
      %v2813 = vadd.f32 %v2489, %v2812
      %v2814 = vpop.f32.mrb[0].mxu0
      %2815 = vmatprep.mubr.f32.mxu0 0.0
      %2816 = vmatmul.mubr.f32.gmra.mrb[0].mxu0 %v2601
      %v2817 = vpop.f32.mrb[0].mxu0
      %v2818 = vadd.f32 %v2494, %v2817
      %v2819 = vpop.f32.mrb[0].mxu0
      %2820 = vmatprep.mubr.f32.mxu0 0.0
      %2821 = vmatmul.mubr.f32.gmra.mrb[0].mxu0 %v2604
      %v2822 = vpop.f32.mrb[0].mxu0
      %v2823 = vadd.f32 %v2499, %v2822
      %v2824 = vpop.f32.mrb[0].mxu0
      %2825 = vmatprep.mubr.f32.mxu0 0.0
      %2826 = vmatmul.mubr.f32.gmra.mrb[0].mxu0 %v2607
      %v2827 = vpop.f32.mrb[0].mxu0
      %v2828 = vadd.f32 %v2504, %v2827
      %v2829 = vpop.f32.mrb[0].mxu0
      %2830 = vmatprep.mubr.f32.mxu0 0.0
      %2831 = vmatmul.mubr.f32.gmra.mrb[0].mxu0 %v2610
      %v2832 = vpop.f32.mrb[0].mxu0
      %v2833 = vadd.f32 %v2509, %v2832
      %v2834 = vpop.f32.mrb[0].mxu0
      %2835 = vmatprep.mubr.f32.mxu0 0.0
      %2836 = vmatmul.mubr.f32.gmra.mrb[0].mxu0 %v2613
      %v2837 = vpop.f32.mrb[0].mxu0
      %v2838 = vadd.f32 %v2514, %v2837
      %v2839 = vpop.f32.mrb[0].mxu0
      %2840 = vmatprep.mubr.f32.mxu0 0.0
      %2841 = vmatmul.mubr.f32.gmra.mrb[0].mxu0 %v2616
      %v2842 = vpop.f32.mrb[0].mxu0
      %v2843 = vadd.f32 %v2519, %v2842
      %v2844 = vpop.f32.mrb[0].mxu0
      %2845 = vdwg.mxu0
      %v2846 = vld [vmem:[%s1346] sm:$0xff]
      %v2847 = vld [vmem:[%s1346 + $0x8] sm:$0xff]
      %v2848 = vld [vmem:[%s1346 + $0x10] sm:$0xff]
      %v2849 = vld [vmem:[%s1346 + $0x18] sm:$0xff]
      %v2850 = vld [vmem:[%s1346 + $0x20] sm:$0xff]
      %v2851 = vld [vmem:[%s1346 + $0x28] sm:$0xff]
      %v2852 = vld [vmem:[%s1346 + $0x30] sm:$0xff]
      %v2853 = vld [vmem:[%s1346 + $0x38] sm:$0xff]
      %v2854 = vld [vmem:[%s1346 + $0x40] sm:$0xff]
      %v2855 = vld [vmem:[%s1346 + $0x48] sm:$0xff]
      %v2856 = vld [vmem:[%s1346 + $0x50] sm:$0xff]
      %v2857 = vld [vmem:[%s1346 + $0x58] sm:$0xff]
      %v2858 = vld [vmem:[%s1346 + $0x60] sm:$0xff]
      %v2859 = vld [vmem:[%s1346 + $0x68] sm:$0xff]
      %v2860 = vld [vmem:[%s1346 + $0x70] sm:$0xff]
      %v2861 = vld [vmem:[%s1346 + $0x78] sm:$0xff]
      %v2862 = vld [vmem:[%s1346 + $0x80] sm:$0xff]
      %v2863 = vld [vmem:[%s1346 + $0x88] sm:$0xff]
      %v2864 = vld [vmem:[%s1346 + $0x90] sm:$0xff]
      %v2865 = vld [vmem:[%s1346 + $0x98] sm:$0xff]
      %v2866 = vld [vmem:[%s1346 + $0xa0] sm:$0xff]
      %v2867 = vld [vmem:[%s1346 + $0xa8] sm:$0xff]
      %v2868 = vld [vmem:[%s1346 + $0xb0] sm:$0xff]
      %v2869 = vld [vmem:[%s1346 + $0xb8] sm:$0xff]
      %v2870 = vld [vmem:[%s1346 + $0xc0] sm:$0xff]
      %v2871 = vld [vmem:[%s1346 + $0xc8] sm:$0xff]
      %v2872 = vld [vmem:[%s1346 + $0xd0] sm:$0xff]
      %v2873 = vld [vmem:[%s1346 + $0xd8] sm:$0xff]
      %v2874 = vld [vmem:[%s1346 + $0xe0] sm:$0xff]
      %v2875 = vld [vmem:[%s1346 + $0xe8] sm:$0xff]
      %v2876 = vld [vmem:[%s1346 + $0xf0] sm:$0xff]
      %v2877 = vld [vmem:[%s1346 + $0xf8] sm:$0xff]
      %s2878 = scalar_lea.vmem %s2, 32
      %v2879 = vld [vmem:[%s2878] sm:$0xff]
      %v2880 = vld [vmem:[%s2878 + $0x8] sm:$0xf]
      %v2882 = vsel %vm198, %v2846, 0
      %v2885 = vsel %vm198, %v2847, 0
      %v2888 = vsel %vm198, %v2848, 0
      %v2891 = vsel %vm198, %v2849, 0
      %v2894 = vsel %vm198, %v2850, 0
      %v2897 = vsel %vm198, %v2851, 0
      %v2900 = vsel %vm198, %v2852, 0
      %v2903 = vsel %vm198, %v2853, 0
      %v2906 = vsel %vm198, %v2854, 0
      %v2909 = vsel %vm198, %v2855, 0
      %v2912 = vsel %vm198, %v2856, 0
      %v2915 = vsel %vm198, %v2857, 0
      %v2918 = vsel %vm198, %v2858, 0
      %v2921 = vsel %vm198, %v2859, 0
      %v2924 = vsel %vm198, %v2860, 0
      %v2927 = vsel %vm198, %v2861, 0
      %v2930 = vsel %vm198, %v2862, 0
      %v2933 = vsel %vm198, %v2863, 0
      %v2936 = vsel %vm198, %v2864, 0
      %v2939 = vsel %vm198, %v2865, 0
      %v2942 = vsel %vm198, %v2866, 0
      %v2945 = vsel %vm198, %v2867, 0
      %v2948 = vsel %vm198, %v2868, 0
      %v2951 = vsel %vm198, %v2869, 0
      %v2954 = vsel %vm198, %v2870, 0
      %v2957 = vsel %vm198, %v2871, 0
      %v2960 = vsel %vm198, %v2872, 0
      %v2963 = vsel %vm198, %v2873, 0
      %v2966 = vsel %vm198, %v2874, 0
      %v2969 = vsel %vm198, %v2875, 0
      %v2972 = vsel %vm198, %v2876, 0
      %v2975 = vsel %vm198, %v2877, 0
      %v2978 = vsel %vm793, %v2880, 0
      %2980 = vmatprep.subr.mxu0 0.0
      %2981 = vmatpush1.msra.mxu0 %v2879
      %2982 = vmatprep.subr.mxu0 0.0
      %2983 = vmatpush1.msra.mxu0 %v2978
      %2984 = vmatprep.subr.mxu0 0.0
      %2985 = vmatpush1.msra.mxu0 0.0
      %2986 = vmatprep.subr.mxu0 0.0
      %2987 = vmatpush1.msra.mxu0 0.0
      %2988 = vmatprep.subr.mxu0 0.0
      %2989 = vmatpush1.msra.mxu0 0.0
      %2990 = vmatprep.subr.mxu0 0.0
      %2991 = vmatpush1.msra.mxu0 0.0
      %2992 = vmatprep.subr.mxu0 0.0
      %2993 = vmatpush1.msra.mxu0 0.0
      %2994 = vmatprep.subr.mxu0 0.0
      %2995 = vmatpush1.msra.mxu0 0.0
      %2996 = vmatprep.subr.mxu0 0.0
      %2997 = vmatpush1.msra.mxu0 0.0
      %2998 = vmatprep.subr.mxu0 0.0
      %2999 = vmatpush1.msra.mxu0 0.0
      %3000 = vmatprep.subr.mxu0 0.0
      %3001 = vmatpush1.msra.mxu0 0.0
      %3002 = vmatprep.subr.mxu0 0.0
      %3003 = vmatpush1.msra.mxu0 0.0
      %3004 = vmatprep.subr.mxu0 0.0
      %3005 = vmatpush1.msra.mxu0 0.0
      %3006 = vmatprep.subr.mxu0 0.0
      %3007 = vmatpush1.msra.mxu0 0.0
      %3008 = vmatprep.subr.mxu0 0.0
      %3009 = vmatpush1.msra.mxu0 0.0
      %3010 = vmatprep.subr.mxu0 0.0
      %3011 = vmatpush1.msra.mxu0 0.0
      %3012 = vmatprep.subr.mxu0 0.0
      %3013 = vmatpush1.msra.mxu0 0.0
      %3014 = vmatprep.subr.mxu0 0.0
      %3015 = vmatpush1.msra.mxu0 0.0
      %3016 = vmatprep.subr.mxu0 0.0
      %3017 = vmatpush1.msra.mxu0 0.0
      %3018 = vmatprep.subr.mxu0 0.0
      %3019 = vmatpush1.msra.mxu0 0.0
      %3020 = vmatprep.subr.mxu0 0.0
      %3021 = vmatpush1.msra.mxu0 0.0
      %3022 = vmatprep.subr.mxu0 0.0
      %3023 = vmatpush1.msra.mxu0 0.0
      %3024 = vmatprep.subr.mxu0 0.0
      %3025 = vmatpush1.msra.mxu0 0.0
      %3026 = vmatprep.subr.mxu0 0.0
      %3027 = vmatpush1.msra.mxu0 0.0
      %3028 = vmatprep.subr.mxu0 0.0
      %3029 = vmatpush1.msra.mxu0 0.0
      %3030 = vmatprep.subr.mxu0 0.0
      %3031 = vmatpush1.msra.mxu0 0.0
      %3032 = vmatprep.subr.mxu0 0.0
      %3033 = vmatpush1.msra.mxu0 0.0
      %3034 = vmatprep.subr.mxu0 0.0
      %3035 = vmatpush1.msra.mxu0 0.0
      %3036 = vmatprep.subr.mxu0 0.0
      %3037 = vmatpush1.msra.mxu0 0.0
      %3038 = vmatprep.subr.mxu0 0.0
      %3039 = vmatpush1.msra.mxu0 0.0
      %3040 = vmatprep.subr.mxu0 0.0
      %3041 = vmatpush1.msra.mxu0 0.0
      %3042 = vmatprep.subr.mxu0 0.0
      %3043 = vmatpush1.msra.mxu0 0.0
      %3044 = vmatprep.mubr.f32.mxu0 0.0
      %3045 = vmatmul.mubr.f32.gmra.mrb[0].mxu0 %v2882
      %v3046 = vpop.f32.mrb[0].mxu0
      %v3047 = vadd.f32 0.0, %v3046
      %v3048 = vpop.f32.mrb[0].mxu0
      %3049 = vmatprep.mubr.f32.mxu0 0.0
      %3050 = vmatmul.mubr.f32.gmra.mrb[0].mxu0 %v2885
      %v3051 = vpop.f32.mrb[0].mxu0
      %v3052 = vadd.f32 0.0, %v3051
      %v3053 = vpop.f32.mrb[0].mxu0
      %3054 = vmatprep.mubr.f32.mxu0 0.0
      %3055 = vmatmul.mubr.f32.gmra.mrb[0].mxu0 %v2888
      %v3056 = vpop.f32.mrb[0].mxu0
      %v3057 = vadd.f32 0.0, %v3056
      %v3058 = vpop.f32.mrb[0].mxu0
      %3059 = vmatprep.mubr.f32.mxu0 0.0
      %3060 = vmatmul.mubr.f32.gmra.mrb[0].mxu0 %v2891
      %v3061 = vpop.f32.mrb[0].mxu0
      %v3062 = vadd.f32 0.0, %v3061
      %v3063 = vpop.f32.mrb[0].mxu0
      %3064 = vmatprep.mubr.f32.mxu0 0.0
      %3065 = vmatmul.mubr.f32.gmra.mrb[0].mxu0 %v2894
      %v3066 = vpop.f32.mrb[0].mxu0
      %v3067 = vadd.f32 0.0, %v3066
      %v3068 = vpop.f32.mrb[0].mxu0
      %3069 = vmatprep.mubr.f32.mxu0 0.0
      %3070 = vmatmul.mubr.f32.gmra.mrb[0].mxu0 %v2897
      %v3071 = vpop.f32.mrb[0].mxu0
      %v3072 = vadd.f32 0.0, %v3071
      %v3073 = vpop.f32.mrb[0].mxu0
      %3074 = vmatprep.mubr.f32.mxu0 0.0
      %3075 = vmatmul.mubr.f32.gmra.mrb[0].mxu0 %v2900
      %v3076 = vpop.f32.mrb[0].mxu0
      %v3077 = vadd.f32 0.0, %v3076
      %v3078 = vpop.f32.mrb[0].mxu0
      %3079 = vmatprep.mubr.f32.mxu0 0.0
      %3080 = vmatmul.mubr.f32.gmra.mrb[0].mxu0 %v2903
      %v3081 = vpop.f32.mrb[0].mxu0
      %v3082 = vadd.f32 0.0, %v3081
      %v3083 = vpop.f32.mrb[0].mxu0
      %3084 = vmatprep.mubr.f32.mxu0 0.0
      %3085 = vmatmul.mubr.f32.gmra.mrb[0].mxu0 %v2906
      %v3086 = vpop.f32.mrb[0].mxu0
      %v3087 = vadd.f32 0.0, %v3086
      %v3088 = vpop.f32.mrb[0].mxu0
      %3089 = vmatprep.mubr.f32.mxu0 0.0
      %3090 = vmatmul.mubr.f32.gmra.mrb[0].mxu0 %v2909
      %v3091 = vpop.f32.mrb[0].mxu0
      %v3092 = vadd.f32 0.0, %v3091
      %v3093 = vpop.f32.mrb[0].mxu0
      %3094 = vmatprep.mubr.f32.mxu0 0.0
      %3095 = vmatmul.mubr.f32.gmra.mrb[0].mxu0 %v2912
      %v3096 = vpop.f32.mrb[0].mxu0
      %v3097 = vadd.f32 0.0, %v3096
      %v3098 = vpop.f32.mrb[0].mxu0
      %3099 = vmatprep.mubr.f32.mxu0 0.0
      %3100 = vmatmul.mubr.f32.gmra.mrb[0].mxu0 %v2915
      %v3101 = vpop.f32.mrb[0].mxu0
      %v3102 = vadd.f32 0.0, %v3101
      %v3103 = vpop.f32.mrb[0].mxu0
      %3104 = vmatprep.mubr.f32.mxu0 0.0
      %3105 = vmatmul.mubr.f32.gmra.mrb[0].mxu0 %v2918
      %v3106 = vpop.f32.mrb[0].mxu0
      %v3107 = vadd.f32 0.0, %v3106
      %v3108 = vpop.f32.mrb[0].mxu0
      %3109 = vmatprep.mubr.f32.mxu0 0.0
      %3110 = vmatmul.mubr.f32.gmra.mrb[0].mxu0 %v2921
      %v3111 = vpop.f32.mrb[0].mxu0
      %v3112 = vadd.f32 0.0, %v3111
      %v3113 = vpop.f32.mrb[0].mxu0
      %3114 = vmatprep.mubr.f32.mxu0 0.0
      %3115 = vmatmul.mubr.f32.gmra.mrb[0].mxu0 %v2924
      %v3116 = vpop.f32.mrb[0].mxu0
      %v3117 = vadd.f32 0.0, %v3116
      %v3118 = vpop.f32.mrb[0].mxu0
      %3119 = vmatprep.mubr.f32.mxu0 0.0
      %3120 = vmatmul.mubr.f32.gmra.mrb[0].mxu0 %v2927
      %v3121 = vpop.f32.mrb[0].mxu0
      %v3122 = vadd.f32 0.0, %v3121
      %v3123 = vpop.f32.mrb[0].mxu0
      %3124 = vmatprep.mubr.f32.mxu0 0.0
      %3125 = vmatmul.mubr.f32.gmra.mrb[0].mxu0 %v2930
      %v3126 = vpop.f32.mrb[0].mxu0
      %v3127 = vadd.f32 0.0, %v3126
      %v3128 = vpop.f32.mrb[0].mxu0
      %3129 = vmatprep.mubr.f32.mxu0 0.0
      %3130 = vmatmul.mubr.f32.gmra.mrb[0].mxu0 %v2933
      %v3131 = vpop.f32.mrb[0].mxu0
      %v3132 = vadd.f32 0.0, %v3131
      %v3133 = vpop.f32.mrb[0].mxu0
      %3134 = vmatprep.mubr.f32.mxu0 0.0
      %3135 = vmatmul.mubr.f32.gmra.mrb[0].mxu0 %v2936
      %v3136 = vpop.f32.mrb[0].mxu0
      %v3137 = vadd.f32 0.0, %v3136
      %v3138 = vpop.f32.mrb[0].mxu0
      %3139 = vmatprep.mubr.f32.mxu0 0.0
      %3140 = vmatmul.mubr.f32.gmra.mrb[0].mxu0 %v2939
      %v3141 = vpop.f32.mrb[0].mxu0
      %v3142 = vadd.f32 0.0, %v3141
      %v3143 = vpop.f32.mrb[0].mxu0
      %3144 = vmatprep.mubr.f32.mxu0 0.0
      %3145 = vmatmul.mubr.f32.gmra.mrb[0].mxu0 %v2942
      %v3146 = vpop.f32.mrb[0].mxu0
      %v3147 = vadd.f32 0.0, %v3146
      %v3148 = vpop.f32.mrb[0].mxu0
      %3149 = vmatprep.mubr.f32.mxu0 0.0
      %3150 = vmatmul.mubr.f32.gmra.mrb[0].mxu0 %v2945
      %v3151 = vpop.f32.mrb[0].mxu0
      %v3152 = vadd.f32 0.0, %v3151
      %v3153 = vpop.f32.mrb[0].mxu0
      %3154 = vmatprep.mubr.f32.mxu0 0.0
      %3155 = vmatmul.mubr.f32.gmra.mrb[0].mxu0 %v2948
      %v3156 = vpop.f32.mrb[0].mxu0
      %v3157 = vadd.f32 0.0, %v3156
      %v3158 = vpop.f32.mrb[0].mxu0
      %3159 = vmatprep.mubr.f32.mxu0 0.0
      %3160 = vmatmul.mubr.f32.gmra.mrb[0].mxu0 %v2951
      %v3161 = vpop.f32.mrb[0].mxu0
      %v3162 = vadd.f32 0.0, %v3161
      %v3163 = vpop.f32.mrb[0].mxu0
      %3164 = vmatprep.mubr.f32.mxu0 0.0
      %3165 = vmatmul.mubr.f32.gmra.mrb[0].mxu0 %v2954
      %v3166 = vpop.f32.mrb[0].mxu0
      %v3167 = vadd.f32 0.0, %v3166
      %v3168 = vpop.f32.mrb[0].mxu0
      %3169 = vmatprep.mubr.f32.mxu0 0.0
      %3170 = vmatmul.mubr.f32.gmra.mrb[0].mxu0 %v2957
      %v3171 = vpop.f32.mrb[0].mxu0
      %v3172 = vadd.f32 0.0, %v3171
      %v3173 = vpop.f32.mrb[0].mxu0
      %3174 = vmatprep.mubr.f32.mxu0 0.0
      %3175 = vmatmul.mubr.f32.gmra.mrb[0].mxu0 %v2960
      %v3176 = vpop.f32.mrb[0].mxu0
      %v3177 = vadd.f32 0.0, %v3176
      %v3178 = vpop.f32.mrb[0].mxu0
      %3179 = vmatprep.mubr.f32.mxu0 0.0
      %3180 = vmatmul.mubr.f32.gmra.mrb[0].mxu0 %v2963
      %v3181 = vpop.f32.mrb[0].mxu0
      %v3182 = vadd.f32 0.0, %v3181
      %v3183 = vpop.f32.mrb[0].mxu0
      %3184 = vmatprep.mubr.f32.mxu0 0.0
      %3185 = vmatmul.mubr.f32.gmra.mrb[0].mxu0 %v2966
      %v3186 = vpop.f32.mrb[0].mxu0
      %v3187 = vadd.f32 0.0, %v3186
      %v3188 = vpop.f32.mrb[0].mxu0
      %3189 = vmatprep.mubr.f32.mxu0 0.0
      %3190 = vmatmul.mubr.f32.gmra.mrb[0].mxu0 %v2969
      %v3191 = vpop.f32.mrb[0].mxu0
      %v3192 = vadd.f32 0.0, %v3191
      %v3193 = vpop.f32.mrb[0].mxu0
      %3194 = vmatprep.mubr.f32.mxu0 0.0
      %3195 = vmatmul.mubr.f32.gmra.mrb[0].mxu0 %v2972
      %v3196 = vpop.f32.mrb[0].mxu0
      %v3197 = vadd.f32 0.0, %v3196
      %v3198 = vpop.f32.mrb[0].mxu0
      %3199 = vmatprep.mubr.f32.mxu0 0.0
      %3200 = vmatmul.mubr.f32.gmra.mrb[0].mxu0 %v2975
      %v3201 = vpop.f32.mrb[0].mxu0
      %v3202 = vadd.f32 0.0, %v3201
      %v3203 = vpop.f32.mrb[0].mxu0
      %3204 = vdwg.mxu0
      %v3205 = vadd.f32 %v2688, %v3047
      %v3206 = vadd.f32 %v2693, %v3052
      %v3207 = vadd.f32 %v2698, %v3057
      %v3208 = vadd.f32 %v2703, %v3062
      %v3209 = vadd.f32 %v2708, %v3067
      %v3210 = vadd.f32 %v2713, %v3072
      %v3211 = vadd.f32 %v2718, %v3077
      %v3212 = vadd.f32 %v2723, %v3082
      %v3213 = vadd.f32 %v2728, %v3087
      %v3214 = vadd.f32 %v2733, %v3092
      %v3215 = vadd.f32 %v2738, %v3097
      %v3216 = vadd.f32 %v2743, %v3102
      %v3217 = vadd.f32 %v2748, %v3107
      %v3218 = vadd.f32 %v2753, %v3112
      %v3219 = vadd.f32 %v2758, %v3117
      %v3220 = vadd.f32 %v2763, %v3122
      %v3221 = vadd.f32 %v2768, %v3127
      %v3222 = vadd.f32 %v2773, %v3132
      %v3223 = vadd.f32 %v2778, %v3137
      %v3224 = vadd.f32 %v2783, %v3142
      %v3225 = vadd.f32 %v2788, %v3147
      %v3226 = vadd.f32 %v2793, %v3152
      %v3227 = vadd.f32 %v2798, %v3157
      %v3228 = vadd.f32 %v2803, %v3162
      %v3229 = vadd.f32 %v2808, %v3167
      %v3230 = vadd.f32 %v2813, %v3172
      %v3231 = vadd.f32 %v2818, %v3177
      %v3232 = vadd.f32 %v2823, %v3182
      %v3233 = vadd.f32 %v2828, %v3187
      %v3234 = vadd.f32 %v2833, %v3192
      %v3235 = vadd.f32 %v2838, %v3197
      %v3236 = vadd.f32 %v2843, %v3202
      %v3237 = vadd.f32 %v3205, %v239
      %v3238 = vadd.f32 %v3206, %v240
      %v3239 = vadd.f32 %v3207, %v241
      %v3240 = vadd.f32 %v3208, %v242
      %v3241 = vadd.f32 %v3209, %v243
      %v3242 = vadd.f32 %v3210, %v244
      %v3243 = vadd.f32 %v3211, %v245
      %v3244 = vadd.f32 %v3212, %v246
      %v3245 = vadd.f32 %v3213, %v247
      %v3246 = vadd.f32 %v3214, %v248
      %v3247 = vadd.f32 %v3215, %v249
      %v3248 = vadd.f32 %v3216, %v250
      %v3249 = vadd.f32 %v3217, %v251
      %v3250 = vadd.f32 %v3218, %v252
      %v3251 = vadd.f32 %v3219, %v253
      %v3252 = vadd.f32 %v3220, %v254
      %v3253 = vadd.f32 %v3221, %v255
      %v3254 = vadd.f32 %v3222, %v256
      %v3255 = vadd.f32 %v3223, %v257
      %v3256 = vadd.f32 %v3224, %v258
      %v3257 = vadd.f32 %v3225, %v259
      %v3258 = vadd.f32 %v3226, %v260
      %v3259 = vadd.f32 %v3227, %v261
      %v3260 = vadd.f32 %v3228, %v262
      %v3261 = vadd.f32 %v3229, %v263
      %v3262 = vadd.f32 %v3230, %v264
      %v3263 = vadd.f32 %v3231, %v265
      %v3264 = vadd.f32 %v3232, %v266
      %v3265 = vadd.f32 %v3233, %v267
      %v3266 = vadd.f32 %v3234, %v268
      %v3267 = vadd.f32 %v3235, %v269
      %v3268 = vadd.f32 %v3236, %v270
      %3269 = vst.msk [vmem:[%s197] sm:$0xff] %vm303, %v3237
      %3270 = vst.msk [vmem:[%s197 + $0x8] sm:$0xff] %vm303, %v3238
      %3271 = vst.msk [vmem:[%s197 + $0x10] sm:$0xff] %vm303, %v3239
      %3272 = vst.msk [vmem:[%s197 + $0x18] sm:$0xff] %vm303, %v3240
      %3273 = vst.msk [vmem:[%s197 + $0x20] sm:$0xff] %vm303, %v3241
      %3274 = vst.msk [vmem:[%s197 + $0x28] sm:$0xff] %vm303, %v3242
      %3275 = vst.msk [vmem:[%s197 + $0x30] sm:$0xff] %vm303, %v3243
      %3276 = vst.msk [vmem:[%s197 + $0x38] sm:$0xff] %vm303, %v3244
      %3277 = vst.msk [vmem:[%s197 + $0x40] sm:$0xff] %vm303, %v3245
      %3278 = vst.msk [vmem:[%s197 + $0x48] sm:$0xff] %vm303, %v3246
      %3279 = vst.msk [vmem:[%s197 + $0x50] sm:$0xff] %vm303, %v3247
      %3280 = vst.msk [vmem:[%s197 + $0x58] sm:$0xff] %vm303, %v3248
      %3281 = vst.msk [vmem:[%s197 + $0x60] sm:$0xff] %vm303, %v3249
      %3282 = vst.msk [vmem:[%s197 + $0x68] sm:$0xff] %vm303, %v3250
      %3283 = vst.msk [vmem:[%s197 + $0x70] sm:$0xff] %vm303, %v3251
      %3284 = vst.msk [vmem:[%s197 + $0x78] sm:$0xff] %vm303, %v3252
      %3285 = vst.msk [vmem:[%s197 + $0x80] sm:$0xff] %vm303, %v3253
      %3286 = vst.msk [vmem:[%s197 + $0x88] sm:$0xff] %vm303, %v3254
      %3287 = vst.msk [vmem:[%s197 + $0x90] sm:$0xff] %vm303, %v3255
      %3288 = vst.msk [vmem:[%s197 + $0x98] sm:$0xff] %vm303, %v3256
      %3289 = vst.msk [vmem:[%s197 + $0xa0] sm:$0xff] %vm303, %v3257
      %3290 = vst.msk [vmem:[%s197 + $0xa8] sm:$0xff] %vm303, %v3258
      %3291 = vst.msk [vmem:[%s197 + $0xb0] sm:$0xff] %vm303, %v3259
      %3292 = vst.msk [vmem:[%s197 + $0xb8] sm:$0xff] %vm303, %v3260
      %3293 = vst.msk [vmem:[%s197 + $0xc0] sm:$0xff] %vm303, %v3261
      %3294 = vst.msk [vmem:[%s197 + $0xc8] sm:$0xff] %vm303, %v3262
      %3295 = vst.msk [vmem:[%s197 + $0xd0] sm:$0xff] %vm303, %v3263
      %3296 = vst.msk [vmem:[%s197 + $0xd8] sm:$0xff] %vm303, %v3264
      %3297 = vst.msk [vmem:[%s197 + $0xe0] sm:$0xff] %vm303, %v3265
      %3298 = vst.msk [vmem:[%s197 + $0xe8] sm:$0xff] %vm303, %v3266
      %3299 = vst.msk [vmem:[%s197 + $0xf0] sm:$0xff] %vm303, %v3267
      %3300 = vst.msk [vmem:[%s197 + $0xf8] sm:$0xff] %vm303, %v3268
      %p3301 = scmp.lt.s32.totalorder %s15, 1
      %s3302 = scalar_select %p3301, %s15, 1
      %s3303 = smul.addr %s3302, 32
      %s3304 = smul.addr %s3303, 8
      %s3305 = scalar_lea.vmem %s4, %s3304
      // Predicated region
      $region37: #{tpu_custom_call.1} parent=35 // pred_check
        %p3306 = pneg %p122
      $region38: #{tpu_custom_call.1} parent=35 // pred_check_branch
        %3308 = sbr.rel (%p3306) target = $region40
      $region39: #{tpu_custom_call.1} parent=35 // pred_region
        _
      $region40: #{tpu_custom_call.1} parent=35 // pred_fallthru
        _
    $region36: #{tpu_custom_call.1} parent=5 // pred_fallthru
      _
    %p3309 = scmp.le.s32.totalorder 2, %s10
    // Predicated region
    $region41: #{tpu_custom_call.1} parent=5 // pred_check
      %p3310 = pneg %p3309
    $region42: #{tpu_custom_call.1} parent=5 // pred_check_branch
      %3312 = sbr.rel (%p3310) target = $region44
    $region43: #{tpu_custom_call.1} parent=5 // pred_region
      %s3313 = ssub.s32 %s10, 2
      // Predicated region
      $region45: #{tpu_custom_call.1} parent=43 // pred_check
        %p3314 = pneg %p128
      $region46: #{tpu_custom_call.1} parent=43 // pred_check_branch
        %3316 = sbr.rel (%p3314) target = $region48
      $region47: #{tpu_custom_call.1} parent=43 // pred_region
        %p3317 = scmp.lt.s32.totalorder %s16, 1
        %s3318 = scalar_select %p3317, %s16, 1
        %s3319 = smul.addr %s3318, 32
        %s3320 = smul.addr %s3319, 8
        %s3321 = scalar_lea.vmem %s4, %s3320
      $region48: #{tpu_custom_call.1} parent=43 // pred_fallthru
        _
    $region44: #{tpu_custom_call.1} parent=5 // pred_fallthru
      _
  $region6: #{tpu_custom_call.1} parent=0 // loop_footer
    %s14 = sadd.s32 1, %s10
  $region7: #{tpu_custom_call.1} parent=0 // loop_footer_branch
    %9 = sbr.rel target = $region3
  $region8: #{tpu_custom_call.1} parent=0 // loop_exit
    _

</llo_original>
